<compile_context>
chip_gen: v7x
topology: tpu7x:2x2x1
jax: 0.10.0
libtpu: 0.0.40
codegen_flags: <defaults>
</compile_context>

<pallas_src>
import functools

import jax
import jax.numpy as jnp
from jax.experimental import pallas as pl
from jax.experimental.pallas import tpu as pltpu

BN_EPS = 1e-5          # PyTorch BatchNorm2d default (config.bn_eps unavailable)
VMEM_LIMIT = 32 * 1024 * 1024


# ----------------------------------------------------------------------------
# helpers: tile choosers
# ----------------------------------------------------------------------------
def _choose_tile(dim, candidates=(512, 256, 128, 64, 32, 16, 8)):
    for c in candidates:
        if dim % c == 0:
            return c
    return dim          # full-dim block (always legal)


def _choose_tk(k_dim, cap=2048):
    """K-tile: multiple of 128 dividing K, capped for VMEM (bf16 weights)."""
    if k_dim <= cap:
        return k_dim
    for t in range(cap, 127, -128):
        if k_dim % t == 0:
            return t
    # Fallback: full K (only hit for K with no 128-multiple divisor).
    return k_dim


# ----------------------------------------------------------------------------
# Fused _FCNHead kernel:
#   y   = relu( (cols @ w3) * scale + bias3 )        (3x3 conv + BN + ReLU)
#   out = y @ w1 + bias1                              (1x1 conv, lane-padded)
# Grid = (M tiles [parallel], K tiles [arbitrary]); y lives in VMEM scratch.
# ----------------------------------------------------------------------------
def _fcn_head_kernel(a_ref, w3_ref, scale_ref, bias3_ref, w1_ref, bias1_ref,
                     o_ref, y_ref, *, nk):
    k = pl.program_id(1)

    @pl.when(k == 0)
    def _init():
        y_ref[...] = jnp.zeros_like(y_ref)

    y_ref[...] += jnp.dot(a_ref[...], w3_ref[...],
                          preferred_element_type=jnp.float32)

    @pl.when(k == nk - 1)
    def _finalize():
        y = jnp.maximum(y_ref[...] * scale_ref[...] + bias3_ref[...], 0.0)
        # Dropout2d(0.1): identity in eval mode.
        o_ref[...] = (jnp.dot(y.astype(w1_ref.dtype), w1_ref[...],
                              preferred_element_type=jnp.float32)
                      + bias1_ref[...])


def _fcn_head_call(cols, kp):
    """cols: (M, 9*Cin) bf16  ->  (M, Cpad) f32 class logits (lane padded)."""
    M, K = cols.shape
    inter, cpad = kp["inter"], kp["cpad"]
    tm = _choose_tile(M)
    tk = _choose_tk(K)
    nk = K // tk
    kernel = functools.partial(_fcn_head_kernel, nk=nk)
    return pl.pallas_call(
        kernel,
        out_shape=jax.ShapeDtypeStruct((M, cpad), jnp.float32),
        grid_spec=pltpu.PrefetchScalarGridSpec(
            num_scalar_prefetch=0,
            grid=(M // tm, nk),
            in_specs=[
                pl.BlockSpec((tm, tk), lambda i, k: (i, k)),       # im2col cols
                pl.BlockSpec((tk, inter), lambda i, k: (k, 0)),    # w3
                pl.BlockSpec((1, inter), lambda i, k: (0, 0)),     # BN scale
                pl.BlockSpec((1, inter), lambda i, k: (0, 0)),     # BN bias
                pl.BlockSpec((inter, cpad), lambda i, k: (0, 0)),  # w1 (padded)
                pl.BlockSpec((1, cpad), lambda i, k: (0, 0)),      # b1 (padded)
            ],
            out_specs=pl.BlockSpec((tm, cpad), lambda i, k: (i, 0)),
            scratch_shapes=[pltpu.VMEM((tm, inter), jnp.float32)],
        ),
        compiler_params=pltpu.CompilerParams(
            dimension_semantics=("parallel", "arbitrary"),
            vmem_limit_bytes=VMEM_LIMIT),
    )(cols, kp["w3"], kp["scale"], kp["bias3"], kp["w1"], kp["bias1"])


# ----------------------------------------------------------------------------
# Fused bilinear upsample (align_corners=True) kernel:
#   out[n, c, ho, wo] = sum_{h,w} R[ho,h] * fm[n,c,h,w] * Cm[wo,w]
# Both separable contractions are done in-kernel; no HBM intermediate.
# ----------------------------------------------------------------------------
def _upsample_kernel(fm_ref, r_ref, cmt_ref, o_ref, *, c8):
    r = r_ref[...]                      # (tho, H)
    cmt = cmt_ref[...]                  # (W, Wo)
    for c in range(c8):                 # static unroll over (padded) classes
        s_c = jnp.dot(fm_ref[0, c], cmt,
                      preferred_element_type=jnp.float32)      # (H, Wo)
        o_ref[0, c] = jnp.dot(r, s_c,
                              preferred_element_type=jnp.float32)  # (tho, Wo)


def _interp_matrix(n_in, n_out):
    """Bilinear interpolation matrix, align_corners=True: (n_out, n_in)."""
    if n_in == 1:
        return jnp.ones((n_out, 1), jnp.float32)
    src = jnp.arange(n_out, dtype=jnp.float32) * (n_in - 1) / (n_out - 1)
    i0 = jnp.clip(jnp.floor(src).astype(jnp.int32), 0, n_in - 2)
    frac = src - i0.astype(jnp.float32)
    rows = jnp.arange(n_out)
    m = jnp.zeros((n_out, n_in), jnp.float32)
    m = m.at[rows, i0].add(1.0 - frac)
    m = m.at[rows, i0 + 1].add(frac)
    return m


def bilinear_upsample(fm_nchw, scale_factor):
    """fm: (N, C8, H, W) f32 -> (N, C8, H*s, W*s) f32, align_corners=True."""
    N, C8, H, W = fm_nchw.shape
    Ho, Wo = H * scale_factor, W * scale_factor
    R = _interp_matrix(H, Ho)                 # (Ho, H)
    CmT = _interp_matrix(W, Wo).T             # (W, Wo)
    tho = _choose_tile(Ho, (256, 128, 64, 32, 16, 8))
    kernel = functools.partial(_upsample_kernel, c8=C8)
    return pl.pallas_call(
        kernel,
        out_shape=jax.ShapeDtypeStruct((N, C8, Ho, Wo), jnp.float32),
        grid_spec=pltpu.PrefetchScalarGridSpec(
            num_scalar_prefetch=0,
            grid=(N, Ho // tho),
            in_specs=[
                pl.BlockSpec((1, C8, H, W), lambda n, i: (n, 0, 0, 0)),
                pl.BlockSpec((tho, H), lambda n, i: (i, 0)),
                pl.BlockSpec((W, Wo), lambda n, i: (0, 0)),
            ],
            out_specs=pl.BlockSpec((1, C8, tho, Wo), lambda n, i: (n, 0, i, 0)),
        ),
        compiler_params=pltpu.CompilerParams(
            dimension_semantics=("parallel", "parallel"),
            vmem_limit_bytes=VMEM_LIMIT),
    )(fm_nchw.astype(jnp.float32), R, CmT)


# ----------------------------------------------------------------------------
# Parameter setup / preparation
# ----------------------------------------------------------------------------
def init_fcn_head(key, in_planes, out_planes):
    inter = in_planes // 4
    k1, k2, k3, k4, k5, k6, k7 = jax.random.split(key, 7)
    return dict(
        conv3_w=0.02 * jax.random.normal(k1, (inter, in_planes, 3, 3), jnp.float32),
        bn_gamma=1.0 + 0.1 * jax.random.normal(k2, (inter,), jnp.float32),
        bn_beta=0.1 * jax.random.normal(k3, (inter,), jnp.float32),
        bn_mean=0.1 * jax.random.normal(k4, (inter,), jnp.float32),
        bn_var=1.0 + 0.1 * jnp.abs(jax.random.normal(k5, (inter,), jnp.float32)),
        conv1_w=0.02 * jax.random.normal(k6, (out_planes, inter, 1, 1), jnp.float32),
        conv1_b=0.1 * jax.random.normal(k7, (out_planes,), jnp.float32),
    )


def prepare_head_params(params):
    """Fold BN, reorder / pad weights into kernel-ready bf16 matrices."""
    inter, cin, _, _ = params["conv3_w"].shape
    ncls = params["conv1_w"].shape[0]
    cpad = max(128, ((ncls + 127) // 128) * 128)

    # (Cout,Cin,3,3) -> (ky,kx,cin,cout) -> (9*Cin, Cout)   (matches im2col order)
    w3 = jnp.transpose(params["conv3_w"], (2, 3, 1, 0)).reshape(9 * cin, inter)
    scale = params["bn_gamma"] / jnp.sqrt(params["bn_var"] + BN_EPS)
    bias3 = params["bn_beta"] - params["bn_mean"] * scale

    w1 = params["conv1_w"][:, :, 0, 0].T                      # (inter, ncls)
    w1p = jnp.zeros((inter, cpad), jnp.bfloat16).at[:, :ncls].set(
        w1.astype(jnp.bfloat16))
    b1p = jnp.zeros((1, cpad), jnp.float32).at[:, :ncls].set(params["conv1_b"])

    return dict(
        w3=w3.astype(jnp.bfloat16),
        scale=scale.reshape(1, inter).astype(jnp.float32),
        bias3=bias3.reshape(1, inter).astype(jnp.float32),
        w1=w1p, bias1=b1p,
        inter=inter, cin=cin, ncls=ncls, cpad=cpad,
    )


# ----------------------------------------------------------------------------
# host-side glue: im2col (bf16) and the two-branch forward
# ----------------------------------------------------------------------------
def _im2col_3x3(x_nhwc):
    """x:(N,H,W,C) -> (N*H*W, 9*C) patches in (ky,kx,cin) order, pad=1,stride=1."""
    N, H, W, C = x_nhwc.shape
    xp = jnp.pad(x_nhwc, ((0, 0), (1, 1), (1, 1), (0, 0)))
    cols = [xp[:, ky:ky + H, kx:kx + W, :] for ky in range(3) for kx in range(3)]
    patches = jnp.stack(cols, axis=3)              # (N, H, W, 9, C)
    return patches.reshape(N * H * W, 9 * C)


def fcn_branch(kp, x_nchw, scale_factor):
    """_FCNHead (ConvBnRelu 3x3 -> Dropout(eval id) -> Conv1x1) + upsample."""
    N, _, H, W = x_nchw.shape
    x = jnp.transpose(x_nchw, (0, 2, 3, 1)).astype(jnp.bfloat16)   # NHWC bf16
    cols = _im2col_3x3(x)                                          # (M, 9*Cin)
    logits = _fcn_head_call(cols, kp)                              # (M, Cpad) f32

    ncls = kp["ncls"]
    c8 = ((ncls + 7) // 8) * 8
    fm = logits.reshape(N, H, W, kp["cpad"])[..., :c8]             # tiny slice
    fm = jnp.transpose(fm, (0, 3, 1, 2))                           # (N, C8, H, W)
    up = bilinear_upsample(fm, scale_factor)                       # (N, C8, Ho, Wo)
    return up[:, :ncls]


def fcn_forward(head_kp, aux_kp, block_m1, block_m2):
    pred = fcn_branch(head_kp, block_m1, 32)        # blocks[-1], 2048 ch, /32
    aux_pred = fcn_branch(aux_kp, block_m2, 16)     # blocks[-2], 1024 ch, /16
    return pred, aux_pred


# ----------------------------------------------------------------------------
# Pure-JAX f32 reference (numerical sanity check of the Pallas path)
# ----------------------------------------------------------------------------
def _head_reference(params, x_nchw):
    y = jax.lax.conv_general_dilated(
        x_nchw, params["conv3_w"], (1, 1), ((1, 1), (1, 1)),
        dimension_numbers=("NCHW", "OIHW", "NCHW"),
        precision=jax.lax.Precision.HIGHEST)
    scale = params["bn_gamma"] / jnp.sqrt(params["bn_var"] + BN_EPS)
    bias = params["bn_beta"] - params["bn_mean"] * scale
    y = jnp.maximum(y * scale[None, :, None, None] + bias[None, :, None, None], 0.0)
    z = jax.lax.conv_general_dilated(
        y, params["conv1_w"], (1, 1), "VALID",
        dimension_numbers=("NCHW", "OIHW", "NCHW"),
        precision=jax.lax.Precision.HIGHEST)
    return z + params["conv1_b"][None, :, None, None]


def _upsample_reference(x_nchw, s):
    N, C, H, W = x_nchw.shape
    R = _interp_matrix(H, H * s)
    Cm = _interp_matrix(W, W * s)
    return jnp.einsum("oh,nchw,pw->ncop", R, x_nchw, Cm,
                      precision=jax.lax.Precision.HIGHEST)


if __name__ == "__main__":
    key = jax.random.PRNGKey(0)
    kp1, kp2, kx1, kx2 = jax.random.split(key, 4)

    num_classes = 5
    head_params = init_fcn_head(kp1, 2048, num_classes)   # self.head
    aux_params = init_fcn_head(kp2, 1024, num_classes)    # self.aux_head

    # Backbone feature maps (image 128x128 -> strides /32 and /16).
    block_m1 = jax.random.normal(kx1, (2, 2048, 4, 4), jnp.float32)   # blocks[-1]
    block_m2 = jax.random.normal(kx2, (2, 1024, 8, 8), jnp.float32)   # blocks[-2]

    head_kp = prepare_head_params(head_params)
    aux_kp = prepare_head_params(aux_params)

    pred, aux_pred = fcn_forward(head_kp, aux_kp, block_m1, block_m2)
    jax.block_until_ready((pred, aux_pred))

    assert pred.shape == (2, num_classes, 128, 128), pred.shape
    assert aux_pred.shape == (2, num_classes, 128, 128), aux_pred.shape

    # Numerical sanity check against the pure-f32 JAX reference (kernel path is
    # bf16 operands / f32 accumulation, hence the loose-ish tolerance).
    pred_ref = _upsample_reference(_head_reference(head_params, block_m1), 32)
    aux_ref = _upsample_reference(_head_reference(aux_params, block_m2), 16)
    assert jnp.allclose(pred, pred_ref, rtol=3e-2, atol=1e-1), \
        float(jnp.max(jnp.abs(pred - pred_ref)))
    assert jnp.allclose(aux_pred, aux_ref, rtol=3e-2, atol=1e-1), \
        float(jnp.max(jnp.abs(aux_pred - aux_ref)))

    print("KERNEL_OK")
</pallas_src>

<mosaic_0001>
module attributes {stable_mosaic.version = 11 : i64} {
  func.func @_fcn_head_kernel(%arg0: i32, %arg1: i32, %arg2: memref<32x2048xbf16, #tpu.memory_space<vmem>>, %arg3: memref<2048x512xbf16, #tpu.memory_space<vmem>>, %arg4: memref<1x512xf32, #tpu.memory_space<vmem>>, %arg5: memref<1x512xf32, #tpu.memory_space<vmem>>, %arg6: memref<512x128xbf16, #tpu.memory_space<vmem>>, %arg7: memref<1x128xf32, #tpu.memory_space<vmem>>, %arg8: memref<32x128xf32, #tpu.memory_space<vmem>>, %arg9: memref<32x512xf32, #tpu.memory_space<vmem>>) attributes {dimension_semantics = [#tpu.dimension_semantics<parallel>, #tpu.dimension_semantics<arbitrary>], iteration_bounds = array<i64: 1, 9>, scalar_prefetch = 0 : i64, scratch_operands = 1 : i64, tpu.core_type = #tpu.core_type<tc>, window_params = [{transform_indices = @transform_0, window_bounds = array<i64: 32, 2048>}, {transform_indices = @transform_1, window_bounds = array<i64: 2048, 512>}, {pipeline_mode = #tpu.pipeline_mode<synchronous>, transform_indices = @transform_2, window_bounds = array<i64: 1, 512>}, {pipeline_mode = #tpu.pipeline_mode<synchronous>, transform_indices = @transform_3, window_bounds = array<i64: 1, 512>}, {pipeline_mode = #tpu.pipeline_mode<synchronous>, transform_indices = @transform_4, window_bounds = array<i64: 512, 128>}, {pipeline_mode = #tpu.pipeline_mode<synchronous>, transform_indices = @transform_5, window_bounds = array<i64: 1, 128>}, {transform_indices = @transform_6, window_bounds = array<i64: 32, 128>}]} {
    %c0_i32 = arith.constant 0 : i32
    %0 = arith.cmpi eq, %arg1, %c0_i32 : i32
    %1 = arith.extui %0 : i1 to i32
    %c0_i32_0 = arith.constant 0 : i32
    %2 = arith.cmpi ne, %1, %c0_i32_0 : i32
    scf.if %2 {
      %cst_9 = arith.constant 0.000000e+00 : f32
      %12 = vector.broadcast %cst_9 : f32 to vector<32x512xf32>
      %c0_10 = arith.constant 0 : index
      %c0_11 = arith.constant 0 : index
      %13 = vector.load %arg9[%c0_10, %c0_11] : memref<32x512xf32, #tpu.memory_space<vmem>>, vector<32x512xf32>
      tpu.vector_store %arg9[%c0_10, %c0_11], %12 {strides = array<i32>} : memref<32x512xf32, #tpu.memory_space<vmem>>, vector<32x512xf32>,
    } else {
    }
    %c0 = arith.constant 0 : index
    %c0_1 = arith.constant 0 : index
    %3 = vector.load %arg9[%c0, %c0_1] : memref<32x512xf32, #tpu.memory_space<vmem>>, vector<32x512xf32>
    %c0_2 = arith.constant 0 : index
    %c0_3 = arith.constant 0 : index
    %4 = vector.load %arg2[%c0_2, %c0_3] : memref<32x2048xbf16, #tpu.memory_space<vmem>>, vector<32x2048xbf16>
    %c0_4 = arith.constant 0 : index
    %c0_5 = arith.constant 0 : index
    %5 = vector.load %arg3[%c0_4, %c0_5] : memref<2048x512xbf16, #tpu.memory_space<vmem>>, vector<2048x512xbf16>
    %cst = arith.constant dense<0.000000e+00> : vector<32x512xf32>
    %6 = tpu.matmul %4, %5, %cst {dimension_numbers = #tpu.dot_dimension_numbers<[1], [0], [0], [1], [0, 0, 1, 1], [], []>} : vector<32x2048xbf16>, vector<2048x512xbf16>, vector<32x512xf32> -> vector<32x512xf32>
    %7 = arith.addf %3, %6 : vector<32x512xf32>
    %c0_6 = arith.constant 0 : index
    %c0_7 = arith.constant 0 : index
    %8 = vector.load %arg9[%c0_6, %c0_7] : memref<32x512xf32, #tpu.memory_space<vmem>>, vector<32x512xf32>
    tpu.vector_store %arg9[%c0_6, %c0_7], %7 {strides = array<i32>} : memref<32x512xf32, #tpu.memory_space<vmem>>, vector<32x512xf32>,
    %c8_i32 = arith.constant 8 : i32
    %9 = arith.cmpi eq, %arg1, %c8_i32 : i32
    %10 = arith.extui %9 : i1 to i32
    %c0_i32_8 = arith.constant 0 : i32
    %11 = arith.cmpi ne, %10, %c0_i32_8 : i32
    scf.if %11 {
      %c0_9 = arith.constant 0 : index
      %c0_10 = arith.constant 0 : index
      %12 = vector.load %arg9[%c0_9, %c0_10] : memref<32x512xf32, #tpu.memory_space<vmem>>, vector<32x512xf32>
      %c0_11 = arith.constant 0 : index
      %c0_12 = arith.constant 0 : index
      %13 = vector.load %arg4[%c0_11, %c0_12] : memref<1x512xf32, #tpu.memory_space<vmem>>, vector<1x512xf32>
      %14 = vector.broadcast %13 : vector<1x512xf32> to vector<32x512xf32>
      %15 = arith.mulf %12, %14 : vector<32x512xf32>
      %c0_13 = arith.constant 0 : index
      %c0_14 = arith.constant 0 : index
      %16 = vector.load %arg5[%c0_13, %c0_14] : memref<1x512xf32, #tpu.memory_space<vmem>>, vector<1x512xf32>
      %17 = vector.broadcast %16 : vector<1x512xf32> to vector<32x512xf32>
      %18 = arith.addf %15, %17 : vector<32x512xf32>
      %cst_15 = arith.constant 0.000000e+00 : f32
      %19 = vector.broadcast %cst_15 : f32 to vector<32x512xf32>
      %20 = arith.maximumf %18, %19 : vector<32x512xf32>
      %21 = arith.truncf %20 : vector<32x512xf32> to vector<32x512xbf16>
      %c0_16 = arith.constant 0 : index
      %c0_17 = arith.constant 0 : index
      %22 = vector.load %arg6[%c0_16, %c0_17] : memref<512x128xbf16, #tpu.memory_space<vmem>>, vector<512x128xbf16>
      %cst_18 = arith.constant dense<0.000000e+00> : vector<32x128xf32>
      %23 = tpu.matmul %21, %22, %cst_18 {dimension_numbers = #tpu.dot_dimension_numbers<[1], [0], [0], [1], [0, 0, 1, 1], [], []>} : vector<32x512xbf16>, vector<512x128xbf16>, vector<32x128xf32> -> vector<32x128xf32>
      %c0_19 = arith.constant 0 : index
      %c0_20 = arith.constant 0 : index
      %24 = vector.load %arg7[%c0_19, %c0_20] : memref<1x128xf32, #tpu.memory_space<vmem>>, vector<1x128xf32>
      %25 = vector.broadcast %24 : vector<1x128xf32> to vector<32x128xf32>
      %26 = arith.addf %23, %25 : vector<32x128xf32>
      %c0_21 = arith.constant 0 : index
      %c0_22 = arith.constant 0 : index
      %27 = vector.load %arg8[%c0_21, %c0_22] : memref<32x128xf32, #tpu.memory_space<vmem>>, vector<32x128xf32>
      tpu.vector_store %arg8[%c0_21, %c0_22], %26 {strides = array<i32>} : memref<32x128xf32, #tpu.memory_space<vmem>>, vector<32x128xf32>,
    } else {
    }
    return
  }
  func.func @transform_0(%arg0: i32, %arg1: i32) -> (i32, i32) {
    %c0_i32 = arith.constant 0 : i32
    return %arg0, %arg1 : i32, i32
  }
  func.func @transform_1(%arg0: i32, %arg1: i32) -> (i32, i32) {
    %c0_i32 = arith.constant 0 : i32
    %c0_i32_0 = arith.constant 0 : i32
    return %arg1, %c0_i32 : i32, i32
  }
  func.func @transform_2(%arg0: i32, %arg1: i32) -> (i32, i32) {
    %c0_i32 = arith.constant 0 : i32
    %c0_i32_0 = arith.constant 0 : i32
    %c0_i32_1 = arith.constant 0 : i32
    return %c0_i32, %c0_i32_0 : i32, i32
  }
  func.func @transform_3(%arg0: i32, %arg1: i32) -> (i32, i32) {
    %c0_i32 = arith.constant 0 : i32
    %c0_i32_0 = arith.constant 0 : i32
    %c0_i32_1 = arith.constant 0 : i32
    return %c0_i32, %c0_i32_0 : i32, i32
  }
  func.func @transform_4(%arg0: i32, %arg1: i32) -> (i32, i32) {
    %c0_i32 = arith.constant 0 : i32
    %c0_i32_0 = arith.constant 0 : i32
    %c0_i32_1 = arith.constant 0 : i32
    return %c0_i32, %c0_i32_0 : i32, i32
  }
  func.func @transform_5(%arg0: i32, %arg1: i32) -> (i32, i32) {
    %c0_i32 = arith.constant 0 : i32
    %c0_i32_0 = arith.constant 0 : i32
    %c0_i32_1 = arith.constant 0 : i32
    return %c0_i32, %c0_i32_0 : i32, i32
  }
  func.func @transform_6(%arg0: i32, %arg1: i32) -> (i32, i32) {
    %c0_i32 = arith.constant 0 : i32
    %c0_i32_0 = arith.constant 0 : i32
    return %arg0, %c0_i32 : i32, i32
  }
}

</mosaic_0001>

<llo_original>
// kernel: tpu_custom_call.1
$region0: #{tpu_custom_call.1}
  #allocation0 [shape = 'u32[]', space=smem, size = 0x4, offset = 0x4, fixed_abs, tag = 'smem constant byte address 0x4 - core index']
  #allocation1 [shape = 'u32[144,128]{1,0:T(1,128)}', space=vmem, size = 0x12000, scoped, tag = 'internal scratch']
  #allocation2 [shape = 'f32[32,512]{1,0:T(8,128)}', space=vmem, size = 0x10000, scoped, tag = 'scratch operand']
  %s0 = inlined_call_operand.hbm [shape: bf16[32,18432], index: 0, kind: input, shape index: {}]
  %s1 = inlined_call_operand.hbm [shape: bf16[18432,512], index: 1, kind: input, shape index: {}]
  %s2 = inlined_call_operand.hbm [shape: f32[1,512], index: 2, kind: input, shape index: {}]
  %s3 = inlined_call_operand.hbm [shape: f32[1,512], index: 3, kind: input, shape index: {}]
  %s4 = inlined_call_operand.hbm [shape: bf16[512,128], index: 4, kind: input, shape index: {}]
  %s5 = inlined_call_operand.hbm [shape: f32[1,128], index: 5, kind: input, shape index: {}]
  %s6 = inlined_call_operand.hbm [shape: f32[32,128], index: 6, kind: output, shape index: {}]
  %s7 = sld [smem:[#allocation0]]
  $region89: #{tpu_custom_call.1} parent=0
    _
  %s9 = ssub.s32 1, %s7
  %s10 = scalar_select 0, %s9, %s7
  $region1: #{tpu_custom_call.1} parent=0
    #allocation3 [shape = 'u8[262144]{0}', space=vmem, size = 0x40000, scoped, tag = 'input window, operand 0']
    #allocation4 [shape = 's32[2]{0}', space=sflag, size = 0x8, scoped, tag = 'scoped memory for tpu_custom_call.1']
    #allocation5 [shape = 's32[2]{0}', space=sflag, size = 0x8, scoped, tag = 'scoped memory for tpu_custom_call.1']
    #allocation6 [shape = 'u8[4194304]{0}', space=vmem, size = 0x400000, scoped, tag = 'input window, operand 1']
    #allocation7 [shape = 's32[2]{0}', space=sflag, size = 0x8, scoped, tag = 'scoped memory for tpu_custom_call.1']
    #allocation8 [shape = 'u8[2048]{0}', space=vmem, size = 0x800, scoped, tag = 'input window, operand 2, single buffered']
    #allocation9 [shape = 'u8[2048]{0}', space=vmem, size = 0x800, scoped, tag = 'input window, operand 3, single buffered']
    #allocation10 [shape = 's32[1]{0}', space=sflag, size = 0x4, scoped, tag = 'scoped memory for tpu_custom_call.1']
    #allocation11 [shape = 'u8[131072]{0}', space=vmem, size = 0x20000, scoped, tag = 'input window, operand 4, single buffered']
    #allocation12 [shape = 'u8[512]{0}', space=vmem, size = 0x400, scoped, tag = 'input window, operand 5, single buffered']
    #allocation13 [shape = 's32[1]{0}', space=sflag, size = 0x4, scoped, tag = 'scoped memory for tpu_custom_call.1']
    #allocation14 [shape = 'u8[16384]{0}', space=vmem, size = 0x4000, scoped, tag = 'output window, operand 0, single buffered']
    %11 = vsyncpa [#allocation4], 0
    %s12 = scalar_lea.sflag [#allocation4], 1
    %13 = vsyncpa %s12, 0
    %14 = vsyncpa [#allocation7], 0
    %s15 = scalar_lea.sflag [#allocation7], 1
    %16 = vsyncpa %s15, 0
    %17 = vsyncpa [#allocation10], 0
    %18 = vsyncpa [#allocation13], 0
    %19 = vsyncpa [#allocation5], 0
    loop: start=0, step=1, limit=11
    $region2: #{tpu_custom_call.1} parent=1 // loop_pre_header
      _
    $region3: #{tpu_custom_call.1} parent=1 // loop_header
      %s21 = sphi 0, %s25
      %p22 = scmp.ge.s32.totalorder %s21, 11
      %s28 = sphi 0, %s40
      %s29 = sphi 0, %s36
      %s30 = sphi 0, %s28
      %s31 = sphi 0, %s29
      %s32 = sphi 0, %s30
      %s33 = sphi 0, %s31
      %s45 = sphi 0, %s47
      %s48 = sphi 0, %s45
      %s49 = sphi 0, %s48
      %s65 = sphi 0, %s49
      %s71 = sphi 0, %s73
      %s74 = sphi 0, %s71
      %s75 = sphi 0, %s74
      %s91 = sphi 0, %s75
      %s95 = sphi 0, %s95
      %s97 = sphi 0, %s95
      %s98 = sphi 0, %s97
      %s112 = sphi 0, %s98
      %s116 = sphi 0, %s116
      %s118 = sphi 0, %s116
      %s119 = sphi 0, %s118
      %s133 = sphi 0, %s119
      %s137 = sphi 0, %s137
      %s139 = sphi 0, %s137
      %s140 = sphi 0, %s139
      %s154 = sphi 0, %s140
      %s158 = sphi 0, %s158
      %s160 = sphi 0, %s158
      %s161 = sphi 0, %s160
      %s175 = sphi 0, %s161
      %s181 = sphi 0, %s183
      %s184 = sphi 0, %s181
      %s185 = sphi 0, %s184
      %s201 = sphi 0, %s185
    $region4: #{tpu_custom_call.1} parent=1 // loop_header_branch
      %24 = sbr.rel (%p22) target = $region8
    $region5: #{tpu_custom_call.1} parent=1 // loop_body
      %s26 = ssub.s32 %s21, 1
      %s27 = ssub.s32 %s21, 2
      %s34 = sadd.s32 1, %s29
      %p35 = scmp.ge.s32.totalorder %s34, 9
      %s36 = scalar_select %p35, 0, %s34
      %s37 = sadd.s32 1, %s28
      %s38 = scalar_select %p35, %s37, %s28
      %p39 = scmp.ge.s32.totalorder %s38, 1
      %s40 = scalar_select %p39, 0, %s38
      %s41 = ssub.s32 %s28, %s40
      %s42 = ssub.s32 %s29, %s36
      %s43 = sor.u32 %s41, %s42
      %p44 = scmp.eq.s32.totalorder %s43, 0
      %s46 = sadd.s32 %s45, 1
      %s47 = scalar_select %p44, %s45, %s46
      %p50 = pneg %p44
      %p51 = scmp.eq.s32.totalorder %s21, 8
      %p52 = por %p50, %p51
      %p53 = scmp.ne.s32.totalorder %s45, %s48
      %p54 = scmp.eq.s32.totalorder %s21, 0
      %p55 = por %p53, %p54
      %p56 = scmp.ne.s32.totalorder %s45, %s48
      %p57 = scmp.eq.s32.totalorder %s26, 8
      %p58 = por %p56, %p57
      %p59 = scmp.ne.s32.totalorder %s48, %s49
      %p60 = scmp.eq.s32.totalorder %s26, 0
      %p61 = por %p59, %p60
      %p62 = scmp.ne.s32.totalorder %s48, %s49
      %p63 = scmp.eq.s32.totalorder %s27, 8
      %p64 = por %p62, %p63
      %p66 = scmp.ne.s32.totalorder %s49, %s65
      %p67 = scmp.eq.s32.totalorder %s27, 0
      %p68 = por %p66, %p67
      %s69 = ssub.s32 %s29, %s36
      %p70 = scmp.eq.s32.totalorder %s69, 0
      %s72 = sadd.s32 %s71, 1
      %s73 = scalar_select %p70, %s71, %s72
      %p76 = pneg %p70
      %p77 = scmp.eq.s32.totalorder %s21, 8
      %p78 = por %p76, %p77
      %p79 = scmp.ne.s32.totalorder %s71, %s74
      %p80 = scmp.eq.s32.totalorder %s21, 0
      %p81 = por %p79, %p80
      %p82 = scmp.ne.s32.totalorder %s71, %s74
      %p83 = scmp.eq.s32.totalorder %s26, 8
      %p84 = por %p82, %p83
      %p85 = scmp.ne.s32.totalorder %s74, %s75
      %p86 = scmp.eq.s32.totalorder %s26, 0
      %p87 = por %p85, %p86
      %p88 = scmp.ne.s32.totalorder %s74, %s75
      %p89 = scmp.eq.s32.totalorder %s27, 8
      %p90 = por %p88, %p89
      %p92 = scmp.ne.s32.totalorder %s75, %s91
      %p93 = scmp.eq.s32.totalorder %s27, 0
      %p94 = por %p92, %p93
      %s96 = sadd.s32 %s95, 1
      %p99 = scmp.eq.s32.totalorder %s21, 8
      %p100 = scmp.ne.s32.totalorder %s95, %s97
      %p101 = scmp.eq.s32.totalorder %s21, 0
      %p102 = por %p100, %p101
      %p103 = scmp.ne.s32.totalorder %s95, %s97
      %p104 = scmp.eq.s32.totalorder %s26, 8
      %p105 = por %p103, %p104
      %p106 = scmp.ne.s32.totalorder %s97, %s98
      %p107 = scmp.eq.s32.totalorder %s26, 0
      %p108 = por %p106, %p107
      %p109 = scmp.ne.s32.totalorder %s97, %s98
      %p110 = scmp.eq.s32.totalorder %s27, 8
      %p111 = por %p109, %p110
      %p113 = scmp.ne.s32.totalorder %s98, %s112
      %p114 = scmp.eq.s32.totalorder %s27, 0
      %p115 = por %p113, %p114
      %s117 = sadd.s32 %s116, 1
      %p120 = scmp.eq.s32.totalorder %s21, 8
      %p121 = scmp.ne.s32.totalorder %s116, %s118
      %p122 = scmp.eq.s32.totalorder %s21, 0
      %p123 = por %p121, %p122
      %p124 = scmp.ne.s32.totalorder %s116, %s118
      %p125 = scmp.eq.s32.totalorder %s26, 8
      %p126 = por %p124, %p125
      %p127 = scmp.ne.s32.totalorder %s118, %s119
      %p128 = scmp.eq.s32.totalorder %s26, 0
      %p129 = por %p127, %p128
      %p130 = scmp.ne.s32.totalorder %s118, %s119
      %p131 = scmp.eq.s32.totalorder %s27, 8
      %p132 = por %p130, %p131
      %p134 = scmp.ne.s32.totalorder %s119, %s133
      %p135 = scmp.eq.s32.totalorder %s27, 0
      %p136 = por %p134, %p135
      %s138 = sadd.s32 %s137, 1
      %p141 = scmp.eq.s32.totalorder %s21, 8
      %p142 = scmp.ne.s32.totalorder %s137, %s139
      %p143 = scmp.eq.s32.totalorder %s21, 0
      %p144 = por %p142, %p143
      %p145 = scmp.ne.s32.totalorder %s137, %s139
      %p146 = scmp.eq.s32.totalorder %s26, 8
      %p147 = por %p145, %p146
      %p148 = scmp.ne.s32.totalorder %s139, %s140
      %p149 = scmp.eq.s32.totalorder %s26, 0
      %p150 = por %p148, %p149
      %p151 = scmp.ne.s32.totalorder %s139, %s140
      %p152 = scmp.eq.s32.totalorder %s27, 8
      %p153 = por %p151, %p152
      %p155 = scmp.ne.s32.totalorder %s140, %s154
      %p156 = scmp.eq.s32.totalorder %s27, 0
      %p157 = por %p155, %p156
      %s159 = sadd.s32 %s158, 1
      %p162 = scmp.eq.s32.totalorder %s21, 8
      %p163 = scmp.ne.s32.totalorder %s158, %s160
      %p164 = scmp.eq.s32.totalorder %s21, 0
      %p165 = por %p163, %p164
      %p166 = scmp.ne.s32.totalorder %s158, %s160
      %p167 = scmp.eq.s32.totalorder %s26, 8
      %p168 = por %p166, %p167
      %p169 = scmp.ne.s32.totalorder %s160, %s161
      %p170 = scmp.eq.s32.totalorder %s26, 0
      %p171 = por %p169, %p170
      %p172 = scmp.ne.s32.totalorder %s160, %s161
      %p173 = scmp.eq.s32.totalorder %s27, 8
      %p174 = por %p172, %p173
      %p176 = scmp.ne.s32.totalorder %s161, %s175
      %p177 = scmp.eq.s32.totalorder %s27, 0
      %p178 = por %p176, %p177
      %s179 = ssub.s32 %s28, %s40
      %p180 = scmp.eq.s32.totalorder %s179, 0
      %s182 = sadd.s32 %s181, 1
      %s183 = scalar_select %p180, %s181, %s182
      %p186 = pneg %p180
      %p187 = scmp.eq.s32.totalorder %s21, 8
      %p188 = por %p186, %p187
      %p189 = scmp.ne.s32.totalorder %s181, %s184
      %p190 = scmp.eq.s32.totalorder %s21, 0
      %p191 = por %p189, %p190
      %p192 = scmp.ne.s32.totalorder %s181, %s184
      %p193 = scmp.eq.s32.totalorder %s26, 8
      %p194 = por %p192, %p193
      %p195 = scmp.ne.s32.totalorder %s184, %s185
      %p196 = scmp.eq.s32.totalorder %s26, 0
      %p197 = por %p195, %p196
      %p198 = scmp.ne.s32.totalorder %s184, %s185
      %p199 = scmp.eq.s32.totalorder %s27, 8
      %p200 = por %p198, %p199
      %p202 = scmp.ne.s32.totalorder %s185, %s201
      %p203 = scmp.eq.s32.totalorder %s27, 0
      %p204 = por %p202, %p203
      %p205 = scmp.le.s32.totalorder 1, %s21
      %p206 = scmp.lt.s32.totalorder %s21, 10
      %p207 = pnand %p205, %p206
      %p208 = pneg %p207
      // Predicated region
      $region9: #{tpu_custom_call.1} parent=5 // pred_check
        _
      $region10: #{tpu_custom_call.1} parent=5 // pred_check_branch
        %210 = sbr.rel (%p207) target = $region12
      $region11: #{tpu_custom_call.1} parent=5 // pred_region
        %s211 = ssub.s32 %s21, 1
        // Predicated region
        $region13: #{tpu_custom_call.1} parent=11 // pred_check
          %p212 = pneg %p108
        $region14: #{tpu_custom_call.1} parent=11 // pred_check_branch
          %214 = sbr.rel (%p212) target = $region16
        $region15: #{tpu_custom_call.1} parent=11 // pred_region
          %s216 = ssub.s32 64, 64
          %217 = vsyncadd [#allocation7], %s216
          %s219 = sshll.u32 [#allocation8], 4
          %s220 = int_to_ptr.vmem [resolvable:$true] %s219
          %222 = dma.hbm_to_vmem [thread:$0]  %s2, 64, %s220, [#allocation7]
        $region16: #{tpu_custom_call.1} parent=11 // pred_fallthru
          _
        // Predicated region
        $region17: #{tpu_custom_call.1} parent=11 // pred_check
          %p223 = pneg %p129
        $region18: #{tpu_custom_call.1} parent=11 // pred_check_branch
          %225 = sbr.rel (%p223) target = $region20
        $region19: #{tpu_custom_call.1} parent=11 // pred_region
          %s227 = ssub.s32 64, 64
          %228 = vsyncadd [#allocation10], %s227
          %s230 = sshll.u32 [#allocation9], 4
          %s231 = int_to_ptr.vmem [resolvable:$true] %s230
          %233 = dma.hbm_to_vmem [thread:$0]  %s3, 64, %s231, [#allocation10]
        $region20: #{tpu_custom_call.1} parent=11 // pred_fallthru
          _
        // Predicated region
        $region21: #{tpu_custom_call.1} parent=11 // pred_check
          %p234 = pneg %p150
        $region22: #{tpu_custom_call.1} parent=11 // pred_check_branch
          %236 = sbr.rel (%p234) target = $region24
        $region23: #{tpu_custom_call.1} parent=11 // pred_region
          %s238 = ssub.s32 4096, 4096
          %239 = vsyncadd [#allocation10], %s238
          %s240 = sshll.u32 [#allocation11], 4
          %s241 = int_to_ptr.vmem [resolvable:$true] %s240
          %246 = dma.hbm_to_vmem [thread:$0]  %s4, 4096, %s241, [#allocation10], 64, 64, 4
        $region24: #{tpu_custom_call.1} parent=11 // pred_fallthru
          _
        // Predicated region
        $region25: #{tpu_custom_call.1} parent=11 // pred_check
          %p247 = pneg %p171
        $region26: #{tpu_custom_call.1} parent=11 // pred_check_branch
          %249 = sbr.rel (%p247) target = $region28
        $region27: #{tpu_custom_call.1} parent=11 // pred_region
          %s251 = ssub.s32 16, 16
          %252 = vsyncadd [#allocation13], %s251
          %s254 = sshll.u32 [#allocation12], 4
          %s255 = int_to_ptr.vmem [resolvable:$true] %s254
          %257 = dma.hbm_to_vmem [thread:$0]  %s5, 16, %s255, [#allocation13]
        $region28: #{tpu_custom_call.1} parent=11 // pred_fallthru
          _
      $region12: #{tpu_custom_call.1} parent=5 // pred_fallthru
        _
      %p258 = scmp.lt.s32.totalorder %s21, 9
      // Predicated region
      $region29: #{tpu_custom_call.1} parent=5 // pred_check
        %p259 = pneg %p258
      $region30: #{tpu_custom_call.1} parent=5 // pred_check_branch
        %261 = sbr.rel (%p259) target = $region32
      $region31: #{tpu_custom_call.1} parent=5 // pred_region
        // Predicated region
        $region33: #{tpu_custom_call.1} parent=31 // pred_check
          %p262 = pneg %p55
        $region34: #{tpu_custom_call.1} parent=31 // pred_check_branch
          %264 = sbr.rel (%p262) target = $region36
        $region35: #{tpu_custom_call.1} parent=31 // pred_region
          %s265 = sand.u32 %s45, 1
          %s266 = scalar_lea.sflag [#allocation4], %s265
          %s267 = sand.u32 %s45, 1
          %s268 = smul.addr %s267, 256
          %s269 = scalar_lea.vmem [#allocation3], %s268
          %s270 = smul.u32 4, %s28
          %s271 = smul.u32 16, %s29
          %s273 = ssub.s32 4096, 4096
          %274 = vsyncadd %s266, %s273
          %s275 = smul.addr %s270, 144
          %s276 = sadd.s32 %s271, %s275
          %s277 = smul.addr %s276, 64
          %s278 = scalar_lea.hbm %s0, %s277
          %s279 = sshll.u32 %s269, 4
          %s280 = int_to_ptr.vmem [resolvable:$true] %s279
          %285 = dma.hbm_to_vmem [thread:$0]  %s278, 4096, %s280, %s266, 9216, 1024, 64
        $region36: #{tpu_custom_call.1} parent=31 // pred_fallthru
          _
        // Predicated region
        $region37: #{tpu_custom_call.1} parent=31 // pred_check
          %p286 = pneg %p81
        $region38: #{tpu_custom_call.1} parent=31 // pred_check_branch
          %288 = sbr.rel (%p286) target = $region40
        $region39: #{tpu_custom_call.1} parent=31 // pred_region
          %s289 = sand.u32 %s21, 1
          %s290 = scalar_lea.sflag [#allocation7], %s289
          %s291 = sand.u32 %s71, 1
          %s292 = smul.addr %s291, 4096
          %s293 = scalar_lea.vmem [#allocation6], %s292
          %s294 = smul.u32 256, %s29
          %s296 = ssub.s32 65536, 65536
          %297 = vsyncadd %s290, %s296
          %s298 = smul.addr %s294, 4
          %s299 = smul.addr %s298, 64
          %s300 = scalar_lea.hbm %s1, %s299
          %s301 = sshll.u32 %s293, 4
          %s302 = int_to_ptr.vmem [resolvable:$true] %s301
          %307 = dma.hbm_to_vmem [thread:$0]  %s300, 65536, %s302, %s290, 256, 256, 16
        $region40: #{tpu_custom_call.1} parent=31 // pred_fallthru
          _
      $region32: #{tpu_custom_call.1} parent=5 // pred_fallthru
        _
      %p308 = scmp.le.s32.totalorder 1, %s21
      %p309 = scmp.lt.s32.totalorder %s21, 10
      %p310 = pnand %p308, %p309
      %p311 = pneg %p310
      // Predicated region
      $region41: #{tpu_custom_call.1} parent=5 // pred_check
        _
      $region42: #{tpu_custom_call.1} parent=5 // pred_check_branch
        %313 = sbr.rel (%p310) target = $region44
      $region43: #{tpu_custom_call.1} parent=5 // pred_region
        %s314 = ssub.s32 %s21, 1
        %s315 = sand.u32 %s48, 1
        %s316 = scalar_lea.sflag [#allocation4], %s315
        %s317 = sand.u32 %s48, 1
        %s318 = smul.addr %s317, 256
        %s319 = scalar_lea.vmem [#allocation3], %s318
        // Predicated region
        $region45: #{tpu_custom_call.1} parent=43 // pred_check
          %p320 = pneg %p61
        $region46: #{tpu_custom_call.1} parent=43 // pred_check_branch
          %322 = sbr.rel (%p320) target = $region48
        $region47: #{tpu_custom_call.1} parent=43 // pred_region
          %323 = dma.done %s316, 4096
        $region48: #{tpu_custom_call.1} parent=43 // pred_fallthru
          _
        %s324 = sand.u32 %s26, 1
        %s325 = scalar_lea.sflag [#allocation7], %s324
        %s326 = sand.u32 %s74, 1
        %s327 = smul.addr %s326, 4096
        %s328 = scalar_lea.vmem [#allocation6], %s327
        // Predicated region
        $region49: #{tpu_custom_call.1} parent=43 // pred_check
          %p329 = pneg %p87
        $region50: #{tpu_custom_call.1} parent=43 // pred_check_branch
          %331 = sbr.rel (%p329) target = $region52
        $region51: #{tpu_custom_call.1} parent=43 // pred_region
          %332 = dma.done %s325, 65536
        $region52: #{tpu_custom_call.1} parent=43 // pred_fallthru
          _
        // Predicated region
        $region53: #{tpu_custom_call.1} parent=43 // pred_check
          %p333 = pneg %p108
        $region54: #{tpu_custom_call.1} parent=43 // pred_check_branch
          %335 = sbr.rel (%p333) target = $region56
        $region55: #{tpu_custom_call.1} parent=43 // pred_region
          %336 = dma.done [#allocation7], 64
        $region56: #{tpu_custom_call.1} parent=43 // pred_fallthru
          _
        // Predicated region
        $region57: #{tpu_custom_call.1} parent=43 // pred_check
          %p337 = pneg %p129
        $region58: #{tpu_custom_call.1} parent=43 // pred_check_branch
          %339 = sbr.rel (%p337) target = $region60
        $region59: #{tpu_custom_call.1} parent=43 // pred_region
          %340 = dma.done [#allocation10], 64
        $region60: #{tpu_custom_call.1} parent=43 // pred_fallthru
          _
        // Predicated region
        $region61: #{tpu_custom_call.1} parent=43 // pred_check
          %p341 = pneg %p150
        $region62: #{tpu_custom_call.1} parent=43 // pred_check_branch
          %343 = sbr.rel (%p341) target = $region64
        $region63: #{tpu_custom_call.1} parent=43 // pred_region
          %344 = dma.done [#allocation10], 4096
        $region64: #{tpu_custom_call.1} parent=43 // pred_fallthru
          _
        // Predicated region
        $region65: #{tpu_custom_call.1} parent=43 // pred_check
          %p345 = pneg %p171
        $region66: #{tpu_custom_call.1} parent=43 // pred_check_branch
          %347 = sbr.rel (%p345) target = $region68
        $region67: #{tpu_custom_call.1} parent=43 // pred_region
          %348 = dma.done [#allocation13], 16
        $region68: #{tpu_custom_call.1} parent=43 // pred_fallthru
          _
        %s349 = sand.u32 %s48, 1
        %s350 = scalar_lea.sflag [#allocation4], %s349
        %s351 = sand.u32 %s48, 1
        %s352 = smul.addr %s351, 256
        %s353 = scalar_lea.vmem [#allocation3], %s352
        %p354 = pneg %p61
        %p355 = pneg %p58
        %s356 = sand.u32 %s26, 1
        %s357 = scalar_lea.sflag [#allocation7], %s356
        %s358 = sand.u32 %s74, 1
        %s359 = smul.addr %s358, 4096
        %s360 = scalar_lea.vmem [#allocation6], %s359
        %p361 = pneg %p87
        %p362 = pneg %p84
        %p363 = pneg %p108
        %p364 = pneg %p105
        %p365 = pneg %p129
        %p366 = pneg %p126
        %p367 = pneg %p150
        %p368 = pneg %p147
        %p369 = pneg %p171
        %p370 = pneg %p168
        %p371 = pneg %p197
        %p372 = pneg %p194
        %s373 = smul.u32 4, %s30
        %s374 = smul.u32 16, %s31
        %s375 = smul.u32 256, %s31
        %s376 = smul.u32 4, %s30
        %p378 = scmp.eq.s32.totalorder %s31, 0
        // Predicated region
        $region69: #{tpu_custom_call.1} parent=43 // pred_check
          %p379 = pneg %p378
        $region70: #{tpu_custom_call.1} parent=43 // pred_check_branch
          %381 = sbr.rel (%p379) target = $region72
        $region71: #{tpu_custom_call.1} parent=43 // pred_region
          %382 = vst [vmem:[#allocation2] sm:$0xff] 0.0
          %383 = vst [vmem:[#allocation2 + $0x8] sm:$0xff] 0.0
          %384 = vst [vmem:[#allocation2 + $0x10] sm:$0xff] 0.0
          %385 = vst [vmem:[#allocation2 + $0x18] sm:$0xff] 0.0
          %386 = vst [vmem:[#allocation2 + $0x20] sm:$0xff] 0.0
          %387 = vst [vmem:[#allocation2 + $0x28] sm:$0xff] 0.0
          %388 = vst [vmem:[#allocation2 + $0x30] sm:$0xff] 0.0
          %389 = vst [vmem:[#allocation2 + $0x38] sm:$0xff] 0.0
          %390 = vst [vmem:[#allocation2 + $0x40] sm:$0xff] 0.0
          %391 = vst [vmem:[#allocation2 + $0x48] sm:$0xff] 0.0
          %392 = vst [vmem:[#allocation2 + $0x50] sm:$0xff] 0.0
          %393 = vst [vmem:[#allocation2 + $0x58] sm:$0xff] 0.0
          %394 = vst [vmem:[#allocation2 + $0x60] sm:$0xff] 0.0
          %395 = vst [vmem:[#allocation2 + $0x68] sm:$0xff] 0.0
          %396 = vst [vmem:[#allocation2 + $0x70] sm:$0xff] 0.0
          %397 = vst [vmem:[#allocation2 + $0x78] sm:$0xff] 0.0
        $region72: #{tpu_custom_call.1} parent=43 // pred_fallthru
          _
        %v398 = vld [vmem:[#allocation2] sm:$0xff]
        %v399 = vld [vmem:[#allocation2 + $0x8] sm:$0xff]
        %v400 = vld [vmem:[#allocation2 + $0x10] sm:$0xff]
        %v401 = vld [vmem:[#allocation2 + $0x18] sm:$0xff]
        %v402 = vld [vmem:[#allocation2 + $0x20] sm:$0xff]
        %v403 = vld [vmem:[#allocation2 + $0x28] sm:$0xff]
        %v404 = vld [vmem:[#allocation2 + $0x30] sm:$0xff]
        %v405 = vld [vmem:[#allocation2 + $0x38] sm:$0xff]
        %v406 = vld [vmem:[#allocation2 + $0x40] sm:$0xff]
        %v407 = vld [vmem:[#allocation2 + $0x48] sm:$0xff]
        %v408 = vld [vmem:[#allocation2 + $0x50] sm:$0xff]
        %v409 = vld [vmem:[#allocation2 + $0x58] sm:$0xff]
        %v410 = vld [vmem:[#allocation2 + $0x60] sm:$0xff]
        %v411 = vld [vmem:[#allocation2 + $0x68] sm:$0xff]
        %v412 = vld [vmem:[#allocation2 + $0x70] sm:$0xff]
        %v413 = vld [vmem:[#allocation2 + $0x78] sm:$0xff]
        %v414 = vld [vmem:[%s319] sm:$0xff]
        %v415 = vld [vmem:[%s319 + $0x8] sm:$0xff]
        %v416 = vld [vmem:[%s319 + $0x10] sm:$0xff]
        %v417 = vld [vmem:[%s319 + $0x18] sm:$0xff]
        %v418 = vld [vmem:[%s319 + $0x20] sm:$0xff]
        %v419 = vld [vmem:[%s319 + $0x28] sm:$0xff]
        %v420 = vld [vmem:[%s319 + $0x30] sm:$0xff]
        %v421 = vld [vmem:[%s319 + $0x38] sm:$0xff]
        %v422 = vld [vmem:[%s319 + $0x40] sm:$0xff]
        %v423 = vld [vmem:[%s319 + $0x48] sm:$0xff]
        %v424 = vld [vmem:[%s319 + $0x50] sm:$0xff]
        %v425 = vld [vmem:[%s319 + $0x58] sm:$0xff]
        %v426 = vld [vmem:[%s319 + $0x60] sm:$0xff]
        %v427 = vld [vmem:[%s319 + $0x68] sm:$0xff]
        %v428 = vld [vmem:[%s319 + $0x70] sm:$0xff]
        %v429 = vld [vmem:[%s319 + $0x78] sm:$0xff]
        %v430 = vld [vmem:[%s319 + $0x80] sm:$0xff]
        %v431 = vld [vmem:[%s319 + $0x88] sm:$0xff]
        %v432 = vld [vmem:[%s319 + $0x90] sm:$0xff]
        %v433 = vld [vmem:[%s319 + $0x98] sm:$0xff]
        %v434 = vld [vmem:[%s319 + $0xa0] sm:$0xff]
        %v435 = vld [vmem:[%s319 + $0xa8] sm:$0xff]
        %v436 = vld [vmem:[%s319 + $0xb0] sm:$0xff]
        %v437 = vld [vmem:[%s319 + $0xb8] sm:$0xff]
        %v438 = vld [vmem:[%s319 + $0xc0] sm:$0xff]
        %v439 = vld [vmem:[%s319 + $0xc8] sm:$0xff]
        %v440 = vld [vmem:[%s319 + $0xd0] sm:$0xff]
        %v441 = vld [vmem:[%s319 + $0xd8] sm:$0xff]
        %v442 = vld [vmem:[%s319 + $0xe0] sm:$0xff]
        %v443 = vld [vmem:[%s319 + $0xe8] sm:$0xff]
        %v444 = vld [vmem:[%s319 + $0xf0] sm:$0xff]
        %v445 = vld [vmem:[%s319 + $0xf8] sm:$0xff]
        %v446 = vld [vmem:[%s328] sm:$0xff]
        %v447 = vld [vmem:[%s328 + $0x8] sm:$0xff]
        %v448 = vld [vmem:[%s328 + $0x10] sm:$0xff]
        %v449 = vld [vmem:[%s328 + $0x18] sm:$0xff]
        %v450 = vld [vmem:[%s328 + $0x20] sm:$0xff]
        %v451 = vld [vmem:[%s328 + $0x28] sm:$0xff]
        %v452 = vld [vmem:[%s328 + $0x30] sm:$0xff]
        %v453 = vld [vmem:[%s328 + $0x38] sm:$0xff]
        %v454 = vld [vmem:[%s328 + $0x40] sm:$0xff]
        %v455 = vld [vmem:[%s328 + $0x48] sm:$0xff]
        %v456 = vld [vmem:[%s328 + $0x50] sm:$0xff]
        %v457 = vld [vmem:[%s328 + $0x58] sm:$0xff]
        %v458 = vld [vmem:[%s328 + $0x60] sm:$0xff]
        %v459 = vld [vmem:[%s328 + $0x68] sm:$0xff]
        %v460 = vld [vmem:[%s328 + $0x70] sm:$0xff]
        %v461 = vld [vmem:[%s328 + $0x78] sm:$0xff]
        %v462 = vld [vmem:[%s328 + $0x80] sm:$0xff]
        %v463 = vld [vmem:[%s328 + $0x88] sm:$0xff]
        %v464 = vld [vmem:[%s328 + $0x90] sm:$0xff]
        %v465 = vld [vmem:[%s328 + $0x98] sm:$0xff]
        %v466 = vld [vmem:[%s328 + $0xa0] sm:$0xff]
        %v467 = vld [vmem:[%s328 + $0xa8] sm:$0xff]
        %v468 = vld [vmem:[%s328 + $0xb0] sm:$0xff]
        %v469 = vld [vmem:[%s328 + $0xb8] sm:$0xff]
        %v470 = vld [vmem:[%s328 + $0xc0] sm:$0xff]
        %v471 = vld [vmem:[%s328 + $0xc8] sm:$0xff]
        %v472 = vld [vmem:[%s328 + $0xd0] sm:$0xff]
        %v473 = vld [vmem:[%s328 + $0xd8] sm:$0xff]
        %v474 = vld [vmem:[%s328 + $0xe0] sm:$0xff]
        %v475 = vld [vmem:[%s328 + $0xe8] sm:$0xff]
        %v476 = vld [vmem:[%s328 + $0xf0] sm:$0xff]
        %v477 = vld [vmem:[%s328 + $0xf8] sm:$0xff]
        %v478 = vld [vmem:[%s328 + $0x100] sm:$0xff]
        %v479 = vld [vmem:[%s328 + $0x108] sm:$0xff]
        %v480 = vld [vmem:[%s328 + $0x110] sm:$0xff]
        %v481 = vld [vmem:[%s328 + $0x118] sm:$0xff]
        %v482 = vld [vmem:[%s328 + $0x120] sm:$0xff]
        %v483 = vld [vmem:[%s328 + $0x128] sm:$0xff]
        %v484 = vld [vmem:[%s328 + $0x130] sm:$0xff]
        %v485 = vld [vmem:[%s328 + $0x138] sm:$0xff]
        %v486 = vld [vmem:[%s328 + $0x140] sm:$0xff]
        %v487 = vld [vmem:[%s328 + $0x148] sm:$0xff]
        %v488 = vld [vmem:[%s328 + $0x150] sm:$0xff]
        %v489 = vld [vmem:[%s328 + $0x158] sm:$0xff]
        %v490 = vld [vmem:[%s328 + $0x160] sm:$0xff]
        %v491 = vld [vmem:[%s328 + $0x168] sm:$0xff]
        %v492 = vld [vmem:[%s328 + $0x170] sm:$0xff]
        %v493 = vld [vmem:[%s328 + $0x178] sm:$0xff]
        %v494 = vld [vmem:[%s328 + $0x180] sm:$0xff]
        %v495 = vld [vmem:[%s328 + $0x188] sm:$0xff]
        %v496 = vld [vmem:[%s328 + $0x190] sm:$0xff]
        %v497 = vld [vmem:[%s328 + $0x198] sm:$0xff]
        %v498 = vld [vmem:[%s328 + $0x1a0] sm:$0xff]
        %v499 = vld [vmem:[%s328 + $0x1a8] sm:$0xff]
        %v500 = vld [vmem:[%s328 + $0x1b0] sm:$0xff]
        %v501 = vld [vmem:[%s328 + $0x1b8] sm:$0xff]
        %v502 = vld [vmem:[%s328 + $0x1c0] sm:$0xff]
        %v503 = vld [vmem:[%s328 + $0x1c8] sm:$0xff]
        %v504 = vld [vmem:[%s328 + $0x1d0] sm:$0xff]
        %v505 = vld [vmem:[%s328 + $0x1d8] sm:$0xff]
        %v506 = vld [vmem:[%s328 + $0x1e0] sm:$0xff]
        %v507 = vld [vmem:[%s328 + $0x1e8] sm:$0xff]
        %v508 = vld [vmem:[%s328 + $0x1f0] sm:$0xff]
        %v509 = vld [vmem:[%s328 + $0x1f8] sm:$0xff]
        %v510 = vld [vmem:[%s328 + $0x200] sm:$0xff]
        %v511 = vld [vmem:[%s328 + $0x208] sm:$0xff]
        %v512 = vld [vmem:[%s328 + $0x210] sm:$0xff]
        %v513 = vld [vmem:[%s328 + $0x218] sm:$0xff]
        %v514 = vld [vmem:[%s328 + $0x220] sm:$0xff]
        %v515 = vld [vmem:[%s328 + $0x228] sm:$0xff]
        %v516 = vld [vmem:[%s328 + $0x230] sm:$0xff]
        %v517 = vld [vmem:[%s328 + $0x238] sm:$0xff]
        %v518 = vld [vmem:[%s328 + $0x240] sm:$0xff]
        %v519 = vld [vmem:[%s328 + $0x248] sm:$0xff]
        %v520 = vld [vmem:[%s328 + $0x250] sm:$0xff]
        %v521 = vld [vmem:[%s328 + $0x258] sm:$0xff]
        %v522 = vld [vmem:[%s328 + $0x260] sm:$0xff]
        %v523 = vld [vmem:[%s328 + $0x268] sm:$0xff]
        %v524 = vld [vmem:[%s328 + $0x270] sm:$0xff]
        %v525 = vld [vmem:[%s328 + $0x278] sm:$0xff]
        %v526 = vld [vmem:[%s328 + $0x280] sm:$0xff]
        %v527 = vld [vmem:[%s328 + $0x288] sm:$0xff]
        %v528 = vld [vmem:[%s328 + $0x290] sm:$0xff]
        %v529 = vld [vmem:[%s328 + $0x298] sm:$0xff]
        %v530 = vld [vmem:[%s328 + $0x2a0] sm:$0xff]
        %v531 = vld [vmem:[%s328 + $0x2a8] sm:$0xff]
        %v532 = vld [vmem:[%s328 + $0x2b0] sm:$0xff]
        %v533 = vld [vmem:[%s328 + $0x2b8] sm:$0xff]
        %v534 = vld [vmem:[%s328 + $0x2c0] sm:$0xff]
        %v535 = vld [vmem:[%s328 + $0x2c8] sm:$0xff]
        %v536 = vld [vmem:[%s328 + $0x2d0] sm:$0xff]
        %v537 = vld [vmem:[%s328 + $0x2d8] sm:$0xff]
        %v538 = vld [vmem:[%s328 + $0x2e0] sm:$0xff]
        %v539 = vld [vmem:[%s328 + $0x2e8] sm:$0xff]
        %v540 = vld [vmem:[%s328 + $0x2f0] sm:$0xff]
        %v541 = vld [vmem:[%s328 + $0x2f8] sm:$0xff]
        %v542 = vld [vmem:[%s328 + $0x300] sm:$0xff]
        %v543 = vld [vmem:[%s328 + $0x308] sm:$0xff]
        %v544 = vld [vmem:[%s328 + $0x310] sm:$0xff]
        %v545 = vld [vmem:[%s328 + $0x318] sm:$0xff]
        %v546 = vld [vmem:[%s328 + $0x320] sm:$0xff]
        %v547 = vld [vmem:[%s328 + $0x328] sm:$0xff]
        %v548 = vld [vmem:[%s328 + $0x330] sm:$0xff]
        %v549 = vld [vmem:[%s328 + $0x338] sm:$0xff]
        %v550 = vld [vmem:[%s328 + $0x340] sm:$0xff]
        %v551 = vld [vmem:[%s328 + $0x348] sm:$0xff]
        %v552 = vld [vmem:[%s328 + $0x350] sm:$0xff]
        %v553 = vld [vmem:[%s328 + $0x358] sm:$0xff]
        %v554 = vld [vmem:[%s328 + $0x360] sm:$0xff]
        %v555 = vld [vmem:[%s328 + $0x368] sm:$0xff]
        %v556 = vld [vmem:[%s328 + $0x370] sm:$0xff]
        %v557 = vld [vmem:[%s328 + $0x378] sm:$0xff]
        %v558 = vld [vmem:[%s328 + $0x380] sm:$0xff]
        %v559 = vld [vmem:[%s328 + $0x388] sm:$0xff]
        %v560 = vld [vmem:[%s328 + $0x390] sm:$0xff]
        %v561 = vld [vmem:[%s328 + $0x398] sm:$0xff]
        %v562 = vld [vmem:[%s328 + $0x3a0] sm:$0xff]
        %v563 = vld [vmem:[%s328 + $0x3a8] sm:$0xff]
        %v564 = vld [vmem:[%s328 + $0x3b0] sm:$0xff]
        %v565 = vld [vmem:[%s328 + $0x3b8] sm:$0xff]
        %v566 = vld [vmem:[%s328 + $0x3c0] sm:$0xff]
        %v567 = vld [vmem:[%s328 + $0x3c8] sm:$0xff]
        %v568 = vld [vmem:[%s328 + $0x3d0] sm:$0xff]
        %v569 = vld [vmem:[%s328 + $0x3d8] sm:$0xff]
        %v570 = vld [vmem:[%s328 + $0x3e0] sm:$0xff]
        %v571 = vld [vmem:[%s328 + $0x3e8] sm:$0xff]
        %v572 = vld [vmem:[%s328 + $0x3f0] sm:$0xff]
        %v573 = vld [vmem:[%s328 + $0x3f8] sm:$0xff]
        %v574 = vld [vmem:[%s328 + $0x400] sm:$0xff]
        %v575 = vld [vmem:[%s328 + $0x408] sm:$0xff]
        %v576 = vld [vmem:[%s328 + $0x410] sm:$0xff]
        %v577 = vld [vmem:[%s328 + $0x418] sm:$0xff]
        %v578 = vld [vmem:[%s328 + $0x420] sm:$0xff]
        %v579 = vld [vmem:[%s328 + $0x428] sm:$0xff]
        %v580 = vld [vmem:[%s328 + $0x430] sm:$0xff]
        %v581 = vld [vmem:[%s328 + $0x438] sm:$0xff]
        %v582 = vld [vmem:[%s328 + $0x440] sm:$0xff]
        %v583 = vld [vmem:[%s328 + $0x448] sm:$0xff]
        %v584 = vld [vmem:[%s328 + $0x450] sm:$0xff]
        %v585 = vld [vmem:[%s328 + $0x458] sm:$0xff]
        %v586 = vld [vmem:[%s328 + $0x460] sm:$0xff]
        %v587 = vld [vmem:[%s328 + $0x468] sm:$0xff]
        %v588 = vld [vmem:[%s328 + $0x470] sm:$0xff]
        %v589 = vld [vmem:[%s328 + $0x478] sm:$0xff]
        %v590 = vld [vmem:[%s328 + $0x480] sm:$0xff]
        %v591 = vld [vmem:[%s328 + $0x488] sm:$0xff]
        %v592 = vld [vmem:[%s328 + $0x490] sm:$0xff]
        %v593 = vld [vmem:[%s328 + $0x498] sm:$0xff]
        %v594 = vld [vmem:[%s328 + $0x4a0] sm:$0xff]
        %v595 = vld [vmem:[%s328 + $0x4a8] sm:$0xff]
        %v596 = vld [vmem:[%s328 + $0x4b0] sm:$0xff]
        %v597 = vld [vmem:[%s328 + $0x4b8] sm:$0xff]
        %v598 = vld [vmem:[%s328 + $0x4c0] sm:$0xff]
        %v599 = vld [vmem:[%s328 + $0x4c8] sm:$0xff]
        %v600 = vld [vmem:[%s328 + $0x4d0] sm:$0xff]
        %v601 = vld [vmem:[%s328 + $0x4d8] sm:$0xff]
        %v602 = vld [vmem:[%s328 + $0x4e0] sm:$0xff]
        %v603 = vld [vmem:[%s328 + $0x4e8] sm:$0xff]
        %v604 = vld [vmem:[%s328 + $0x4f0] sm:$0xff]
        %v605 = vld [vmem:[%s328 + $0x4f8] sm:$0xff]
        %v606 = vld [vmem:[%s328 + $0x500] sm:$0xff]
        %v607 = vld [vmem:[%s328 + $0x508] sm:$0xff]
        %v608 = vld [vmem:[%s328 + $0x510] sm:$0xff]
        %v609 = vld [vmem:[%s328 + $0x518] sm:$0xff]
        %v610 = vld [vmem:[%s328 + $0x520] sm:$0xff]
        %v611 = vld [vmem:[%s328 + $0x528] sm:$0xff]
        %v612 = vld [vmem:[%s328 + $0x530] sm:$0xff]
        %v613 = vld [vmem:[%s328 + $0x538] sm:$0xff]
        %v614 = vld [vmem:[%s328 + $0x540] sm:$0xff]
        %v615 = vld [vmem:[%s328 + $0x548] sm:$0xff]
        %v616 = vld [vmem:[%s328 + $0x550] sm:$0xff]
        %v617 = vld [vmem:[%s328 + $0x558] sm:$0xff]
        %v618 = vld [vmem:[%s328 + $0x560] sm:$0xff]
        %v619 = vld [vmem:[%s328 + $0x568] sm:$0xff]
        %v620 = vld [vmem:[%s328 + $0x570] sm:$0xff]
        %v621 = vld [vmem:[%s328 + $0x578] sm:$0xff]
        %v622 = vld [vmem:[%s328 + $0x580] sm:$0xff]
        %v623 = vld [vmem:[%s328 + $0x588] sm:$0xff]
        %v624 = vld [vmem:[%s328 + $0x590] sm:$0xff]
        %v625 = vld [vmem:[%s328 + $0x598] sm:$0xff]
        %v626 = vld [vmem:[%s328 + $0x5a0] sm:$0xff]
        %v627 = vld [vmem:[%s328 + $0x5a8] sm:$0xff]
        %v628 = vld [vmem:[%s328 + $0x5b0] sm:$0xff]
        %v629 = vld [vmem:[%s328 + $0x5b8] sm:$0xff]
        %v630 = vld [vmem:[%s328 + $0x5c0] sm:$0xff]
        %v631 = vld [vmem:[%s328 + $0x5c8] sm:$0xff]
        %v632 = vld [vmem:[%s328 + $0x5d0] sm:$0xff]
        %v633 = vld [vmem:[%s328 + $0x5d8] sm:$0xff]
        %v634 = vld [vmem:[%s328 + $0x5e0] sm:$0xff]
        %v635 = vld [vmem:[%s328 + $0x5e8] sm:$0xff]
        %v636 = vld [vmem:[%s328 + $0x5f0] sm:$0xff]
        %v637 = vld [vmem:[%s328 + $0x5f8] sm:$0xff]
        %v638 = vld [vmem:[%s328 + $0x600] sm:$0xff]
        %v639 = vld [vmem:[%s328 + $0x608] sm:$0xff]
        %v640 = vld [vmem:[%s328 + $0x610] sm:$0xff]
        %v641 = vld [vmem:[%s328 + $0x618] sm:$0xff]
        %v642 = vld [vmem:[%s328 + $0x620] sm:$0xff]
        %v643 = vld [vmem:[%s328 + $0x628] sm:$0xff]
        %v644 = vld [vmem:[%s328 + $0x630] sm:$0xff]
        %v645 = vld [vmem:[%s328 + $0x638] sm:$0xff]
        %v646 = vld [vmem:[%s328 + $0x640] sm:$0xff]
        %v647 = vld [vmem:[%s328 + $0x648] sm:$0xff]
        %v648 = vld [vmem:[%s328 + $0x650] sm:$0xff]
        %v649 = vld [vmem:[%s328 + $0x658] sm:$0xff]
        %v650 = vld [vmem:[%s328 + $0x660] sm:$0xff]
        %v651 = vld [vmem:[%s328 + $0x668] sm:$0xff]
        %v652 = vld [vmem:[%s328 + $0x670] sm:$0xff]
        %v653 = vld [vmem:[%s328 + $0x678] sm:$0xff]
        %v654 = vld [vmem:[%s328 + $0x680] sm:$0xff]
        %v655 = vld [vmem:[%s328 + $0x688] sm:$0xff]
        %v656 = vld [vmem:[%s328 + $0x690] sm:$0xff]
        %v657 = vld [vmem:[%s328 + $0x698] sm:$0xff]
        %v658 = vld [vmem:[%s328 + $0x6a0] sm:$0xff]
        %v659 = vld [vmem:[%s328 + $0x6a8] sm:$0xff]
        %v660 = vld [vmem:[%s328 + $0x6b0] sm:$0xff]
        %v661 = vld [vmem:[%s328 + $0x6b8] sm:$0xff]
        %v662 = vld [vmem:[%s328 + $0x6c0] sm:$0xff]
        %v663 = vld [vmem:[%s328 + $0x6c8] sm:$0xff]
        %v664 = vld [vmem:[%s328 + $0x6d0] sm:$0xff]
        %v665 = vld [vmem:[%s328 + $0x6d8] sm:$0xff]
        %v666 = vld [vmem:[%s328 + $0x6e0] sm:$0xff]
        %v667 = vld [vmem:[%s328 + $0x6e8] sm:$0xff]
        %v668 = vld [vmem:[%s328 + $0x6f0] sm:$0xff]
        %v669 = vld [vmem:[%s328 + $0x6f8] sm:$0xff]
        %v670 = vld [vmem:[%s328 + $0x700] sm:$0xff]
        %v671 = vld [vmem:[%s328 + $0x708] sm:$0xff]
        %v672 = vld [vmem:[%s328 + $0x710] sm:$0xff]
        %v673 = vld [vmem:[%s328 + $0x718] sm:$0xff]
        %v674 = vld [vmem:[%s328 + $0x720] sm:$0xff]
        %v675 = vld [vmem:[%s328 + $0x728] sm:$0xff]
        %v676 = vld [vmem:[%s328 + $0x730] sm:$0xff]
        %v677 = vld [vmem:[%s328 + $0x738] sm:$0xff]
        %v678 = vld [vmem:[%s328 + $0x740] sm:$0xff]
        %v679 = vld [vmem:[%s328 + $0x748] sm:$0xff]
        %v680 = vld [vmem:[%s328 + $0x750] sm:$0xff]
        %v681 = vld [vmem:[%s328 + $0x758] sm:$0xff]
        %v682 = vld [vmem:[%s328 + $0x760] sm:$0xff]
        %v683 = vld [vmem:[%s328 + $0x768] sm:$0xff]
        %v684 = vld [vmem:[%s328 + $0x770] sm:$0xff]
        %v685 = vld [vmem:[%s328 + $0x778] sm:$0xff]
        %v686 = vld [vmem:[%s328 + $0x780] sm:$0xff]
        %v687 = vld [vmem:[%s328 + $0x788] sm:$0xff]
        %v688 = vld [vmem:[%s328 + $0x790] sm:$0xff]
        %v689 = vld [vmem:[%s328 + $0x798] sm:$0xff]
        %v690 = vld [vmem:[%s328 + $0x7a0] sm:$0xff]
        %v691 = vld [vmem:[%s328 + $0x7a8] sm:$0xff]
        %v692 = vld [vmem:[%s328 + $0x7b0] sm:$0xff]
        %v693 = vld [vmem:[%s328 + $0x7b8] sm:$0xff]
        %v694 = vld [vmem:[%s328 + $0x7c0] sm:$0xff]
        %v695 = vld [vmem:[%s328 + $0x7c8] sm:$0xff]
        %v696 = vld [vmem:[%s328 + $0x7d0] sm:$0xff]
        %v697 = vld [vmem:[%s328 + $0x7d8] sm:$0xff]
        %v698 = vld [vmem:[%s328 + $0x7e0] sm:$0xff]
        %v699 = vld [vmem:[%s328 + $0x7e8] sm:$0xff]
        %v700 = vld [vmem:[%s328 + $0x7f0] sm:$0xff]
        %v701 = vld [vmem:[%s328 + $0x7f8] sm:$0xff]
        %v702 = vld [vmem:[%s328 + $0x800] sm:$0xff]
        %v703 = vld [vmem:[%s328 + $0x808] sm:$0xff]
        %v704 = vld [vmem:[%s328 + $0x810] sm:$0xff]
        %v705 = vld [vmem:[%s328 + $0x818] sm:$0xff]
        %v706 = vld [vmem:[%s328 + $0x820] sm:$0xff]
        %v707 = vld [vmem:[%s328 + $0x828] sm:$0xff]
        %v708 = vld [vmem:[%s328 + $0x830] sm:$0xff]
        %v709 = vld [vmem:[%s328 + $0x838] sm:$0xff]
        %v710 = vld [vmem:[%s328 + $0x840] sm:$0xff]
        %v711 = vld [vmem:[%s328 + $0x848] sm:$0xff]
        %v712 = vld [vmem:[%s328 + $0x850] sm:$0xff]
        %v713 = vld [vmem:[%s328 + $0x858] sm:$0xff]
        %v714 = vld [vmem:[%s328 + $0x860] sm:$0xff]
        %v715 = vld [vmem:[%s328 + $0x868] sm:$0xff]
        %v716 = vld [vmem:[%s328 + $0x870] sm:$0xff]
        %v717 = vld [vmem:[%s328 + $0x878] sm:$0xff]
        %v718 = vld [vmem:[%s328 + $0x880] sm:$0xff]
        %v719 = vld [vmem:[%s328 + $0x888] sm:$0xff]
        %v720 = vld [vmem:[%s328 + $0x890] sm:$0xff]
        %v721 = vld [vmem:[%s328 + $0x898] sm:$0xff]
        %v722 = vld [vmem:[%s328 + $0x8a0] sm:$0xff]
        %v723 = vld [vmem:[%s328 + $0x8a8] sm:$0xff]
        %v724 = vld [vmem:[%s328 + $0x8b0] sm:$0xff]
        %v725 = vld [vmem:[%s328 + $0x8b8] sm:$0xff]
        %v726 = vld [vmem:[%s328 + $0x8c0] sm:$0xff]
        %v727 = vld [vmem:[%s328 + $0x8c8] sm:$0xff]
        %v728 = vld [vmem:[%s328 + $0x8d0] sm:$0xff]
        %v729 = vld [vmem:[%s328 + $0x8d8] sm:$0xff]
        %v730 = vld [vmem:[%s328 + $0x8e0] sm:$0xff]
        %v731 = vld [vmem:[%s328 + $0x8e8] sm:$0xff]
        %v732 = vld [vmem:[%s328 + $0x8f0] sm:$0xff]
        %v733 = vld [vmem:[%s328 + $0x8f8] sm:$0xff]
        %v734 = vld [vmem:[%s328 + $0x900] sm:$0xff]
        %v735 = vld [vmem:[%s328 + $0x908] sm:$0xff]
        %v736 = vld [vmem:[%s328 + $0x910] sm:$0xff]
        %v737 = vld [vmem:[%s328 + $0x918] sm:$0xff]
        %v738 = vld [vmem:[%s328 + $0x920] sm:$0xff]
        %v739 = vld [vmem:[%s328 + $0x928] sm:$0xff]
        %v740 = vld [vmem:[%s328 + $0x930] sm:$0xff]
        %v741 = vld [vmem:[%s328 + $0x938] sm:$0xff]
        %v742 = vld [vmem:[%s328 + $0x940] sm:$0xff]
        %v743 = vld [vmem:[%s328 + $0x948] sm:$0xff]
        %v744 = vld [vmem:[%s328 + $0x950] sm:$0xff]
        %v745 = vld [vmem:[%s328 + $0x958] sm:$0xff]
        %v746 = vld [vmem:[%s328 + $0x960] sm:$0xff]
        %v747 = vld [vmem:[%s328 + $0x968] sm:$0xff]
        %v748 = vld [vmem:[%s328 + $0x970] sm:$0xff]
        %v749 = vld [vmem:[%s328 + $0x978] sm:$0xff]
        %v750 = vld [vmem:[%s328 + $0x980] sm:$0xff]
        %v751 = vld [vmem:[%s328 + $0x988] sm:$0xff]
        %v752 = vld [vmem:[%s328 + $0x990] sm:$0xff]
        %v753 = vld [vmem:[%s328 + $0x998] sm:$0xff]
        %v754 = vld [vmem:[%s328 + $0x9a0] sm:$0xff]
        %v755 = vld [vmem:[%s328 + $0x9a8] sm:$0xff]
        %v756 = vld [vmem:[%s328 + $0x9b0] sm:$0xff]
        %v757 = vld [vmem:[%s328 + $0x9b8] sm:$0xff]
        %v758 = vld [vmem:[%s328 + $0x9c0] sm:$0xff]
        %v759 = vld [vmem:[%s328 + $0x9c8] sm:$0xff]
        %v760 = vld [vmem:[%s328 + $0x9d0] sm:$0xff]
        %v761 = vld [vmem:[%s328 + $0x9d8] sm:$0xff]
        %v762 = vld [vmem:[%s328 + $0x9e0] sm:$0xff]
        %v763 = vld [vmem:[%s328 + $0x9e8] sm:$0xff]
        %v764 = vld [vmem:[%s328 + $0x9f0] sm:$0xff]
        %v765 = vld [vmem:[%s328 + $0x9f8] sm:$0xff]
        %v766 = vld [vmem:[%s328 + $0xa00] sm:$0xff]
        %v767 = vld [vmem:[%s328 + $0xa08] sm:$0xff]
        %v768 = vld [vmem:[%s328 + $0xa10] sm:$0xff]
        %v769 = vld [vmem:[%s328 + $0xa18] sm:$0xff]
        %v770 = vld [vmem:[%s328 + $0xa20] sm:$0xff]
        %v771 = vld [vmem:[%s328 + $0xa28] sm:$0xff]
        %v772 = vld [vmem:[%s328 + $0xa30] sm:$0xff]
        %v773 = vld [vmem:[%s328 + $0xa38] sm:$0xff]
        %v774 = vld [vmem:[%s328 + $0xa40] sm:$0xff]
        %v775 = vld [vmem:[%s328 + $0xa48] sm:$0xff]
        %v776 = vld [vmem:[%s328 + $0xa50] sm:$0xff]
        %v777 = vld [vmem:[%s328 + $0xa58] sm:$0xff]
        %v778 = vld [vmem:[%s328 + $0xa60] sm:$0xff]
        %v779 = vld [vmem:[%s328 + $0xa68] sm:$0xff]
        %v780 = vld [vmem:[%s328 + $0xa70] sm:$0xff]
        %v781 = vld [vmem:[%s328 + $0xa78] sm:$0xff]
        %v782 = vld [vmem:[%s328 + $0xa80] sm:$0xff]
        %v783 = vld [vmem:[%s328 + $0xa88] sm:$0xff]
        %v784 = vld [vmem:[%s328 + $0xa90] sm:$0xff]
        %v785 = vld [vmem:[%s328 + $0xa98] sm:$0xff]
        %v786 = vld [vmem:[%s328 + $0xaa0] sm:$0xff]
        %v787 = vld [vmem:[%s328 + $0xaa8] sm:$0xff]
        %v788 = vld [vmem:[%s328 + $0xab0] sm:$0xff]
        %v789 = vld [vmem:[%s328 + $0xab8] sm:$0xff]
        %v790 = vld [vmem:[%s328 + $0xac0] sm:$0xff]
        %v791 = vld [vmem:[%s328 + $0xac8] sm:$0xff]
        %v792 = vld [vmem:[%s328 + $0xad0] sm:$0xff]
        %v793 = vld [vmem:[%s328 + $0xad8] sm:$0xff]
        %v794 = vld [vmem:[%s328 + $0xae0] sm:$0xff]
        %v795 = vld [vmem:[%s328 + $0xae8] sm:$0xff]
        %v796 = vld [vmem:[%s328 + $0xaf0] sm:$0xff]
        %v797 = vld [vmem:[%s328 + $0xaf8] sm:$0xff]
        %v798 = vld [vmem:[%s328 + $0xb00] sm:$0xff]
        %v799 = vld [vmem:[%s328 + $0xb08] sm:$0xff]
        %v800 = vld [vmem:[%s328 + $0xb10] sm:$0xff]
        %v801 = vld [vmem:[%s328 + $0xb18] sm:$0xff]
        %v802 = vld [vmem:[%s328 + $0xb20] sm:$0xff]
        %v803 = vld [vmem:[%s328 + $0xb28] sm:$0xff]
        %v804 = vld [vmem:[%s328 + $0xb30] sm:$0xff]
        %v805 = vld [vmem:[%s328 + $0xb38] sm:$0xff]
        %v806 = vld [vmem:[%s328 + $0xb40] sm:$0xff]
        %v807 = vld [vmem:[%s328 + $0xb48] sm:$0xff]
        %v808 = vld [vmem:[%s328 + $0xb50] sm:$0xff]
        %v809 = vld [vmem:[%s328 + $0xb58] sm:$0xff]
        %v810 = vld [vmem:[%s328 + $0xb60] sm:$0xff]
        %v811 = vld [vmem:[%s328 + $0xb68] sm:$0xff]
        %v812 = vld [vmem:[%s328 + $0xb70] sm:$0xff]
        %v813 = vld [vmem:[%s328 + $0xb78] sm:$0xff]
        %v814 = vld [vmem:[%s328 + $0xb80] sm:$0xff]
        %v815 = vld [vmem:[%s328 + $0xb88] sm:$0xff]
        %v816 = vld [vmem:[%s328 + $0xb90] sm:$0xff]
        %v817 = vld [vmem:[%s328 + $0xb98] sm:$0xff]
        %v818 = vld [vmem:[%s328 + $0xba0] sm:$0xff]
        %v819 = vld [vmem:[%s328 + $0xba8] sm:$0xff]
        %v820 = vld [vmem:[%s328 + $0xbb0] sm:$0xff]
        %v821 = vld [vmem:[%s328 + $0xbb8] sm:$0xff]
        %v822 = vld [vmem:[%s328 + $0xbc0] sm:$0xff]
        %v823 = vld [vmem:[%s328 + $0xbc8] sm:$0xff]
        %v824 = vld [vmem:[%s328 + $0xbd0] sm:$0xff]
        %v825 = vld [vmem:[%s328 + $0xbd8] sm:$0xff]
        %v826 = vld [vmem:[%s328 + $0xbe0] sm:$0xff]
        %v827 = vld [vmem:[%s328 + $0xbe8] sm:$0xff]
        %v828 = vld [vmem:[%s328 + $0xbf0] sm:$0xff]
        %v829 = vld [vmem:[%s328 + $0xbf8] sm:$0xff]
        %v830 = vld [vmem:[%s328 + $0xc00] sm:$0xff]
        %v831 = vld [vmem:[%s328 + $0xc08] sm:$0xff]
        %v832 = vld [vmem:[%s328 + $0xc10] sm:$0xff]
        %v833 = vld [vmem:[%s328 + $0xc18] sm:$0xff]
        %v834 = vld [vmem:[%s328 + $0xc20] sm:$0xff]
        %v835 = vld [vmem:[%s328 + $0xc28] sm:$0xff]
        %v836 = vld [vmem:[%s328 + $0xc30] sm:$0xff]
        %v837 = vld [vmem:[%s328 + $0xc38] sm:$0xff]
        %v838 = vld [vmem:[%s328 + $0xc40] sm:$0xff]
        %v839 = vld [vmem:[%s328 + $0xc48] sm:$0xff]
        %v840 = vld [vmem:[%s328 + $0xc50] sm:$0xff]
        %v841 = vld [vmem:[%s328 + $0xc58] sm:$0xff]
        %v842 = vld [vmem:[%s328 + $0xc60] sm:$0xff]
        %v843 = vld [vmem:[%s328 + $0xc68] sm:$0xff]
        %v844 = vld [vmem:[%s328 + $0xc70] sm:$0xff]
        %v845 = vld [vmem:[%s328 + $0xc78] sm:$0xff]
        %v846 = vld [vmem:[%s328 + $0xc80] sm:$0xff]
        %v847 = vld [vmem:[%s328 + $0xc88] sm:$0xff]
        %v848 = vld [vmem:[%s328 + $0xc90] sm:$0xff]
        %v849 = vld [vmem:[%s328 + $0xc98] sm:$0xff]
        %v850 = vld [vmem:[%s328 + $0xca0] sm:$0xff]
        %v851 = vld [vmem:[%s328 + $0xca8] sm:$0xff]
        %v852 = vld [vmem:[%s328 + $0xcb0] sm:$0xff]
        %v853 = vld [vmem:[%s328 + $0xcb8] sm:$0xff]
        %v854 = vld [vmem:[%s328 + $0xcc0] sm:$0xff]
        %v855 = vld [vmem:[%s328 + $0xcc8] sm:$0xff]
        %v856 = vld [vmem:[%s328 + $0xcd0] sm:$0xff]
        %v857 = vld [vmem:[%s328 + $0xcd8] sm:$0xff]
        %v858 = vld [vmem:[%s328 + $0xce0] sm:$0xff]
        %v859 = vld [vmem:[%s328 + $0xce8] sm:$0xff]
        %v860 = vld [vmem:[%s328 + $0xcf0] sm:$0xff]
        %v861 = vld [vmem:[%s328 + $0xcf8] sm:$0xff]
        %v862 = vld [vmem:[%s328 + $0xd00] sm:$0xff]
        %v863 = vld [vmem:[%s328 + $0xd08] sm:$0xff]
        %v864 = vld [vmem:[%s328 + $0xd10] sm:$0xff]
        %v865 = vld [vmem:[%s328 + $0xd18] sm:$0xff]
        %v866 = vld [vmem:[%s328 + $0xd20] sm:$0xff]
        %v867 = vld [vmem:[%s328 + $0xd28] sm:$0xff]
        %v868 = vld [vmem:[%s328 + $0xd30] sm:$0xff]
        %v869 = vld [vmem:[%s328 + $0xd38] sm:$0xff]
        %v870 = vld [vmem:[%s328 + $0xd40] sm:$0xff]
        %v871 = vld [vmem:[%s328 + $0xd48] sm:$0xff]
        %v872 = vld [vmem:[%s328 + $0xd50] sm:$0xff]
        %v873 = vld [vmem:[%s328 + $0xd58] sm:$0xff]
        %v874 = vld [vmem:[%s328 + $0xd60] sm:$0xff]
        %v875 = vld [vmem:[%s328 + $0xd68] sm:$0xff]
        %v876 = vld [vmem:[%s328 + $0xd70] sm:$0xff]
        %v877 = vld [vmem:[%s328 + $0xd78] sm:$0xff]
        %v878 = vld [vmem:[%s328 + $0xd80] sm:$0xff]
        %v879 = vld [vmem:[%s328 + $0xd88] sm:$0xff]
        %v880 = vld [vmem:[%s328 + $0xd90] sm:$0xff]
        %v881 = vld [vmem:[%s328 + $0xd98] sm:$0xff]
        %v882 = vld [vmem:[%s328 + $0xda0] sm:$0xff]
        %v883 = vld [vmem:[%s328 + $0xda8] sm:$0xff]
        %v884 = vld [vmem:[%s328 + $0xdb0] sm:$0xff]
        %v885 = vld [vmem:[%s328 + $0xdb8] sm:$0xff]
        %v886 = vld [vmem:[%s328 + $0xdc0] sm:$0xff]
        %v887 = vld [vmem:[%s328 + $0xdc8] sm:$0xff]
        %v888 = vld [vmem:[%s328 + $0xdd0] sm:$0xff]
        %v889 = vld [vmem:[%s328 + $0xdd8] sm:$0xff]
        %v890 = vld [vmem:[%s328 + $0xde0] sm:$0xff]
        %v891 = vld [vmem:[%s328 + $0xde8] sm:$0xff]
        %v892 = vld [vmem:[%s328 + $0xdf0] sm:$0xff]
        %v893 = vld [vmem:[%s328 + $0xdf8] sm:$0xff]
        %v894 = vld [vmem:[%s328 + $0xe00] sm:$0xff]
        %v895 = vld [vmem:[%s328 + $0xe08] sm:$0xff]
        %v896 = vld [vmem:[%s328 + $0xe10] sm:$0xff]
        %v897 = vld [vmem:[%s328 + $0xe18] sm:$0xff]
        %v898 = vld [vmem:[%s328 + $0xe20] sm:$0xff]
        %v899 = vld [vmem:[%s328 + $0xe28] sm:$0xff]
        %v900 = vld [vmem:[%s328 + $0xe30] sm:$0xff]
        %v901 = vld [vmem:[%s328 + $0xe38] sm:$0xff]
        %v902 = vld [vmem:[%s328 + $0xe40] sm:$0xff]
        %v903 = vld [vmem:[%s328 + $0xe48] sm:$0xff]
        %v904 = vld [vmem:[%s328 + $0xe50] sm:$0xff]
        %v905 = vld [vmem:[%s328 + $0xe58] sm:$0xff]
        %v906 = vld [vmem:[%s328 + $0xe60] sm:$0xff]
        %v907 = vld [vmem:[%s328 + $0xe68] sm:$0xff]
        %v908 = vld [vmem:[%s328 + $0xe70] sm:$0xff]
        %v909 = vld [vmem:[%s328 + $0xe78] sm:$0xff]
        %v910 = vld [vmem:[%s328 + $0xe80] sm:$0xff]
        %v911 = vld [vmem:[%s328 + $0xe88] sm:$0xff]
        %v912 = vld [vmem:[%s328 + $0xe90] sm:$0xff]
        %v913 = vld [vmem:[%s328 + $0xe98] sm:$0xff]
        %v914 = vld [vmem:[%s328 + $0xea0] sm:$0xff]
        %v915 = vld [vmem:[%s328 + $0xea8] sm:$0xff]
        %v916 = vld [vmem:[%s328 + $0xeb0] sm:$0xff]
        %v917 = vld [vmem:[%s328 + $0xeb8] sm:$0xff]
        %v918 = vld [vmem:[%s328 + $0xec0] sm:$0xff]
        %v919 = vld [vmem:[%s328 + $0xec8] sm:$0xff]
        %v920 = vld [vmem:[%s328 + $0xed0] sm:$0xff]
        %v921 = vld [vmem:[%s328 + $0xed8] sm:$0xff]
        %v922 = vld [vmem:[%s328 + $0xee0] sm:$0xff]
        %v923 = vld [vmem:[%s328 + $0xee8] sm:$0xff]
        %v924 = vld [vmem:[%s328 + $0xef0] sm:$0xff]
        %v925 = vld [vmem:[%s328 + $0xef8] sm:$0xff]
        %v926 = vld [vmem:[%s328 + $0xf00] sm:$0xff]
        %v927 = vld [vmem:[%s328 + $0xf08] sm:$0xff]
        %v928 = vld [vmem:[%s328 + $0xf10] sm:$0xff]
        %v929 = vld [vmem:[%s328 + $0xf18] sm:$0xff]
        %v930 = vld [vmem:[%s328 + $0xf20] sm:$0xff]
        %v931 = vld [vmem:[%s328 + $0xf28] sm:$0xff]
        %v932 = vld [vmem:[%s328 + $0xf30] sm:$0xff]
        %v933 = vld [vmem:[%s328 + $0xf38] sm:$0xff]
        %v934 = vld [vmem:[%s328 + $0xf40] sm:$0xff]
        %v935 = vld [vmem:[%s328 + $0xf48] sm:$0xff]
        %v936 = vld [vmem:[%s328 + $0xf50] sm:$0xff]
        %v937 = vld [vmem:[%s328 + $0xf58] sm:$0xff]
        %v938 = vld [vmem:[%s328 + $0xf60] sm:$0xff]
        %v939 = vld [vmem:[%s328 + $0xf68] sm:$0xff]
        %v940 = vld [vmem:[%s328 + $0xf70] sm:$0xff]
        %v941 = vld [vmem:[%s328 + $0xf78] sm:$0xff]
        %v942 = vld [vmem:[%s328 + $0xf80] sm:$0xff]
        %v943 = vld [vmem:[%s328 + $0xf88] sm:$0xff]
        %v944 = vld [vmem:[%s328 + $0xf90] sm:$0xff]
        %v945 = vld [vmem:[%s328 + $0xf98] sm:$0xff]
        %v946 = vld [vmem:[%s328 + $0xfa0] sm:$0xff]
        %v947 = vld [vmem:[%s328 + $0xfa8] sm:$0xff]
        %v948 = vld [vmem:[%s328 + $0xfb0] sm:$0xff]
        %v949 = vld [vmem:[%s328 + $0xfb8] sm:$0xff]
        %v950 = vld [vmem:[%s328 + $0xfc0] sm:$0xff]
        %v951 = vld [vmem:[%s328 + $0xfc8] sm:$0xff]
        %v952 = vld [vmem:[%s328 + $0xfd0] sm:$0xff]
        %v953 = vld [vmem:[%s328 + $0xfd8] sm:$0xff]
        %v954 = vld [vmem:[%s328 + $0xfe0] sm:$0xff]
        %v955 = vld [vmem:[%s328 + $0xfe8] sm:$0xff]
        %v956 = vld [vmem:[%s328 + $0xff0] sm:$0xff]
        %v957 = vld [vmem:[%s328 + $0xff8] sm:$0xff]
        %v990 = vunpack.c.l.b16 %v414
        %v991 = vunpack.c.h.b16 %v414
        %v992 = vunpack.c.l.b16 %v415
        %v993 = vunpack.c.h.b16 %v415
        %v994 = vunpack.c.l.b16 %v416
        %v995 = vunpack.c.h.b16 %v416
        %v996 = vunpack.c.l.b16 %v417
        %v997 = vunpack.c.h.b16 %v417
        %v998 = vunpack.c.l.b16 %v418
        %v999 = vunpack.c.h.b16 %v418
        %v1000 = vunpack.c.l.b16 %v419
        %v1001 = vunpack.c.h.b16 %v419
        %v1002 = vunpack.c.l.b16 %v420
        %v1003 = vunpack.c.h.b16 %v420
        %v1004 = vunpack.c.l.b16 %v421
        %v1005 = vunpack.c.h.b16 %v421
        %v1006 = vunpack.c.l.b16 %v422
        %v1007 = vunpack.c.h.b16 %v422
        %v1008 = vunpack.c.l.b16 %v423
        %v1009 = vunpack.c.h.b16 %v423
        %v1010 = vunpack.c.l.b16 %v424
        %v1011 = vunpack.c.h.b16 %v424
        %v1012 = vunpack.c.l.b16 %v425
        %v1013 = vunpack.c.h.b16 %v425
        %v1014 = vunpack.c.l.b16 %v426
        %v1015 = vunpack.c.h.b16 %v426
        %v1016 = vunpack.c.l.b16 %v427
        %v1017 = vunpack.c.h.b16 %v427
        %v1018 = vunpack.c.l.b16 %v428
        %v1019 = vunpack.c.h.b16 %v428
        %v1020 = vunpack.c.l.b16 %v429
        %v1021 = vunpack.c.h.b16 %v429
        %v1022 = vunpack.c.l.b16 %v430
        %v1023 = vunpack.c.h.b16 %v430
        %v1024 = vunpack.c.l.b16 %v431
        %v1025 = vunpack.c.h.b16 %v431
        %v1026 = vunpack.c.l.b16 %v432
        %v1027 = vunpack.c.h.b16 %v432
        %v1028 = vunpack.c.l.b16 %v433
        %v1029 = vunpack.c.h.b16 %v433
        %v1030 = vunpack.c.l.b16 %v434
        %v1031 = vunpack.c.h.b16 %v434
        %v1032 = vunpack.c.l.b16 %v435
        %v1033 = vunpack.c.h.b16 %v435
        %v1034 = vunpack.c.l.b16 %v436
        %v1035 = vunpack.c.h.b16 %v436
        %v1036 = vunpack.c.l.b16 %v437
        %v1037 = vunpack.c.h.b16 %v437
        %v1038 = vunpack.c.l.b16 %v438
        %v1039 = vunpack.c.h.b16 %v438
        %v1040 = vunpack.c.l.b16 %v439
        %v1041 = vunpack.c.h.b16 %v439
        %v1042 = vunpack.c.l.b16 %v440
        %v1043 = vunpack.c.h.b16 %v440
        %v1044 = vunpack.c.l.b16 %v441
        %v1045 = vunpack.c.h.b16 %v441
        %v1046 = vunpack.c.l.b16 %v442
        %v1047 = vunpack.c.h.b16 %v442
        %v1048 = vunpack.c.l.b16 %v443
        %v1049 = vunpack.c.h.b16 %v443
        %v1050 = vunpack.c.l.b16 %v444
        %v1051 = vunpack.c.h.b16 %v444
        %v1052 = vunpack.c.l.b16 %v445
        %v1053 = vunpack.c.h.b16 %v445
        %v1054 = vpack.c.b16 %v1006, %v990
        %v1055 = vpack.c.b16 %v1007, %v991
        %v1056 = vpack.c.b16 %v1008, %v992
        %v1057 = vpack.c.b16 %v1009, %v993
        %v1058 = vpack.c.b16 %v1010, %v994
        %v1059 = vpack.c.b16 %v1011, %v995
        %v1060 = vpack.c.b16 %v1012, %v996
        %v1061 = vpack.c.b16 %v1013, %v997
        %v1062 = vpack.c.b16 %v1014, %v998
        %v1063 = vpack.c.b16 %v1015, %v999
        %v1064 = vpack.c.b16 %v1016, %v1000
        %v1065 = vpack.c.b16 %v1017, %v1001
        %v1066 = vpack.c.b16 %v1018, %v1002
        %v1067 = vpack.c.b16 %v1019, %v1003
        %v1068 = vpack.c.b16 %v1020, %v1004
        %v1069 = vpack.c.b16 %v1021, %v1005
        %v1070 = vpack.c.b16 %v1038, %v1022
        %v1071 = vpack.c.b16 %v1039, %v1023
        %v1072 = vpack.c.b16 %v1040, %v1024
        %v1073 = vpack.c.b16 %v1041, %v1025
        %v1074 = vpack.c.b16 %v1042, %v1026
        %v1075 = vpack.c.b16 %v1043, %v1027
        %v1076 = vpack.c.b16 %v1044, %v1028
        %v1077 = vpack.c.b16 %v1045, %v1029
        %v1078 = vpack.c.b16 %v1046, %v1030
        %v1079 = vpack.c.b16 %v1047, %v1031
        %v1080 = vpack.c.b16 %v1048, %v1032
        %v1081 = vpack.c.b16 %v1049, %v1033
        %v1082 = vpack.c.b16 %v1050, %v1034
        %v1083 = vpack.c.b16 %v1051, %v1035
        %v1084 = vpack.c.b16 %v1052, %v1036
        %v1085 = vpack.c.b16 %v1053, %v1037
        %v1630 = vunpack.c.l.b16 %v446
        %v1631 = vunpack.c.h.b16 %v446
        %v1632 = vunpack.c.l.b16 %v447
        %v1633 = vunpack.c.h.b16 %v447
        %v1634 = vunpack.c.l.b16 %v448
        %v1635 = vunpack.c.h.b16 %v448
        %v1636 = vunpack.c.l.b16 %v449
        %v1637 = vunpack.c.h.b16 %v449
        %v1638 = vunpack.c.l.b16 %v450
        %v1639 = vunpack.c.h.b16 %v450
        %v1640 = vunpack.c.l.b16 %v451
        %v1641 = vunpack.c.h.b16 %v451
        %v1642 = vunpack.c.l.b16 %v452
        %v1643 = vunpack.c.h.b16 %v452
        %v1644 = vunpack.c.l.b16 %v453
        %v1645 = vunpack.c.h.b16 %v453
        %v1646 = vunpack.c.l.b16 %v454
        %v1647 = vunpack.c.h.b16 %v454
        %v1648 = vunpack.c.l.b16 %v455
        %v1649 = vunpack.c.h.b16 %v455
        %v1650 = vunpack.c.l.b16 %v456
        %v1651 = vunpack.c.h.b16 %v456
        %v1652 = vunpack.c.l.b16 %v457
        %v1653 = vunpack.c.h.b16 %v457
        %v1654 = vunpack.c.l.b16 %v458
        %v1655 = vunpack.c.h.b16 %v458
        %v1656 = vunpack.c.l.b16 %v459
        %v1657 = vunpack.c.h.b16 %v459
        %v1658 = vunpack.c.l.b16 %v460
        %v1659 = vunpack.c.h.b16 %v460
        %v1660 = vunpack.c.l.b16 %v461
        %v1661 = vunpack.c.h.b16 %v461
        %v1662 = vunpack.c.l.b16 %v462
        %v1663 = vunpack.c.h.b16 %v462
        %v1664 = vunpack.c.l.b16 %v463
        %v1665 = vunpack.c.h.b16 %v463
        %v1666 = vunpack.c.l.b16 %v464
        %v1667 = vunpack.c.h.b16 %v464
        %v1668 = vunpack.c.l.b16 %v465
        %v1669 = vunpack.c.h.b16 %v465
        %v1670 = vunpack.c.l.b16 %v466
        %v1671 = vunpack.c.h.b16 %v466
        %v1672 = vunpack.c.l.b16 %v467
        %v1673 = vunpack.c.h.b16 %v467
        %v1674 = vunpack.c.l.b16 %v468
        %v1675 = vunpack.c.h.b16 %v468
        %v1676 = vunpack.c.l.b16 %v469
        %v1677 = vunpack.c.h.b16 %v469
        %v1678 = vunpack.c.l.b16 %v470
        %v1679 = vunpack.c.h.b16 %v470
        %v1680 = vunpack.c.l.b16 %v471
        %v1681 = vunpack.c.h.b16 %v471
        %v1682 = vunpack.c.l.b16 %v472
        %v1683 = vunpack.c.h.b16 %v472
        %v1684 = vunpack.c.l.b16 %v473
        %v1685 = vunpack.c.h.b16 %v473
        %v1686 = vunpack.c.l.b16 %v474
        %v1687 = vunpack.c.h.b16 %v474
        %v1688 = vunpack.c.l.b16 %v475
        %v1689 = vunpack.c.h.b16 %v475
        %v1690 = vunpack.c.l.b16 %v476
        %v1691 = vunpack.c.h.b16 %v476
        %v1692 = vunpack.c.l.b16 %v477
        %v1693 = vunpack.c.h.b16 %v477
        %v1694 = vunpack.c.l.b16 %v478
        %v1695 = vunpack.c.h.b16 %v478
        %v1696 = vunpack.c.l.b16 %v479
        %v1697 = vunpack.c.h.b16 %v479
        %v1698 = vunpack.c.l.b16 %v480
        %v1699 = vunpack.c.h.b16 %v480
        %v1700 = vunpack.c.l.b16 %v481
        %v1701 = vunpack.c.h.b16 %v481
        %v1702 = vunpack.c.l.b16 %v482
        %v1703 = vunpack.c.h.b16 %v482
        %v1704 = vunpack.c.l.b16 %v483
        %v1705 = vunpack.c.h.b16 %v483
        %v1706 = vunpack.c.l.b16 %v484
        %v1707 = vunpack.c.h.b16 %v484
        %v1708 = vunpack.c.l.b16 %v485
        %v1709 = vunpack.c.h.b16 %v485
        %v1710 = vunpack.c.l.b16 %v486
        %v1711 = vunpack.c.h.b16 %v486
        %v1712 = vunpack.c.l.b16 %v487
        %v1713 = vunpack.c.h.b16 %v487
        %v1714 = vunpack.c.l.b16 %v488
        %v1715 = vunpack.c.h.b16 %v488
        %v1716 = vunpack.c.l.b16 %v489
        %v1717 = vunpack.c.h.b16 %v489
        %v1718 = vunpack.c.l.b16 %v490
        %v1719 = vunpack.c.h.b16 %v490
        %v1720 = vunpack.c.l.b16 %v491
        %v1721 = vunpack.c.h.b16 %v491
        %v1722 = vunpack.c.l.b16 %v492
        %v1723 = vunpack.c.h.b16 %v492
        %v1724 = vunpack.c.l.b16 %v493
        %v1725 = vunpack.c.h.b16 %v493
        %v1726 = vunpack.c.l.b16 %v494
        %v1727 = vunpack.c.h.b16 %v494
        %v1728 = vunpack.c.l.b16 %v495
        %v1729 = vunpack.c.h.b16 %v495
        %v1730 = vunpack.c.l.b16 %v496
        %v1731 = vunpack.c.h.b16 %v496
        %v1732 = vunpack.c.l.b16 %v497
        %v1733 = vunpack.c.h.b16 %v497
        %v1734 = vunpack.c.l.b16 %v498
        %v1735 = vunpack.c.h.b16 %v498
        %v1736 = vunpack.c.l.b16 %v499
        %v1737 = vunpack.c.h.b16 %v499
        %v1738 = vunpack.c.l.b16 %v500
        %v1739 = vunpack.c.h.b16 %v500
        %v1740 = vunpack.c.l.b16 %v501
        %v1741 = vunpack.c.h.b16 %v501
        %v1742 = vunpack.c.l.b16 %v502
        %v1743 = vunpack.c.h.b16 %v502
        %v1744 = vunpack.c.l.b16 %v503
        %v1745 = vunpack.c.h.b16 %v503
        %v1746 = vunpack.c.l.b16 %v504
        %v1747 = vunpack.c.h.b16 %v504
        %v1748 = vunpack.c.l.b16 %v505
        %v1749 = vunpack.c.h.b16 %v505
        %v1750 = vunpack.c.l.b16 %v506
        %v1751 = vunpack.c.h.b16 %v506
        %v1752 = vunpack.c.l.b16 %v507
        %v1753 = vunpack.c.h.b16 %v507
        %v1754 = vunpack.c.l.b16 %v508
        %v1755 = vunpack.c.h.b16 %v508
        %v1756 = vunpack.c.l.b16 %v509
        %v1757 = vunpack.c.h.b16 %v509
        %v1758 = vunpack.c.l.b16 %v510
        %v1759 = vunpack.c.h.b16 %v510
        %v1760 = vunpack.c.l.b16 %v511
        %v1761 = vunpack.c.h.b16 %v511
        %v1762 = vunpack.c.l.b16 %v512
        %v1763 = vunpack.c.h.b16 %v512
        %v1764 = vunpack.c.l.b16 %v513
        %v1765 = vunpack.c.h.b16 %v513
        %v1766 = vunpack.c.l.b16 %v514
        %v1767 = vunpack.c.h.b16 %v514
        %v1768 = vunpack.c.l.b16 %v515
        %v1769 = vunpack.c.h.b16 %v515
        %v1770 = vunpack.c.l.b16 %v516
        %v1771 = vunpack.c.h.b16 %v516
        %v1772 = vunpack.c.l.b16 %v517
        %v1773 = vunpack.c.h.b16 %v517
        %v1774 = vunpack.c.l.b16 %v518
        %v1775 = vunpack.c.h.b16 %v518
        %v1776 = vunpack.c.l.b16 %v519
        %v1777 = vunpack.c.h.b16 %v519
        %v1778 = vunpack.c.l.b16 %v520
        %v1779 = vunpack.c.h.b16 %v520
        %v1780 = vunpack.c.l.b16 %v521
        %v1781 = vunpack.c.h.b16 %v521
        %v1782 = vunpack.c.l.b16 %v522
        %v1783 = vunpack.c.h.b16 %v522
        %v1784 = vunpack.c.l.b16 %v523
        %v1785 = vunpack.c.h.b16 %v523
        %v1786 = vunpack.c.l.b16 %v524
        %v1787 = vunpack.c.h.b16 %v524
        %v1788 = vunpack.c.l.b16 %v525
        %v1789 = vunpack.c.h.b16 %v525
        %v1790 = vunpack.c.l.b16 %v526
        %v1791 = vunpack.c.h.b16 %v526
        %v1792 = vunpack.c.l.b16 %v527
        %v1793 = vunpack.c.h.b16 %v527
        %v1794 = vunpack.c.l.b16 %v528
        %v1795 = vunpack.c.h.b16 %v528
        %v1796 = vunpack.c.l.b16 %v529
        %v1797 = vunpack.c.h.b16 %v529
        %v1798 = vunpack.c.l.b16 %v530
        %v1799 = vunpack.c.h.b16 %v530
        %v1800 = vunpack.c.l.b16 %v531
        %v1801 = vunpack.c.h.b16 %v531
        %v1802 = vunpack.c.l.b16 %v532
        %v1803 = vunpack.c.h.b16 %v532
        %v1804 = vunpack.c.l.b16 %v533
        %v1805 = vunpack.c.h.b16 %v533
        %v1806 = vunpack.c.l.b16 %v534
        %v1807 = vunpack.c.h.b16 %v534
        %v1808 = vunpack.c.l.b16 %v535
        %v1809 = vunpack.c.h.b16 %v535
        %v1810 = vunpack.c.l.b16 %v536
        %v1811 = vunpack.c.h.b16 %v536
        %v1812 = vunpack.c.l.b16 %v537
        %v1813 = vunpack.c.h.b16 %v537
        %v1814 = vunpack.c.l.b16 %v538
        %v1815 = vunpack.c.h.b16 %v538
        %v1816 = vunpack.c.l.b16 %v539
        %v1817 = vunpack.c.h.b16 %v539
        %v1818 = vunpack.c.l.b16 %v540
        %v1819 = vunpack.c.h.b16 %v540
        %v1820 = vunpack.c.l.b16 %v541
        %v1821 = vunpack.c.h.b16 %v541
        %v1822 = vunpack.c.l.b16 %v542
        %v1823 = vunpack.c.h.b16 %v542
        %v1824 = vunpack.c.l.b16 %v543
        %v1825 = vunpack.c.h.b16 %v543
        %v1826 = vunpack.c.l.b16 %v544
        %v1827 = vunpack.c.h.b16 %v544
        %v1828 = vunpack.c.l.b16 %v545
        %v1829 = vunpack.c.h.b16 %v545
        %v1830 = vunpack.c.l.b16 %v546
        %v1831 = vunpack.c.h.b16 %v546
        %v1832 = vunpack.c.l.b16 %v547
        %v1833 = vunpack.c.h.b16 %v547
        %v1834 = vunpack.c.l.b16 %v548
        %v1835 = vunpack.c.h.b16 %v548
        %v1836 = vunpack.c.l.b16 %v549
        %v1837 = vunpack.c.h.b16 %v549
        %v1838 = vunpack.c.l.b16 %v550
        %v1839 = vunpack.c.h.b16 %v550
        %v1840 = vunpack.c.l.b16 %v551
        %v1841 = vunpack.c.h.b16 %v551
        %v1842 = vunpack.c.l.b16 %v552
        %v1843 = vunpack.c.h.b16 %v552
        %v1844 = vunpack.c.l.b16 %v553
        %v1845 = vunpack.c.h.b16 %v553
        %v1846 = vunpack.c.l.b16 %v554
        %v1847 = vunpack.c.h.b16 %v554
        %v1848 = vunpack.c.l.b16 %v555
        %v1849 = vunpack.c.h.b16 %v555
        %v1850 = vunpack.c.l.b16 %v556
        %v1851 = vunpack.c.h.b16 %v556
        %v1852 = vunpack.c.l.b16 %v557
        %v1853 = vunpack.c.h.b16 %v557
        %v1854 = vunpack.c.l.b16 %v558
        %v1855 = vunpack.c.h.b16 %v558
        %v1856 = vunpack.c.l.b16 %v559
        %v1857 = vunpack.c.h.b16 %v559
        %v1858 = vunpack.c.l.b16 %v560
        %v1859 = vunpack.c.h.b16 %v560
        %v1860 = vunpack.c.l.b16 %v561
        %v1861 = vunpack.c.h.b16 %v561
        %v1862 = vunpack.c.l.b16 %v562
        %v1863 = vunpack.c.h.b16 %v562
        %v1864 = vunpack.c.l.b16 %v563
        %v1865 = vunpack.c.h.b16 %v563
        %v1866 = vunpack.c.l.b16 %v564
        %v1867 = vunpack.c.h.b16 %v564
        %v1868 = vunpack.c.l.b16 %v565
        %v1869 = vunpack.c.h.b16 %v565
        %v1870 = vunpack.c.l.b16 %v566
        %v1871 = vunpack.c.h.b16 %v566
        %v1872 = vunpack.c.l.b16 %v567
        %v1873 = vunpack.c.h.b16 %v567
        %v1874 = vunpack.c.l.b16 %v568
        %v1875 = vunpack.c.h.b16 %v568
        %v1876 = vunpack.c.l.b16 %v569
        %v1877 = vunpack.c.h.b16 %v569
        %v1878 = vunpack.c.l.b16 %v570
        %v1879 = vunpack.c.h.b16 %v570
        %v1880 = vunpack.c.l.b16 %v571
        %v1881 = vunpack.c.h.b16 %v571
        %v1882 = vunpack.c.l.b16 %v572
        %v1883 = vunpack.c.h.b16 %v572
        %v1884 = vunpack.c.l.b16 %v573
        %v1885 = vunpack.c.h.b16 %v573
        %v1886 = vunpack.c.l.b16 %v574
        %v1887 = vunpack.c.h.b16 %v574
        %v1888 = vunpack.c.l.b16 %v575
        %v1889 = vunpack.c.h.b16 %v575
        %v1890 = vunpack.c.l.b16 %v576
        %v1891 = vunpack.c.h.b16 %v576
        %v1892 = vunpack.c.l.b16 %v577
        %v1893 = vunpack.c.h.b16 %v577
        %v1894 = vunpack.c.l.b16 %v578
        %v1895 = vunpack.c.h.b16 %v578
        %v1896 = vunpack.c.l.b16 %v579
        %v1897 = vunpack.c.h.b16 %v579
        %v1898 = vunpack.c.l.b16 %v580
        %v1899 = vunpack.c.h.b16 %v580
        %v1900 = vunpack.c.l.b16 %v581
        %v1901 = vunpack.c.h.b16 %v581
        %v1902 = vunpack.c.l.b16 %v582
        %v1903 = vunpack.c.h.b16 %v582
        %v1904 = vunpack.c.l.b16 %v583
        %v1905 = vunpack.c.h.b16 %v583
        %v1906 = vunpack.c.l.b16 %v584
        %v1907 = vunpack.c.h.b16 %v584
        %v1908 = vunpack.c.l.b16 %v585
        %v1909 = vunpack.c.h.b16 %v585
        %v1910 = vunpack.c.l.b16 %v586
        %v1911 = vunpack.c.h.b16 %v586
        %v1912 = vunpack.c.l.b16 %v587
        %v1913 = vunpack.c.h.b16 %v587
        %v1914 = vunpack.c.l.b16 %v588
        %v1915 = vunpack.c.h.b16 %v588
        %v1916 = vunpack.c.l.b16 %v589
        %v1917 = vunpack.c.h.b16 %v589
        %v1918 = vunpack.c.l.b16 %v590
        %v1919 = vunpack.c.h.b16 %v590
        %v1920 = vunpack.c.l.b16 %v591
        %v1921 = vunpack.c.h.b16 %v591
        %v1922 = vunpack.c.l.b16 %v592
        %v1923 = vunpack.c.h.b16 %v592
        %v1924 = vunpack.c.l.b16 %v593
        %v1925 = vunpack.c.h.b16 %v593
        %v1926 = vunpack.c.l.b16 %v594
        %v1927 = vunpack.c.h.b16 %v594
        %v1928 = vunpack.c.l.b16 %v595
        %v1929 = vunpack.c.h.b16 %v595
        %v1930 = vunpack.c.l.b16 %v596
        %v1931 = vunpack.c.h.b16 %v596
        %v1932 = vunpack.c.l.b16 %v597
        %v1933 = vunpack.c.h.b16 %v597
        %v1934 = vunpack.c.l.b16 %v598
        %v1935 = vunpack.c.h.b16 %v598
        %v1936 = vunpack.c.l.b16 %v599
        %v1937 = vunpack.c.h.b16 %v599
        %v1938 = vunpack.c.l.b16 %v600
        %v1939 = vunpack.c.h.b16 %v600
        %v1940 = vunpack.c.l.b16 %v601
        %v1941 = vunpack.c.h.b16 %v601
        %v1942 = vunpack.c.l.b16 %v602
        %v1943 = vunpack.c.h.b16 %v602
        %v1944 = vunpack.c.l.b16 %v603
        %v1945 = vunpack.c.h.b16 %v603
        %v1946 = vunpack.c.l.b16 %v604
        %v1947 = vunpack.c.h.b16 %v604
        %v1948 = vunpack.c.l.b16 %v605
        %v1949 = vunpack.c.h.b16 %v605
        %v1950 = vunpack.c.l.b16 %v606
        %v1951 = vunpack.c.h.b16 %v606
        %v1952 = vunpack.c.l.b16 %v607
        %v1953 = vunpack.c.h.b16 %v607
        %v1954 = vunpack.c.l.b16 %v608
        %v1955 = vunpack.c.h.b16 %v608
        %v1956 = vunpack.c.l.b16 %v609
        %v1957 = vunpack.c.h.b16 %v609
        %v1958 = vunpack.c.l.b16 %v610
        %v1959 = vunpack.c.h.b16 %v610
        %v1960 = vunpack.c.l.b16 %v611
        %v1961 = vunpack.c.h.b16 %v611
        %v1962 = vunpack.c.l.b16 %v612
        %v1963 = vunpack.c.h.b16 %v612
        %v1964 = vunpack.c.l.b16 %v613
        %v1965 = vunpack.c.h.b16 %v613
        %v1966 = vunpack.c.l.b16 %v614
        %v1967 = vunpack.c.h.b16 %v614
        %v1968 = vunpack.c.l.b16 %v615
        %v1969 = vunpack.c.h.b16 %v615
        %v1970 = vunpack.c.l.b16 %v616
        %v1971 = vunpack.c.h.b16 %v616
        %v1972 = vunpack.c.l.b16 %v617
        %v1973 = vunpack.c.h.b16 %v617
        %v1974 = vunpack.c.l.b16 %v618
        %v1975 = vunpack.c.h.b16 %v618
        %v1976 = vunpack.c.l.b16 %v619
        %v1977 = vunpack.c.h.b16 %v619
        %v1978 = vunpack.c.l.b16 %v620
        %v1979 = vunpack.c.h.b16 %v620
        %v1980 = vunpack.c.l.b16 %v621
        %v1981 = vunpack.c.h.b16 %v621
        %v1982 = vunpack.c.l.b16 %v622
        %v1983 = vunpack.c.h.b16 %v622
        %v1984 = vunpack.c.l.b16 %v623
        %v1985 = vunpack.c.h.b16 %v623
        %v1986 = vunpack.c.l.b16 %v624
        %v1987 = vunpack.c.h.b16 %v624
        %v1988 = vunpack.c.l.b16 %v625
        %v1989 = vunpack.c.h.b16 %v625
        %v1990 = vunpack.c.l.b16 %v626
        %v1991 = vunpack.c.h.b16 %v626
        %v1992 = vunpack.c.l.b16 %v627
        %v1993 = vunpack.c.h.b16 %v627
        %v1994 = vunpack.c.l.b16 %v628
        %v1995 = vunpack.c.h.b16 %v628
        %v1996 = vunpack.c.l.b16 %v629
        %v1997 = vunpack.c.h.b16 %v629
        %v1998 = vunpack.c.l.b16 %v630
        %v1999 = vunpack.c.h.b16 %v630
        %v2000 = vunpack.c.l.b16 %v631
        %v2001 = vunpack.c.h.b16 %v631
        %v2002 = vunpack.c.l.b16 %v632
        %v2003 = vunpack.c.h.b16 %v632
        %v2004 = vunpack.c.l.b16 %v633
        %v2005 = vunpack.c.h.b16 %v633
        %v2006 = vunpack.c.l.b16 %v634
        %v2007 = vunpack.c.h.b16 %v634
        %v2008 = vunpack.c.l.b16 %v635
        %v2009 = vunpack.c.h.b16 %v635
        %v2010 = vunpack.c.l.b16 %v636
        %v2011 = vunpack.c.h.b16 %v636
        %v2012 = vunpack.c.l.b16 %v637
        %v2013 = vunpack.c.h.b16 %v637
        %v2014 = vunpack.c.l.b16 %v638
        %v2015 = vunpack.c.h.b16 %v638
        %v2016 = vunpack.c.l.b16 %v639
        %v2017 = vunpack.c.h.b16 %v639
        %v2018 = vunpack.c.l.b16 %v640
        %v2019 = vunpack.c.h.b16 %v640
        %v2020 = vunpack.c.l.b16 %v641
        %v2021 = vunpack.c.h.b16 %v641
        %v2022 = vunpack.c.l.b16 %v642
        %v2023 = vunpack.c.h.b16 %v642
        %v2024 = vunpack.c.l.b16 %v643
        %v2025 = vunpack.c.h.b16 %v643
        %v2026 = vunpack.c.l.b16 %v644
        %v2027 = vunpack.c.h.b16 %v644
        %v2028 = vunpack.c.l.b16 %v645
        %v2029 = vunpack.c.h.b16 %v645
        %v2030 = vunpack.c.l.b16 %v646
        %v2031 = vunpack.c.h.b16 %v646
        %v2032 = vunpack.c.l.b16 %v647
        %v2033 = vunpack.c.h.b16 %v647
        %v2034 = vunpack.c.l.b16 %v648
        %v2035 = vunpack.c.h.b16 %v648
        %v2036 = vunpack.c.l.b16 %v649
        %v2037 = vunpack.c.h.b16 %v649
        %v2038 = vunpack.c.l.b16 %v650
        %v2039 = vunpack.c.h.b16 %v650
        %v2040 = vunpack.c.l.b16 %v651
        %v2041 = vunpack.c.h.b16 %v651
        %v2042 = vunpack.c.l.b16 %v652
        %v2043 = vunpack.c.h.b16 %v652
        %v2044 = vunpack.c.l.b16 %v653
        %v2045 = vunpack.c.h.b16 %v653
        %v2046 = vunpack.c.l.b16 %v654
        %v2047 = vunpack.c.h.b16 %v654
        %v2048 = vunpack.c.l.b16 %v655
        %v2049 = vunpack.c.h.b16 %v655
        %v2050 = vunpack.c.l.b16 %v656
        %v2051 = vunpack.c.h.b16 %v656
        %v2052 = vunpack.c.l.b16 %v657
        %v2053 = vunpack.c.h.b16 %v657
        %v2054 = vunpack.c.l.b16 %v658
        %v2055 = vunpack.c.h.b16 %v658
        %v2056 = vunpack.c.l.b16 %v659
        %v2057 = vunpack.c.h.b16 %v659
        %v2058 = vunpack.c.l.b16 %v660
        %v2059 = vunpack.c.h.b16 %v660
        %v2060 = vunpack.c.l.b16 %v661
        %v2061 = vunpack.c.h.b16 %v661
        %v2062 = vunpack.c.l.b16 %v662
        %v2063 = vunpack.c.h.b16 %v662
        %v2064 = vunpack.c.l.b16 %v663
        %v2065 = vunpack.c.h.b16 %v663
        %v2066 = vunpack.c.l.b16 %v664
        %v2067 = vunpack.c.h.b16 %v664
        %v2068 = vunpack.c.l.b16 %v665
        %v2069 = vunpack.c.h.b16 %v665
        %v2070 = vunpack.c.l.b16 %v666
        %v2071 = vunpack.c.h.b16 %v666
        %v2072 = vunpack.c.l.b16 %v667
        %v2073 = vunpack.c.h.b16 %v667
        %v2074 = vunpack.c.l.b16 %v668
        %v2075 = vunpack.c.h.b16 %v668
        %v2076 = vunpack.c.l.b16 %v669
        %v2077 = vunpack.c.h.b16 %v669
        %v2078 = vunpack.c.l.b16 %v670
        %v2079 = vunpack.c.h.b16 %v670
        %v2080 = vunpack.c.l.b16 %v671
        %v2081 = vunpack.c.h.b16 %v671
        %v2082 = vunpack.c.l.b16 %v672
        %v2083 = vunpack.c.h.b16 %v672
        %v2084 = vunpack.c.l.b16 %v673
        %v2085 = vunpack.c.h.b16 %v673
        %v2086 = vunpack.c.l.b16 %v674
        %v2087 = vunpack.c.h.b16 %v674
        %v2088 = vunpack.c.l.b16 %v675
        %v2089 = vunpack.c.h.b16 %v675
        %v2090 = vunpack.c.l.b16 %v676
        %v2091 = vunpack.c.h.b16 %v676
        %v2092 = vunpack.c.l.b16 %v677
        %v2093 = vunpack.c.h.b16 %v677
        %v2094 = vunpack.c.l.b16 %v678
        %v2095 = vunpack.c.h.b16 %v678
        %v2096 = vunpack.c.l.b16 %v679
        %v2097 = vunpack.c.h.b16 %v679
        %v2098 = vunpack.c.l.b16 %v680
        %v2099 = vunpack.c.h.b16 %v680
        %v2100 = vunpack.c.l.b16 %v681
        %v2101 = vunpack.c.h.b16 %v681
        %v2102 = vunpack.c.l.b16 %v682
        %v2103 = vunpack.c.h.b16 %v682
        %v2104 = vunpack.c.l.b16 %v683
        %v2105 = vunpack.c.h.b16 %v683
        %v2106 = vunpack.c.l.b16 %v684
        %v2107 = vunpack.c.h.b16 %v684
        %v2108 = vunpack.c.l.b16 %v685
        %v2109 = vunpack.c.h.b16 %v685
        %v2110 = vunpack.c.l.b16 %v686
        %v2111 = vunpack.c.h.b16 %v686
        %v2112 = vunpack.c.l.b16 %v687
        %v2113 = vunpack.c.h.b16 %v687
        %v2114 = vunpack.c.l.b16 %v688
        %v2115 = vunpack.c.h.b16 %v688
        %v2116 = vunpack.c.l.b16 %v689
        %v2117 = vunpack.c.h.b16 %v689
        %v2118 = vunpack.c.l.b16 %v690
        %v2119 = vunpack.c.h.b16 %v690
        %v2120 = vunpack.c.l.b16 %v691
        %v2121 = vunpack.c.h.b16 %v691
        %v2122 = vunpack.c.l.b16 %v692
        %v2123 = vunpack.c.h.b16 %v692
        %v2124 = vunpack.c.l.b16 %v693
        %v2125 = vunpack.c.h.b16 %v693
        %v2126 = vunpack.c.l.b16 %v694
        %v2127 = vunpack.c.h.b16 %v694
        %v2128 = vunpack.c.l.b16 %v695
        %v2129 = vunpack.c.h.b16 %v695
        %v2130 = vunpack.c.l.b16 %v696
        %v2131 = vunpack.c.h.b16 %v696
        %v2132 = vunpack.c.l.b16 %v697
        %v2133 = vunpack.c.h.b16 %v697
        %v2134 = vunpack.c.l.b16 %v698
        %v2135 = vunpack.c.h.b16 %v698
        %v2136 = vunpack.c.l.b16 %v699
        %v2137 = vunpack.c.h.b16 %v699
        %v2138 = vunpack.c.l.b16 %v700
        %v2139 = vunpack.c.h.b16 %v700
        %v2140 = vunpack.c.l.b16 %v701
        %v2141 = vunpack.c.h.b16 %v701
        %v2142 = vunpack.c.l.b16 %v702
        %v2143 = vunpack.c.h.b16 %v702
        %v2144 = vunpack.c.l.b16 %v703
        %v2145 = vunpack.c.h.b16 %v703
        %v2146 = vunpack.c.l.b16 %v704
        %v2147 = vunpack.c.h.b16 %v704
        %v2148 = vunpack.c.l.b16 %v705
        %v2149 = vunpack.c.h.b16 %v705
        %v2150 = vunpack.c.l.b16 %v706
        %v2151 = vunpack.c.h.b16 %v706
        %v2152 = vunpack.c.l.b16 %v707
        %v2153 = vunpack.c.h.b16 %v707
        %v2154 = vunpack.c.l.b16 %v708
        %v2155 = vunpack.c.h.b16 %v708
        %v2156 = vunpack.c.l.b16 %v709
        %v2157 = vunpack.c.h.b16 %v709
        %v2158 = vunpack.c.l.b16 %v710
        %v2159 = vunpack.c.h.b16 %v710
        %v2160 = vunpack.c.l.b16 %v711
        %v2161 = vunpack.c.h.b16 %v711
        %v2162 = vunpack.c.l.b16 %v712
        %v2163 = vunpack.c.h.b16 %v712
        %v2164 = vunpack.c.l.b16 %v713
        %v2165 = vunpack.c.h.b16 %v713
        %v2166 = vunpack.c.l.b16 %v714
        %v2167 = vunpack.c.h.b16 %v714
        %v2168 = vunpack.c.l.b16 %v715
        %v2169 = vunpack.c.h.b16 %v715
        %v2170 = vunpack.c.l.b16 %v716
        %v2171 = vunpack.c.h.b16 %v716
        %v2172 = vunpack.c.l.b16 %v717
        %v2173 = vunpack.c.h.b16 %v717
        %v2174 = vunpack.c.l.b16 %v718
        %v2175 = vunpack.c.h.b16 %v718
        %v2176 = vunpack.c.l.b16 %v719
        %v2177 = vunpack.c.h.b16 %v719
        %v2178 = vunpack.c.l.b16 %v720
        %v2179 = vunpack.c.h.b16 %v720
        %v2180 = vunpack.c.l.b16 %v721
        %v2181 = vunpack.c.h.b16 %v721
        %v2182 = vunpack.c.l.b16 %v722
        %v2183 = vunpack.c.h.b16 %v722
        %v2184 = vunpack.c.l.b16 %v723
        %v2185 = vunpack.c.h.b16 %v723
        %v2186 = vunpack.c.l.b16 %v724
        %v2187 = vunpack.c.h.b16 %v724
        %v2188 = vunpack.c.l.b16 %v725
        %v2189 = vunpack.c.h.b16 %v725
        %v2190 = vunpack.c.l.b16 %v726
        %v2191 = vunpack.c.h.b16 %v726
        %v2192 = vunpack.c.l.b16 %v727
        %v2193 = vunpack.c.h.b16 %v727
        %v2194 = vunpack.c.l.b16 %v728
        %v2195 = vunpack.c.h.b16 %v728
        %v2196 = vunpack.c.l.b16 %v729
        %v2197 = vunpack.c.h.b16 %v729
        %v2198 = vunpack.c.l.b16 %v730
        %v2199 = vunpack.c.h.b16 %v730
        %v2200 = vunpack.c.l.b16 %v731
        %v2201 = vunpack.c.h.b16 %v731
        %v2202 = vunpack.c.l.b16 %v732
        %v2203 = vunpack.c.h.b16 %v732
        %v2204 = vunpack.c.l.b16 %v733
        %v2205 = vunpack.c.h.b16 %v733
        %v2206 = vunpack.c.l.b16 %v734
        %v2207 = vunpack.c.h.b16 %v734
        %v2208 = vunpack.c.l.b16 %v735
        %v2209 = vunpack.c.h.b16 %v735
        %v2210 = vunpack.c.l.b16 %v736
        %v2211 = vunpack.c.h.b16 %v736
        %v2212 = vunpack.c.l.b16 %v737
        %v2213 = vunpack.c.h.b16 %v737
        %v2214 = vunpack.c.l.b16 %v738
        %v2215 = vunpack.c.h.b16 %v738
        %v2216 = vunpack.c.l.b16 %v739
        %v2217 = vunpack.c.h.b16 %v739
        %v2218 = vunpack.c.l.b16 %v740
        %v2219 = vunpack.c.h.b16 %v740
        %v2220 = vunpack.c.l.b16 %v741
        %v2221 = vunpack.c.h.b16 %v741
        %v2222 = vunpack.c.l.b16 %v742
        %v2223 = vunpack.c.h.b16 %v742
        %v2224 = vunpack.c.l.b16 %v743
        %v2225 = vunpack.c.h.b16 %v743
        %v2226 = vunpack.c.l.b16 %v744
        %v2227 = vunpack.c.h.b16 %v744
        %v2228 = vunpack.c.l.b16 %v745
        %v2229 = vunpack.c.h.b16 %v745
        %v2230 = vunpack.c.l.b16 %v746
        %v2231 = vunpack.c.h.b16 %v746
        %v2232 = vunpack.c.l.b16 %v747
        %v2233 = vunpack.c.h.b16 %v747
        %v2234 = vunpack.c.l.b16 %v748
        %v2235 = vunpack.c.h.b16 %v748
        %v2236 = vunpack.c.l.b16 %v749
        %v2237 = vunpack.c.h.b16 %v749
        %v2238 = vunpack.c.l.b16 %v750
        %v2239 = vunpack.c.h.b16 %v750
        %v2240 = vunpack.c.l.b16 %v751
        %v2241 = vunpack.c.h.b16 %v751
        %v2242 = vunpack.c.l.b16 %v752
        %v2243 = vunpack.c.h.b16 %v752
        %v2244 = vunpack.c.l.b16 %v753
        %v2245 = vunpack.c.h.b16 %v753
        %v2246 = vunpack.c.l.b16 %v754
        %v2247 = vunpack.c.h.b16 %v754
        %v2248 = vunpack.c.l.b16 %v755
        %v2249 = vunpack.c.h.b16 %v755
        %v2250 = vunpack.c.l.b16 %v756
        %v2251 = vunpack.c.h.b16 %v756
        %v2252 = vunpack.c.l.b16 %v757
        %v2253 = vunpack.c.h.b16 %v757
        %v2254 = vunpack.c.l.b16 %v758
        %v2255 = vunpack.c.h.b16 %v758
        %v2256 = vunpack.c.l.b16 %v759
        %v2257 = vunpack.c.h.b16 %v759
        %v2258 = vunpack.c.l.b16 %v760
        %v2259 = vunpack.c.h.b16 %v760
        %v2260 = vunpack.c.l.b16 %v761
        %v2261 = vunpack.c.h.b16 %v761
        %v2262 = vunpack.c.l.b16 %v762
        %v2263 = vunpack.c.h.b16 %v762
        %v2264 = vunpack.c.l.b16 %v763
        %v2265 = vunpack.c.h.b16 %v763
        %v2266 = vunpack.c.l.b16 %v764
        %v2267 = vunpack.c.h.b16 %v764
        %v2268 = vunpack.c.l.b16 %v765
        %v2269 = vunpack.c.h.b16 %v765
        %v2270 = vunpack.c.l.b16 %v766
        %v2271 = vunpack.c.h.b16 %v766
        %v2272 = vunpack.c.l.b16 %v767
        %v2273 = vunpack.c.h.b16 %v767
        %v2274 = vunpack.c.l.b16 %v768
        %v2275 = vunpack.c.h.b16 %v768
        %v2276 = vunpack.c.l.b16 %v769
        %v2277 = vunpack.c.h.b16 %v769
        %v2278 = vunpack.c.l.b16 %v770
        %v2279 = vunpack.c.h.b16 %v770
        %v2280 = vunpack.c.l.b16 %v771
        %v2281 = vunpack.c.h.b16 %v771
        %v2282 = vunpack.c.l.b16 %v772
        %v2283 = vunpack.c.h.b16 %v772
        %v2284 = vunpack.c.l.b16 %v773
        %v2285 = vunpack.c.h.b16 %v773
        %v2286 = vunpack.c.l.b16 %v774
        %v2287 = vunpack.c.h.b16 %v774
        %v2288 = vunpack.c.l.b16 %v775
        %v2289 = vunpack.c.h.b16 %v775
        %v2290 = vunpack.c.l.b16 %v776
        %v2291 = vunpack.c.h.b16 %v776
        %v2292 = vunpack.c.l.b16 %v777
        %v2293 = vunpack.c.h.b16 %v777
        %v2294 = vunpack.c.l.b16 %v778
        %v2295 = vunpack.c.h.b16 %v778
        %v2296 = vunpack.c.l.b16 %v779
        %v2297 = vunpack.c.h.b16 %v779
        %v2298 = vunpack.c.l.b16 %v780
        %v2299 = vunpack.c.h.b16 %v780
        %v2300 = vunpack.c.l.b16 %v781
        %v2301 = vunpack.c.h.b16 %v781
        %v2302 = vunpack.c.l.b16 %v782
        %v2303 = vunpack.c.h.b16 %v782
        %v2304 = vunpack.c.l.b16 %v783
        %v2305 = vunpack.c.h.b16 %v783
        %v2306 = vunpack.c.l.b16 %v784
        %v2307 = vunpack.c.h.b16 %v784
        %v2308 = vunpack.c.l.b16 %v785
        %v2309 = vunpack.c.h.b16 %v785
        %v2310 = vunpack.c.l.b16 %v786
        %v2311 = vunpack.c.h.b16 %v786
        %v2312 = vunpack.c.l.b16 %v787
        %v2313 = vunpack.c.h.b16 %v787
        %v2314 = vunpack.c.l.b16 %v788
        %v2315 = vunpack.c.h.b16 %v788
        %v2316 = vunpack.c.l.b16 %v789
        %v2317 = vunpack.c.h.b16 %v789
        %v2318 = vunpack.c.l.b16 %v790
        %v2319 = vunpack.c.h.b16 %v790
        %v2320 = vunpack.c.l.b16 %v791
        %v2321 = vunpack.c.h.b16 %v791
        %v2322 = vunpack.c.l.b16 %v792
        %v2323 = vunpack.c.h.b16 %v792
        %v2324 = vunpack.c.l.b16 %v793
        %v2325 = vunpack.c.h.b16 %v793
        %v2326 = vunpack.c.l.b16 %v794
        %v2327 = vunpack.c.h.b16 %v794
        %v2328 = vunpack.c.l.b16 %v795
        %v2329 = vunpack.c.h.b16 %v795
        %v2330 = vunpack.c.l.b16 %v796
        %v2331 = vunpack.c.h.b16 %v796
        %v2332 = vunpack.c.l.b16 %v797
        %v2333 = vunpack.c.h.b16 %v797
        %v2334 = vunpack.c.l.b16 %v798
        %v2335 = vunpack.c.h.b16 %v798
        %v2336 = vunpack.c.l.b16 %v799
        %v2337 = vunpack.c.h.b16 %v799
        %v2338 = vunpack.c.l.b16 %v800
        %v2339 = vunpack.c.h.b16 %v800
        %v2340 = vunpack.c.l.b16 %v801
        %v2341 = vunpack.c.h.b16 %v801
        %v2342 = vunpack.c.l.b16 %v802
        %v2343 = vunpack.c.h.b16 %v802
        %v2344 = vunpack.c.l.b16 %v803
        %v2345 = vunpack.c.h.b16 %v803
        %v2346 = vunpack.c.l.b16 %v804
        %v2347 = vunpack.c.h.b16 %v804
        %v2348 = vunpack.c.l.b16 %v805
        %v2349 = vunpack.c.h.b16 %v805
        %v2350 = vunpack.c.l.b16 %v806
        %v2351 = vunpack.c.h.b16 %v806
        %v2352 = vunpack.c.l.b16 %v807
        %v2353 = vunpack.c.h.b16 %v807
        %v2354 = vunpack.c.l.b16 %v808
        %v2355 = vunpack.c.h.b16 %v808
        %v2356 = vunpack.c.l.b16 %v809
        %v2357 = vunpack.c.h.b16 %v809
        %v2358 = vunpack.c.l.b16 %v810
        %v2359 = vunpack.c.h.b16 %v810
        %v2360 = vunpack.c.l.b16 %v811
        %v2361 = vunpack.c.h.b16 %v811
        %v2362 = vunpack.c.l.b16 %v812
        %v2363 = vunpack.c.h.b16 %v812
        %v2364 = vunpack.c.l.b16 %v813
        %v2365 = vunpack.c.h.b16 %v813
        %v2366 = vunpack.c.l.b16 %v814
        %v2367 = vunpack.c.h.b16 %v814
        %v2368 = vunpack.c.l.b16 %v815
        %v2369 = vunpack.c.h.b16 %v815
        %v2370 = vunpack.c.l.b16 %v816
        %v2371 = vunpack.c.h.b16 %v816
        %v2372 = vunpack.c.l.b16 %v817
        %v2373 = vunpack.c.h.b16 %v817
        %v2374 = vunpack.c.l.b16 %v818
        %v2375 = vunpack.c.h.b16 %v818
        %v2376 = vunpack.c.l.b16 %v819
        %v2377 = vunpack.c.h.b16 %v819
        %v2378 = vunpack.c.l.b16 %v820
        %v2379 = vunpack.c.h.b16 %v820
        %v2380 = vunpack.c.l.b16 %v821
        %v2381 = vunpack.c.h.b16 %v821
        %v2382 = vunpack.c.l.b16 %v822
        %v2383 = vunpack.c.h.b16 %v822
        %v2384 = vunpack.c.l.b16 %v823
        %v2385 = vunpack.c.h.b16 %v823
        %v2386 = vunpack.c.l.b16 %v824
        %v2387 = vunpack.c.h.b16 %v824
        %v2388 = vunpack.c.l.b16 %v825
        %v2389 = vunpack.c.h.b16 %v825
        %v2390 = vunpack.c.l.b16 %v826
        %v2391 = vunpack.c.h.b16 %v826
        %v2392 = vunpack.c.l.b16 %v827
        %v2393 = vunpack.c.h.b16 %v827
        %v2394 = vunpack.c.l.b16 %v828
        %v2395 = vunpack.c.h.b16 %v828
        %v2396 = vunpack.c.l.b16 %v829
        %v2397 = vunpack.c.h.b16 %v829
        %v2398 = vunpack.c.l.b16 %v830
        %v2399 = vunpack.c.h.b16 %v830
        %v2400 = vunpack.c.l.b16 %v831
        %v2401 = vunpack.c.h.b16 %v831
        %v2402 = vunpack.c.l.b16 %v832
        %v2403 = vunpack.c.h.b16 %v832
        %v2404 = vunpack.c.l.b16 %v833
        %v2405 = vunpack.c.h.b16 %v833
        %v2406 = vunpack.c.l.b16 %v834
        %v2407 = vunpack.c.h.b16 %v834
        %v2408 = vunpack.c.l.b16 %v835
        %v2409 = vunpack.c.h.b16 %v835
        %v2410 = vunpack.c.l.b16 %v836
        %v2411 = vunpack.c.h.b16 %v836
        %v2412 = vunpack.c.l.b16 %v837
        %v2413 = vunpack.c.h.b16 %v837
        %v2414 = vunpack.c.l.b16 %v838
        %v2415 = vunpack.c.h.b16 %v838
        %v2416 = vunpack.c.l.b16 %v839
        %v2417 = vunpack.c.h.b16 %v839
        %v2418 = vunpack.c.l.b16 %v840
        %v2419 = vunpack.c.h.b16 %v840
        %v2420 = vunpack.c.l.b16 %v841
        %v2421 = vunpack.c.h.b16 %v841
        %v2422 = vunpack.c.l.b16 %v842
        %v2423 = vunpack.c.h.b16 %v842
        %v2424 = vunpack.c.l.b16 %v843
        %v2425 = vunpack.c.h.b16 %v843
        %v2426 = vunpack.c.l.b16 %v844
        %v2427 = vunpack.c.h.b16 %v844
        %v2428 = vunpack.c.l.b16 %v845
        %v2429 = vunpack.c.h.b16 %v845
        %v2430 = vunpack.c.l.b16 %v846
        %v2431 = vunpack.c.h.b16 %v846
        %v2432 = vunpack.c.l.b16 %v847
        %v2433 = vunpack.c.h.b16 %v847
        %v2434 = vunpack.c.l.b16 %v848
        %v2435 = vunpack.c.h.b16 %v848
        %v2436 = vunpack.c.l.b16 %v849
        %v2437 = vunpack.c.h.b16 %v849
        %v2438 = vunpack.c.l.b16 %v850
        %v2439 = vunpack.c.h.b16 %v850
        %v2440 = vunpack.c.l.b16 %v851
        %v2441 = vunpack.c.h.b16 %v851
        %v2442 = vunpack.c.l.b16 %v852
        %v2443 = vunpack.c.h.b16 %v852
        %v2444 = vunpack.c.l.b16 %v853
        %v2445 = vunpack.c.h.b16 %v853
        %v2446 = vunpack.c.l.b16 %v854
        %v2447 = vunpack.c.h.b16 %v854
        %v2448 = vunpack.c.l.b16 %v855
        %v2449 = vunpack.c.h.b16 %v855
        %v2450 = vunpack.c.l.b16 %v856
        %v2451 = vunpack.c.h.b16 %v856
        %v2452 = vunpack.c.l.b16 %v857
        %v2453 = vunpack.c.h.b16 %v857
        %v2454 = vunpack.c.l.b16 %v858
        %v2455 = vunpack.c.h.b16 %v858
        %v2456 = vunpack.c.l.b16 %v859
        %v2457 = vunpack.c.h.b16 %v859
        %v2458 = vunpack.c.l.b16 %v860
        %v2459 = vunpack.c.h.b16 %v860
        %v2460 = vunpack.c.l.b16 %v861
        %v2461 = vunpack.c.h.b16 %v861
        %v2462 = vunpack.c.l.b16 %v862
        %v2463 = vunpack.c.h.b16 %v862
        %v2464 = vunpack.c.l.b16 %v863
        %v2465 = vunpack.c.h.b16 %v863
        %v2466 = vunpack.c.l.b16 %v864
        %v2467 = vunpack.c.h.b16 %v864
        %v2468 = vunpack.c.l.b16 %v865
        %v2469 = vunpack.c.h.b16 %v865
        %v2470 = vunpack.c.l.b16 %v866
        %v2471 = vunpack.c.h.b16 %v866
        %v2472 = vunpack.c.l.b16 %v867
        %v2473 = vunpack.c.h.b16 %v867
        %v2474 = vunpack.c.l.b16 %v868
        %v2475 = vunpack.c.h.b16 %v868
        %v2476 = vunpack.c.l.b16 %v869
        %v2477 = vunpack.c.h.b16 %v869
        %v2478 = vunpack.c.l.b16 %v870
        %v2479 = vunpack.c.h.b16 %v870
        %v2480 = vunpack.c.l.b16 %v871
        %v2481 = vunpack.c.h.b16 %v871
        %v2482 = vunpack.c.l.b16 %v872
        %v2483 = vunpack.c.h.b16 %v872
        %v2484 = vunpack.c.l.b16 %v873
        %v2485 = vunpack.c.h.b16 %v873
        %v2486 = vunpack.c.l.b16 %v874
        %v2487 = vunpack.c.h.b16 %v874
        %v2488 = vunpack.c.l.b16 %v875
        %v2489 = vunpack.c.h.b16 %v875
        %v2490 = vunpack.c.l.b16 %v876
        %v2491 = vunpack.c.h.b16 %v876
        %v2492 = vunpack.c.l.b16 %v877
        %v2493 = vunpack.c.h.b16 %v877
        %v2494 = vunpack.c.l.b16 %v878
        %v2495 = vunpack.c.h.b16 %v878
        %v2496 = vunpack.c.l.b16 %v879
        %v2497 = vunpack.c.h.b16 %v879
        %v2498 = vunpack.c.l.b16 %v880
        %v2499 = vunpack.c.h.b16 %v880
        %v2500 = vunpack.c.l.b16 %v881
        %v2501 = vunpack.c.h.b16 %v881
        %v2502 = vunpack.c.l.b16 %v882
        %v2503 = vunpack.c.h.b16 %v882
        %v2504 = vunpack.c.l.b16 %v883
        %v2505 = vunpack.c.h.b16 %v883
        %v2506 = vunpack.c.l.b16 %v884
        %v2507 = vunpack.c.h.b16 %v884
        %v2508 = vunpack.c.l.b16 %v885
        %v2509 = vunpack.c.h.b16 %v885
        %v2510 = vunpack.c.l.b16 %v886
        %v2511 = vunpack.c.h.b16 %v886
        %v2512 = vunpack.c.l.b16 %v887
        %v2513 = vunpack.c.h.b16 %v887
        %v2514 = vunpack.c.l.b16 %v888
        %v2515 = vunpack.c.h.b16 %v888
        %v2516 = vunpack.c.l.b16 %v889
        %v2517 = vunpack.c.h.b16 %v889
        %v2518 = vunpack.c.l.b16 %v890
        %v2519 = vunpack.c.h.b16 %v890
        %v2520 = vunpack.c.l.b16 %v891
        %v2521 = vunpack.c.h.b16 %v891
        %v2522 = vunpack.c.l.b16 %v892
        %v2523 = vunpack.c.h.b16 %v892
        %v2524 = vunpack.c.l.b16 %v893
        %v2525 = vunpack.c.h.b16 %v893
        %v2526 = vunpack.c.l.b16 %v894
        %v2527 = vunpack.c.h.b16 %v894
        %v2528 = vunpack.c.l.b16 %v895
        %v2529 = vunpack.c.h.b16 %v895
        %v2530 = vunpack.c.l.b16 %v896
        %v2531 = vunpack.c.h.b16 %v896
        %v2532 = vunpack.c.l.b16 %v897
        %v2533 = vunpack.c.h.b16 %v897
        %v2534 = vunpack.c.l.b16 %v898
        %v2535 = vunpack.c.h.b16 %v898
        %v2536 = vunpack.c.l.b16 %v899
        %v2537 = vunpack.c.h.b16 %v899
        %v2538 = vunpack.c.l.b16 %v900
        %v2539 = vunpack.c.h.b16 %v900
        %v2540 = vunpack.c.l.b16 %v901
        %v2541 = vunpack.c.h.b16 %v901
        %v2542 = vunpack.c.l.b16 %v902
        %v2543 = vunpack.c.h.b16 %v902
        %v2544 = vunpack.c.l.b16 %v903
        %v2545 = vunpack.c.h.b16 %v903
        %v2546 = vunpack.c.l.b16 %v904
        %v2547 = vunpack.c.h.b16 %v904
        %v2548 = vunpack.c.l.b16 %v905
        %v2549 = vunpack.c.h.b16 %v905
        %v2550 = vunpack.c.l.b16 %v906
        %v2551 = vunpack.c.h.b16 %v906
        %v2552 = vunpack.c.l.b16 %v907
        %v2553 = vunpack.c.h.b16 %v907
        %v2554 = vunpack.c.l.b16 %v908
        %v2555 = vunpack.c.h.b16 %v908
        %v2556 = vunpack.c.l.b16 %v909
        %v2557 = vunpack.c.h.b16 %v909
        %v2558 = vunpack.c.l.b16 %v910
        %v2559 = vunpack.c.h.b16 %v910
        %v2560 = vunpack.c.l.b16 %v911
        %v2561 = vunpack.c.h.b16 %v911
        %v2562 = vunpack.c.l.b16 %v912
        %v2563 = vunpack.c.h.b16 %v912
        %v2564 = vunpack.c.l.b16 %v913
        %v2565 = vunpack.c.h.b16 %v913
        %v2566 = vunpack.c.l.b16 %v914
        %v2567 = vunpack.c.h.b16 %v914
        %v2568 = vunpack.c.l.b16 %v915
        %v2569 = vunpack.c.h.b16 %v915
        %v2570 = vunpack.c.l.b16 %v916
        %v2571 = vunpack.c.h.b16 %v916
        %v2572 = vunpack.c.l.b16 %v917
        %v2573 = vunpack.c.h.b16 %v917
        %v2574 = vunpack.c.l.b16 %v918
        %v2575 = vunpack.c.h.b16 %v918
        %v2576 = vunpack.c.l.b16 %v919
        %v2577 = vunpack.c.h.b16 %v919
        %v2578 = vunpack.c.l.b16 %v920
        %v2579 = vunpack.c.h.b16 %v920
        %v2580 = vunpack.c.l.b16 %v921
        %v2581 = vunpack.c.h.b16 %v921
        %v2582 = vunpack.c.l.b16 %v922
        %v2583 = vunpack.c.h.b16 %v922
        %v2584 = vunpack.c.l.b16 %v923
        %v2585 = vunpack.c.h.b16 %v923
        %v2586 = vunpack.c.l.b16 %v924
        %v2587 = vunpack.c.h.b16 %v924
        %v2588 = vunpack.c.l.b16 %v925
        %v2589 = vunpack.c.h.b16 %v925
        %v2590 = vunpack.c.l.b16 %v926
        %v2591 = vunpack.c.h.b16 %v926
        %v2592 = vunpack.c.l.b16 %v927
        %v2593 = vunpack.c.h.b16 %v927
        %v2594 = vunpack.c.l.b16 %v928
        %v2595 = vunpack.c.h.b16 %v928
        %v2596 = vunpack.c.l.b16 %v929
        %v2597 = vunpack.c.h.b16 %v929
        %v2598 = vunpack.c.l.b16 %v930
        %v2599 = vunpack.c.h.b16 %v930
        %v2600 = vunpack.c.l.b16 %v931
        %v2601 = vunpack.c.h.b16 %v931
        %v2602 = vunpack.c.l.b16 %v932
        %v2603 = vunpack.c.h.b16 %v932
        %v2604 = vunpack.c.l.b16 %v933
        %v2605 = vunpack.c.h.b16 %v933
        %v2606 = vunpack.c.l.b16 %v934
        %v2607 = vunpack.c.h.b16 %v934
        %v2608 = vunpack.c.l.b16 %v935
        %v2609 = vunpack.c.h.b16 %v935
        %v2610 = vunpack.c.l.b16 %v936
        %v2611 = vunpack.c.h.b16 %v936
        %v2612 = vunpack.c.l.b16 %v937
        %v2613 = vunpack.c.h.b16 %v937
        %v2614 = vunpack.c.l.b16 %v938
        %v2615 = vunpack.c.h.b16 %v938
        %v2616 = vunpack.c.l.b16 %v939
        %v2617 = vunpack.c.h.b16 %v939
        %v2618 = vunpack.c.l.b16 %v940
        %v2619 = vunpack.c.h.b16 %v940
        %v2620 = vunpack.c.l.b16 %v941
        %v2621 = vunpack.c.h.b16 %v941
        %v2622 = vunpack.c.l.b16 %v942
        %v2623 = vunpack.c.h.b16 %v942
        %v2624 = vunpack.c.l.b16 %v943
        %v2625 = vunpack.c.h.b16 %v943
        %v2626 = vunpack.c.l.b16 %v944
        %v2627 = vunpack.c.h.b16 %v944
        %v2628 = vunpack.c.l.b16 %v945
        %v2629 = vunpack.c.h.b16 %v945
        %v2630 = vunpack.c.l.b16 %v946
        %v2631 = vunpack.c.h.b16 %v946
        %v2632 = vunpack.c.l.b16 %v947
        %v2633 = vunpack.c.h.b16 %v947
        %v2634 = vunpack.c.l.b16 %v948
        %v2635 = vunpack.c.h.b16 %v948
        %v2636 = vunpack.c.l.b16 %v949
        %v2637 = vunpack.c.h.b16 %v949
        %v2638 = vunpack.c.l.b16 %v950
        %v2639 = vunpack.c.h.b16 %v950
        %v2640 = vunpack.c.l.b16 %v951
        %v2641 = vunpack.c.h.b16 %v951
        %v2642 = vunpack.c.l.b16 %v952
        %v2643 = vunpack.c.h.b16 %v952
        %v2644 = vunpack.c.l.b16 %v953
        %v2645 = vunpack.c.h.b16 %v953
        %v2646 = vunpack.c.l.b16 %v954
        %v2647 = vunpack.c.h.b16 %v954
        %v2648 = vunpack.c.l.b16 %v955
        %v2649 = vunpack.c.h.b16 %v955
        %v2650 = vunpack.c.l.b16 %v956
        %v2651 = vunpack.c.h.b16 %v956
        %v2652 = vunpack.c.l.b16 %v957
        %v2653 = vunpack.c.h.b16 %v957
        %v2654 = vpack.c.b16 %v1634, %v1630
        %v2655 = vpack.c.b16 %v1635, %v1631
        %v2656 = vpack.c.b16 %v1636, %v1632
        %v2657 = vpack.c.b16 %v1637, %v1633
        %v2658 = vpack.c.b16 %v1642, %v1638
        %v2659 = vpack.c.b16 %v1643, %v1639
        %v2660 = vpack.c.b16 %v1644, %v1640
        %v2661 = vpack.c.b16 %v1645, %v1641
        %v2662 = vpack.c.b16 %v1650, %v1646
        %v2663 = vpack.c.b16 %v1651, %v1647
        %v2664 = vpack.c.b16 %v1652, %v1648
        %v2665 = vpack.c.b16 %v1653, %v1649
        %v2666 = vpack.c.b16 %v1658, %v1654
        %v2667 = vpack.c.b16 %v1659, %v1655
        %v2668 = vpack.c.b16 %v1660, %v1656
        %v2669 = vpack.c.b16 %v1661, %v1657
        %v2670 = vpack.c.b16 %v1666, %v1662
        %v2671 = vpack.c.b16 %v1667, %v1663
        %v2672 = vpack.c.b16 %v1668, %v1664
        %v2673 = vpack.c.b16 %v1669, %v1665
        %v2674 = vpack.c.b16 %v1674, %v1670
        %v2675 = vpack.c.b16 %v1675, %v1671
        %v2676 = vpack.c.b16 %v1676, %v1672
        %v2677 = vpack.c.b16 %v1677, %v1673
        %v2678 = vpack.c.b16 %v1682, %v1678
        %v2679 = vpack.c.b16 %v1683, %v1679
        %v2680 = vpack.c.b16 %v1684, %v1680
        %v2681 = vpack.c.b16 %v1685, %v1681
        %v2682 = vpack.c.b16 %v1690, %v1686
        %v2683 = vpack.c.b16 %v1691, %v1687
        %v2684 = vpack.c.b16 %v1692, %v1688
        %v2685 = vpack.c.b16 %v1693, %v1689
        %v2686 = vpack.c.b16 %v1698, %v1694
        %v2687 = vpack.c.b16 %v1699, %v1695
        %v2688 = vpack.c.b16 %v1700, %v1696
        %v2689 = vpack.c.b16 %v1701, %v1697
        %v2690 = vpack.c.b16 %v1706, %v1702
        %v2691 = vpack.c.b16 %v1707, %v1703
        %v2692 = vpack.c.b16 %v1708, %v1704
        %v2693 = vpack.c.b16 %v1709, %v1705
        %v2694 = vpack.c.b16 %v1714, %v1710
        %v2695 = vpack.c.b16 %v1715, %v1711
        %v2696 = vpack.c.b16 %v1716, %v1712
        %v2697 = vpack.c.b16 %v1717, %v1713
        %v2698 = vpack.c.b16 %v1722, %v1718
        %v2699 = vpack.c.b16 %v1723, %v1719
        %v2700 = vpack.c.b16 %v1724, %v1720
        %v2701 = vpack.c.b16 %v1725, %v1721
        %v2702 = vpack.c.b16 %v1730, %v1726
        %v2703 = vpack.c.b16 %v1731, %v1727
        %v2704 = vpack.c.b16 %v1732, %v1728
        %v2705 = vpack.c.b16 %v1733, %v1729
        %v2706 = vpack.c.b16 %v1738, %v1734
        %v2707 = vpack.c.b16 %v1739, %v1735
        %v2708 = vpack.c.b16 %v1740, %v1736
        %v2709 = vpack.c.b16 %v1741, %v1737
        %v2710 = vpack.c.b16 %v1746, %v1742
        %v2711 = vpack.c.b16 %v1747, %v1743
        %v2712 = vpack.c.b16 %v1748, %v1744
        %v2713 = vpack.c.b16 %v1749, %v1745
        %v2714 = vpack.c.b16 %v1754, %v1750
        %v2715 = vpack.c.b16 %v1755, %v1751
        %v2716 = vpack.c.b16 %v1756, %v1752
        %v2717 = vpack.c.b16 %v1757, %v1753
        %v2718 = vpack.c.b16 %v1762, %v1758
        %v2719 = vpack.c.b16 %v1763, %v1759
        %v2720 = vpack.c.b16 %v1764, %v1760
        %v2721 = vpack.c.b16 %v1765, %v1761
        %v2722 = vpack.c.b16 %v1770, %v1766
        %v2723 = vpack.c.b16 %v1771, %v1767
        %v2724 = vpack.c.b16 %v1772, %v1768
        %v2725 = vpack.c.b16 %v1773, %v1769
        %v2726 = vpack.c.b16 %v1778, %v1774
        %v2727 = vpack.c.b16 %v1779, %v1775
        %v2728 = vpack.c.b16 %v1780, %v1776
        %v2729 = vpack.c.b16 %v1781, %v1777
        %v2730 = vpack.c.b16 %v1786, %v1782
        %v2731 = vpack.c.b16 %v1787, %v1783
        %v2732 = vpack.c.b16 %v1788, %v1784
        %v2733 = vpack.c.b16 %v1789, %v1785
        %v2734 = vpack.c.b16 %v1794, %v1790
        %v2735 = vpack.c.b16 %v1795, %v1791
        %v2736 = vpack.c.b16 %v1796, %v1792
        %v2737 = vpack.c.b16 %v1797, %v1793
        %v2738 = vpack.c.b16 %v1802, %v1798
        %v2739 = vpack.c.b16 %v1803, %v1799
        %v2740 = vpack.c.b16 %v1804, %v1800
        %v2741 = vpack.c.b16 %v1805, %v1801
        %v2742 = vpack.c.b16 %v1810, %v1806
        %v2743 = vpack.c.b16 %v1811, %v1807
        %v2744 = vpack.c.b16 %v1812, %v1808
        %v2745 = vpack.c.b16 %v1813, %v1809
        %v2746 = vpack.c.b16 %v1818, %v1814
        %v2747 = vpack.c.b16 %v1819, %v1815
        %v2748 = vpack.c.b16 %v1820, %v1816
        %v2749 = vpack.c.b16 %v1821, %v1817
        %v2750 = vpack.c.b16 %v1826, %v1822
        %v2751 = vpack.c.b16 %v1827, %v1823
        %v2752 = vpack.c.b16 %v1828, %v1824
        %v2753 = vpack.c.b16 %v1829, %v1825
        %v2754 = vpack.c.b16 %v1834, %v1830
        %v2755 = vpack.c.b16 %v1835, %v1831
        %v2756 = vpack.c.b16 %v1836, %v1832
        %v2757 = vpack.c.b16 %v1837, %v1833
        %v2758 = vpack.c.b16 %v1842, %v1838
        %v2759 = vpack.c.b16 %v1843, %v1839
        %v2760 = vpack.c.b16 %v1844, %v1840
        %v2761 = vpack.c.b16 %v1845, %v1841
        %v2762 = vpack.c.b16 %v1850, %v1846
        %v2763 = vpack.c.b16 %v1851, %v1847
        %v2764 = vpack.c.b16 %v1852, %v1848
        %v2765 = vpack.c.b16 %v1853, %v1849
        %v2766 = vpack.c.b16 %v1858, %v1854
        %v2767 = vpack.c.b16 %v1859, %v1855
        %v2768 = vpack.c.b16 %v1860, %v1856
        %v2769 = vpack.c.b16 %v1861, %v1857
        %v2770 = vpack.c.b16 %v1866, %v1862
        %v2771 = vpack.c.b16 %v1867, %v1863
        %v2772 = vpack.c.b16 %v1868, %v1864
        %v2773 = vpack.c.b16 %v1869, %v1865
        %v2774 = vpack.c.b16 %v1874, %v1870
        %v2775 = vpack.c.b16 %v1875, %v1871
        %v2776 = vpack.c.b16 %v1876, %v1872
        %v2777 = vpack.c.b16 %v1877, %v1873
        %v2778 = vpack.c.b16 %v1882, %v1878
        %v2779 = vpack.c.b16 %v1883, %v1879
        %v2780 = vpack.c.b16 %v1884, %v1880
        %v2781 = vpack.c.b16 %v1885, %v1881
        %v2782 = vpack.c.b16 %v1890, %v1886
        %v2783 = vpack.c.b16 %v1891, %v1887
        %v2784 = vpack.c.b16 %v1892, %v1888
        %v2785 = vpack.c.b16 %v1893, %v1889
        %v2786 = vpack.c.b16 %v1898, %v1894
        %v2787 = vpack.c.b16 %v1899, %v1895
        %v2788 = vpack.c.b16 %v1900, %v1896
        %v2789 = vpack.c.b16 %v1901, %v1897
        %v2790 = vpack.c.b16 %v1906, %v1902
        %v2791 = vpack.c.b16 %v1907, %v1903
        %v2792 = vpack.c.b16 %v1908, %v1904
        %v2793 = vpack.c.b16 %v1909, %v1905
        %v2794 = vpack.c.b16 %v1914, %v1910
        %v2795 = vpack.c.b16 %v1915, %v1911
        %v2796 = vpack.c.b16 %v1916, %v1912
        %v2797 = vpack.c.b16 %v1917, %v1913
        %v2798 = vpack.c.b16 %v1922, %v1918
        %v2799 = vpack.c.b16 %v1923, %v1919
        %v2800 = vpack.c.b16 %v1924, %v1920
        %v2801 = vpack.c.b16 %v1925, %v1921
        %v2802 = vpack.c.b16 %v1930, %v1926
        %v2803 = vpack.c.b16 %v1931, %v1927
        %v2804 = vpack.c.b16 %v1932, %v1928
        %v2805 = vpack.c.b16 %v1933, %v1929
        %v2806 = vpack.c.b16 %v1938, %v1934
        %v2807 = vpack.c.b16 %v1939, %v1935
        %v2808 = vpack.c.b16 %v1940, %v1936
        %v2809 = vpack.c.b16 %v1941, %v1937
        %v2810 = vpack.c.b16 %v1946, %v1942
        %v2811 = vpack.c.b16 %v1947, %v1943
        %v2812 = vpack.c.b16 %v1948, %v1944
        %v2813 = vpack.c.b16 %v1949, %v1945
        %v2814 = vpack.c.b16 %v1954, %v1950
        %v2815 = vpack.c.b16 %v1955, %v1951
        %v2816 = vpack.c.b16 %v1956, %v1952
        %v2817 = vpack.c.b16 %v1957, %v1953
        %v2818 = vpack.c.b16 %v1962, %v1958
        %v2819 = vpack.c.b16 %v1963, %v1959
        %v2820 = vpack.c.b16 %v1964, %v1960
        %v2821 = vpack.c.b16 %v1965, %v1961
        %v2822 = vpack.c.b16 %v1970, %v1966
        %v2823 = vpack.c.b16 %v1971, %v1967
        %v2824 = vpack.c.b16 %v1972, %v1968
        %v2825 = vpack.c.b16 %v1973, %v1969
        %v2826 = vpack.c.b16 %v1978, %v1974
        %v2827 = vpack.c.b16 %v1979, %v1975
        %v2828 = vpack.c.b16 %v1980, %v1976
        %v2829 = vpack.c.b16 %v1981, %v1977
        %v2830 = vpack.c.b16 %v1986, %v1982
        %v2831 = vpack.c.b16 %v1987, %v1983
        %v2832 = vpack.c.b16 %v1988, %v1984
        %v2833 = vpack.c.b16 %v1989, %v1985
        %v2834 = vpack.c.b16 %v1994, %v1990
        %v2835 = vpack.c.b16 %v1995, %v1991
        %v2836 = vpack.c.b16 %v1996, %v1992
        %v2837 = vpack.c.b16 %v1997, %v1993
        %v2838 = vpack.c.b16 %v2002, %v1998
        %v2839 = vpack.c.b16 %v2003, %v1999
        %v2840 = vpack.c.b16 %v2004, %v2000
        %v2841 = vpack.c.b16 %v2005, %v2001
        %v2842 = vpack.c.b16 %v2010, %v2006
        %v2843 = vpack.c.b16 %v2011, %v2007
        %v2844 = vpack.c.b16 %v2012, %v2008
        %v2845 = vpack.c.b16 %v2013, %v2009
        %v2846 = vpack.c.b16 %v2018, %v2014
        %v2847 = vpack.c.b16 %v2019, %v2015
        %v2848 = vpack.c.b16 %v2020, %v2016
        %v2849 = vpack.c.b16 %v2021, %v2017
        %v2850 = vpack.c.b16 %v2026, %v2022
        %v2851 = vpack.c.b16 %v2027, %v2023
        %v2852 = vpack.c.b16 %v2028, %v2024
        %v2853 = vpack.c.b16 %v2029, %v2025
        %v2854 = vpack.c.b16 %v2034, %v2030
        %v2855 = vpack.c.b16 %v2035, %v2031
        %v2856 = vpack.c.b16 %v2036, %v2032
        %v2857 = vpack.c.b16 %v2037, %v2033
        %v2858 = vpack.c.b16 %v2042, %v2038
        %v2859 = vpack.c.b16 %v2043, %v2039
        %v2860 = vpack.c.b16 %v2044, %v2040
        %v2861 = vpack.c.b16 %v2045, %v2041
        %v2862 = vpack.c.b16 %v2050, %v2046
        %v2863 = vpack.c.b16 %v2051, %v2047
        %v2864 = vpack.c.b16 %v2052, %v2048
        %v2865 = vpack.c.b16 %v2053, %v2049
        %v2866 = vpack.c.b16 %v2058, %v2054
        %v2867 = vpack.c.b16 %v2059, %v2055
        %v2868 = vpack.c.b16 %v2060, %v2056
        %v2869 = vpack.c.b16 %v2061, %v2057
        %v2870 = vpack.c.b16 %v2066, %v2062
        %v2871 = vpack.c.b16 %v2067, %v2063
        %v2872 = vpack.c.b16 %v2068, %v2064
        %v2873 = vpack.c.b16 %v2069, %v2065
        %v2874 = vpack.c.b16 %v2074, %v2070
        %v2875 = vpack.c.b16 %v2075, %v2071
        %v2876 = vpack.c.b16 %v2076, %v2072
        %v2877 = vpack.c.b16 %v2077, %v2073
        %v2878 = vpack.c.b16 %v2082, %v2078
        %v2879 = vpack.c.b16 %v2083, %v2079
        %v2880 = vpack.c.b16 %v2084, %v2080
        %v2881 = vpack.c.b16 %v2085, %v2081
        %v2882 = vpack.c.b16 %v2090, %v2086
        %v2883 = vpack.c.b16 %v2091, %v2087
        %v2884 = vpack.c.b16 %v2092, %v2088
        %v2885 = vpack.c.b16 %v2093, %v2089
        %v2886 = vpack.c.b16 %v2098, %v2094
        %v2887 = vpack.c.b16 %v2099, %v2095
        %v2888 = vpack.c.b16 %v2100, %v2096
        %v2889 = vpack.c.b16 %v2101, %v2097
        %v2890 = vpack.c.b16 %v2106, %v2102
        %v2891 = vpack.c.b16 %v2107, %v2103
        %v2892 = vpack.c.b16 %v2108, %v2104
        %v2893 = vpack.c.b16 %v2109, %v2105
        %v2894 = vpack.c.b16 %v2114, %v2110
        %v2895 = vpack.c.b16 %v2115, %v2111
        %v2896 = vpack.c.b16 %v2116, %v2112
        %v2897 = vpack.c.b16 %v2117, %v2113
        %v2898 = vpack.c.b16 %v2122, %v2118
        %v2899 = vpack.c.b16 %v2123, %v2119
        %v2900 = vpack.c.b16 %v2124, %v2120
        %v2901 = vpack.c.b16 %v2125, %v2121
        %v2902 = vpack.c.b16 %v2130, %v2126
        %v2903 = vpack.c.b16 %v2131, %v2127
        %v2904 = vpack.c.b16 %v2132, %v2128
        %v2905 = vpack.c.b16 %v2133, %v2129
        %v2906 = vpack.c.b16 %v2138, %v2134
        %v2907 = vpack.c.b16 %v2139, %v2135
        %v2908 = vpack.c.b16 %v2140, %v2136
        %v2909 = vpack.c.b16 %v2141, %v2137
        %v2910 = vpack.c.b16 %v2146, %v2142
        %v2911 = vpack.c.b16 %v2147, %v2143
        %v2912 = vpack.c.b16 %v2148, %v2144
        %v2913 = vpack.c.b16 %v2149, %v2145
        %v2914 = vpack.c.b16 %v2154, %v2150
        %v2915 = vpack.c.b16 %v2155, %v2151
        %v2916 = vpack.c.b16 %v2156, %v2152
        %v2917 = vpack.c.b16 %v2157, %v2153
        %v2918 = vpack.c.b16 %v2162, %v2158
        %v2919 = vpack.c.b16 %v2163, %v2159
        %v2920 = vpack.c.b16 %v2164, %v2160
        %v2921 = vpack.c.b16 %v2165, %v2161
        %v2922 = vpack.c.b16 %v2170, %v2166
        %v2923 = vpack.c.b16 %v2171, %v2167
        %v2924 = vpack.c.b16 %v2172, %v2168
        %v2925 = vpack.c.b16 %v2173, %v2169
        %v2926 = vpack.c.b16 %v2178, %v2174
        %v2927 = vpack.c.b16 %v2179, %v2175
        %v2928 = vpack.c.b16 %v2180, %v2176
        %v2929 = vpack.c.b16 %v2181, %v2177
        %v2930 = vpack.c.b16 %v2186, %v2182
        %v2931 = vpack.c.b16 %v2187, %v2183
        %v2932 = vpack.c.b16 %v2188, %v2184
        %v2933 = vpack.c.b16 %v2189, %v2185
        %v2934 = vpack.c.b16 %v2194, %v2190
        %v2935 = vpack.c.b16 %v2195, %v2191
        %v2936 = vpack.c.b16 %v2196, %v2192
        %v2937 = vpack.c.b16 %v2197, %v2193
        %v2938 = vpack.c.b16 %v2202, %v2198
        %v2939 = vpack.c.b16 %v2203, %v2199
        %v2940 = vpack.c.b16 %v2204, %v2200
        %v2941 = vpack.c.b16 %v2205, %v2201
        %v2942 = vpack.c.b16 %v2210, %v2206
        %v2943 = vpack.c.b16 %v2211, %v2207
        %v2944 = vpack.c.b16 %v2212, %v2208
        %v2945 = vpack.c.b16 %v2213, %v2209
        %v2946 = vpack.c.b16 %v2218, %v2214
        %v2947 = vpack.c.b16 %v2219, %v2215
        %v2948 = vpack.c.b16 %v2220, %v2216
        %v2949 = vpack.c.b16 %v2221, %v2217
        %v2950 = vpack.c.b16 %v2226, %v2222
        %v2951 = vpack.c.b16 %v2227, %v2223
        %v2952 = vpack.c.b16 %v2228, %v2224
        %v2953 = vpack.c.b16 %v2229, %v2225
        %v2954 = vpack.c.b16 %v2234, %v2230
        %v2955 = vpack.c.b16 %v2235, %v2231
        %v2956 = vpack.c.b16 %v2236, %v2232
        %v2957 = vpack.c.b16 %v2237, %v2233
        %v2958 = vpack.c.b16 %v2242, %v2238
        %v2959 = vpack.c.b16 %v2243, %v2239
        %v2960 = vpack.c.b16 %v2244, %v2240
        %v2961 = vpack.c.b16 %v2245, %v2241
        %v2962 = vpack.c.b16 %v2250, %v2246
        %v2963 = vpack.c.b16 %v2251, %v2247
        %v2964 = vpack.c.b16 %v2252, %v2248
        %v2965 = vpack.c.b16 %v2253, %v2249
        %v2966 = vpack.c.b16 %v2258, %v2254
        %v2967 = vpack.c.b16 %v2259, %v2255
        %v2968 = vpack.c.b16 %v2260, %v2256
        %v2969 = vpack.c.b16 %v2261, %v2257
        %v2970 = vpack.c.b16 %v2266, %v2262
        %v2971 = vpack.c.b16 %v2267, %v2263
        %v2972 = vpack.c.b16 %v2268, %v2264
        %v2973 = vpack.c.b16 %v2269, %v2265
        %v2974 = vpack.c.b16 %v2274, %v2270
        %v2975 = vpack.c.b16 %v2275, %v2271
        %v2976 = vpack.c.b16 %v2276, %v2272
        %v2977 = vpack.c.b16 %v2277, %v2273
        %v2978 = vpack.c.b16 %v2282, %v2278
        %v2979 = vpack.c.b16 %v2283, %v2279
        %v2980 = vpack.c.b16 %v2284, %v2280
        %v2981 = vpack.c.b16 %v2285, %v2281
        %v2982 = vpack.c.b16 %v2290, %v2286
        %v2983 = vpack.c.b16 %v2291, %v2287
        %v2984 = vpack.c.b16 %v2292, %v2288
        %v2985 = vpack.c.b16 %v2293, %v2289
        %v2986 = vpack.c.b16 %v2298, %v2294
        %v2987 = vpack.c.b16 %v2299, %v2295
        %v2988 = vpack.c.b16 %v2300, %v2296
        %v2989 = vpack.c.b16 %v2301, %v2297
        %v2990 = vpack.c.b16 %v2306, %v2302
        %v2991 = vpack.c.b16 %v2307, %v2303
        %v2992 = vpack.c.b16 %v2308, %v2304
        %v2993 = vpack.c.b16 %v2309, %v2305
        %v2994 = vpack.c.b16 %v2314, %v2310
        %v2995 = vpack.c.b16 %v2315, %v2311
        %v2996 = vpack.c.b16 %v2316, %v2312
        %v2997 = vpack.c.b16 %v2317, %v2313
        %v2998 = vpack.c.b16 %v2322, %v2318
        %v2999 = vpack.c.b16 %v2323, %v2319
        %v3000 = vpack.c.b16 %v2324, %v2320
        %v3001 = vpack.c.b16 %v2325, %v2321
        %v3002 = vpack.c.b16 %v2330, %v2326
        %v3003 = vpack.c.b16 %v2331, %v2327
        %v3004 = vpack.c.b16 %v2332, %v2328
        %v3005 = vpack.c.b16 %v2333, %v2329
        %v3006 = vpack.c.b16 %v2338, %v2334
        %v3007 = vpack.c.b16 %v2339, %v2335
        %v3008 = vpack.c.b16 %v2340, %v2336
        %v3009 = vpack.c.b16 %v2341, %v2337
        %v3010 = vpack.c.b16 %v2346, %v2342
        %v3011 = vpack.c.b16 %v2347, %v2343
        %v3012 = vpack.c.b16 %v2348, %v2344
        %v3013 = vpack.c.b16 %v2349, %v2345
        %v3014 = vpack.c.b16 %v2354, %v2350
        %v3015 = vpack.c.b16 %v2355, %v2351
        %v3016 = vpack.c.b16 %v2356, %v2352
        %v3017 = vpack.c.b16 %v2357, %v2353
        %v3018 = vpack.c.b16 %v2362, %v2358
        %v3019 = vpack.c.b16 %v2363, %v2359
        %v3020 = vpack.c.b16 %v2364, %v2360
        %v3021 = vpack.c.b16 %v2365, %v2361
        %v3022 = vpack.c.b16 %v2370, %v2366
        %v3023 = vpack.c.b16 %v2371, %v2367
        %v3024 = vpack.c.b16 %v2372, %v2368
        %v3025 = vpack.c.b16 %v2373, %v2369
        %v3026 = vpack.c.b16 %v2378, %v2374
        %v3027 = vpack.c.b16 %v2379, %v2375
        %v3028 = vpack.c.b16 %v2380, %v2376
        %v3029 = vpack.c.b16 %v2381, %v2377
        %v3030 = vpack.c.b16 %v2386, %v2382
        %v3031 = vpack.c.b16 %v2387, %v2383
        %v3032 = vpack.c.b16 %v2388, %v2384
        %v3033 = vpack.c.b16 %v2389, %v2385
        %v3034 = vpack.c.b16 %v2394, %v2390
        %v3035 = vpack.c.b16 %v2395, %v2391
        %v3036 = vpack.c.b16 %v2396, %v2392
        %v3037 = vpack.c.b16 %v2397, %v2393
        %v3038 = vpack.c.b16 %v2402, %v2398
        %v3039 = vpack.c.b16 %v2403, %v2399
        %v3040 = vpack.c.b16 %v2404, %v2400
        %v3041 = vpack.c.b16 %v2405, %v2401
        %v3042 = vpack.c.b16 %v2410, %v2406
        %v3043 = vpack.c.b16 %v2411, %v2407
        %v3044 = vpack.c.b16 %v2412, %v2408
        %v3045 = vpack.c.b16 %v2413, %v2409
        %v3046 = vpack.c.b16 %v2418, %v2414
        %v3047 = vpack.c.b16 %v2419, %v2415
        %v3048 = vpack.c.b16 %v2420, %v2416
        %v3049 = vpack.c.b16 %v2421, %v2417
        %v3050 = vpack.c.b16 %v2426, %v2422
        %v3051 = vpack.c.b16 %v2427, %v2423
        %v3052 = vpack.c.b16 %v2428, %v2424
        %v3053 = vpack.c.b16 %v2429, %v2425
        %v3054 = vpack.c.b16 %v2434, %v2430
        %v3055 = vpack.c.b16 %v2435, %v2431
        %v3056 = vpack.c.b16 %v2436, %v2432
        %v3057 = vpack.c.b16 %v2437, %v2433
        %v3058 = vpack.c.b16 %v2442, %v2438
        %v3059 = vpack.c.b16 %v2443, %v2439
        %v3060 = vpack.c.b16 %v2444, %v2440
        %v3061 = vpack.c.b16 %v2445, %v2441
        %v3062 = vpack.c.b16 %v2450, %v2446
        %v3063 = vpack.c.b16 %v2451, %v2447
        %v3064 = vpack.c.b16 %v2452, %v2448
        %v3065 = vpack.c.b16 %v2453, %v2449
        %v3066 = vpack.c.b16 %v2458, %v2454
        %v3067 = vpack.c.b16 %v2459, %v2455
        %v3068 = vpack.c.b16 %v2460, %v2456
        %v3069 = vpack.c.b16 %v2461, %v2457
        %v3070 = vpack.c.b16 %v2466, %v2462
        %v3071 = vpack.c.b16 %v2467, %v2463
        %v3072 = vpack.c.b16 %v2468, %v2464
        %v3073 = vpack.c.b16 %v2469, %v2465
        %v3074 = vpack.c.b16 %v2474, %v2470
        %v3075 = vpack.c.b16 %v2475, %v2471
        %v3076 = vpack.c.b16 %v2476, %v2472
        %v3077 = vpack.c.b16 %v2477, %v2473
        %v3078 = vpack.c.b16 %v2482, %v2478
        %v3079 = vpack.c.b16 %v2483, %v2479
        %v3080 = vpack.c.b16 %v2484, %v2480
        %v3081 = vpack.c.b16 %v2485, %v2481
        %v3082 = vpack.c.b16 %v2490, %v2486
        %v3083 = vpack.c.b16 %v2491, %v2487
        %v3084 = vpack.c.b16 %v2492, %v2488
        %v3085 = vpack.c.b16 %v2493, %v2489
        %v3086 = vpack.c.b16 %v2498, %v2494
        %v3087 = vpack.c.b16 %v2499, %v2495
        %v3088 = vpack.c.b16 %v2500, %v2496
        %v3089 = vpack.c.b16 %v2501, %v2497
        %v3090 = vpack.c.b16 %v2506, %v2502
        %v3091 = vpack.c.b16 %v2507, %v2503
        %v3092 = vpack.c.b16 %v2508, %v2504
        %v3093 = vpack.c.b16 %v2509, %v2505
        %v3094 = vpack.c.b16 %v2514, %v2510
        %v3095 = vpack.c.b16 %v2515, %v2511
        %v3096 = vpack.c.b16 %v2516, %v2512
        %v3097 = vpack.c.b16 %v2517, %v2513
        %v3098 = vpack.c.b16 %v2522, %v2518
        %v3099 = vpack.c.b16 %v2523, %v2519
        %v3100 = vpack.c.b16 %v2524, %v2520
        %v3101 = vpack.c.b16 %v2525, %v2521
        %v3102 = vpack.c.b16 %v2530, %v2526
        %v3103 = vpack.c.b16 %v2531, %v2527
        %v3104 = vpack.c.b16 %v2532, %v2528
        %v3105 = vpack.c.b16 %v2533, %v2529
        %v3106 = vpack.c.b16 %v2538, %v2534
        %v3107 = vpack.c.b16 %v2539, %v2535
        %v3108 = vpack.c.b16 %v2540, %v2536
        %v3109 = vpack.c.b16 %v2541, %v2537
        %v3110 = vpack.c.b16 %v2546, %v2542
        %v3111 = vpack.c.b16 %v2547, %v2543
        %v3112 = vpack.c.b16 %v2548, %v2544
        %v3113 = vpack.c.b16 %v2549, %v2545
        %v3114 = vpack.c.b16 %v2554, %v2550
        %v3115 = vpack.c.b16 %v2555, %v2551
        %v3116 = vpack.c.b16 %v2556, %v2552
        %v3117 = vpack.c.b16 %v2557, %v2553
        %v3118 = vpack.c.b16 %v2562, %v2558
        %v3119 = vpack.c.b16 %v2563, %v2559
        %v3120 = vpack.c.b16 %v2564, %v2560
        %v3121 = vpack.c.b16 %v2565, %v2561
        %v3122 = vpack.c.b16 %v2570, %v2566
        %v3123 = vpack.c.b16 %v2571, %v2567
        %v3124 = vpack.c.b16 %v2572, %v2568
        %v3125 = vpack.c.b16 %v2573, %v2569
        %v3126 = vpack.c.b16 %v2578, %v2574
        %v3127 = vpack.c.b16 %v2579, %v2575
        %v3128 = vpack.c.b16 %v2580, %v2576
        %v3129 = vpack.c.b16 %v2581, %v2577
        %v3130 = vpack.c.b16 %v2586, %v2582
        %v3131 = vpack.c.b16 %v2587, %v2583
        %v3132 = vpack.c.b16 %v2588, %v2584
        %v3133 = vpack.c.b16 %v2589, %v2585
        %v3134 = vpack.c.b16 %v2594, %v2590
        %v3135 = vpack.c.b16 %v2595, %v2591
        %v3136 = vpack.c.b16 %v2596, %v2592
        %v3137 = vpack.c.b16 %v2597, %v2593
        %v3138 = vpack.c.b16 %v2602, %v2598
        %v3139 = vpack.c.b16 %v2603, %v2599
        %v3140 = vpack.c.b16 %v2604, %v2600
        %v3141 = vpack.c.b16 %v2605, %v2601
        %v3142 = vpack.c.b16 %v2610, %v2606
        %v3143 = vpack.c.b16 %v2611, %v2607
        %v3144 = vpack.c.b16 %v2612, %v2608
        %v3145 = vpack.c.b16 %v2613, %v2609
        %v3146 = vpack.c.b16 %v2618, %v2614
        %v3147 = vpack.c.b16 %v2619, %v2615
        %v3148 = vpack.c.b16 %v2620, %v2616
        %v3149 = vpack.c.b16 %v2621, %v2617
        %v3150 = vpack.c.b16 %v2626, %v2622
        %v3151 = vpack.c.b16 %v2627, %v2623
        %v3152 = vpack.c.b16 %v2628, %v2624
        %v3153 = vpack.c.b16 %v2629, %v2625
        %v3154 = vpack.c.b16 %v2634, %v2630
        %v3155 = vpack.c.b16 %v2635, %v2631
        %v3156 = vpack.c.b16 %v2636, %v2632
        %v3157 = vpack.c.b16 %v2637, %v2633
        %v3158 = vpack.c.b16 %v2642, %v2638
        %v3159 = vpack.c.b16 %v2643, %v2639
        %v3160 = vpack.c.b16 %v2644, %v2640
        %v3161 = vpack.c.b16 %v2645, %v2641
        %v3162 = vpack.c.b16 %v2650, %v2646
        %v3163 = vpack.c.b16 %v2651, %v2647
        %v3164 = vpack.c.b16 %v2652, %v2648
        %v3165 = vpack.c.b16 %v2653, %v2649
        %3678 = vmatprep.subr.bf16.mxu0 %v2655
        %3679 = vmatpush1.bf16.msra.mxu0 %v2654
        %3680 = vmatprep.subr.bf16.mxu0 %v2659
        %3681 = vmatpush1.bf16.msra.mxu0 %v2658
        %3682 = vmatprep.subr.bf16.mxu0 %v2663
        %3683 = vmatpush1.bf16.msra.mxu0 %v2662
        %3684 = vmatprep.subr.bf16.mxu0 %v2667
        %3685 = vmatpush1.bf16.msra.mxu0 %v2666
        %3686 = vmatprep.subr.bf16.mxu0 %v2671
        %3687 = vmatpush1.bf16.msra.mxu0 %v2670
        %3688 = vmatprep.subr.bf16.mxu0 %v2675
        %3689 = vmatpush1.bf16.msra.mxu0 %v2674
        %3690 = vmatprep.subr.bf16.mxu0 %v2679
        %3691 = vmatpush1.bf16.msra.mxu0 %v2678
        %3692 = vmatprep.subr.bf16.mxu0 %v2683
        %3693 = vmatpush1.bf16.msra.mxu0 %v2682
        %3694 = vmatprep.subr.bf16.mxu0 %v2687
        %3695 = vmatpush1.bf16.msra.mxu0 %v2686
        %3696 = vmatprep.subr.bf16.mxu0 %v2691
        %3697 = vmatpush1.bf16.msra.mxu0 %v2690
        %3698 = vmatprep.subr.bf16.mxu0 %v2695
        %3699 = vmatpush1.bf16.msra.mxu0 %v2694
        %3700 = vmatprep.subr.bf16.mxu0 %v2699
        %3701 = vmatpush1.bf16.msra.mxu0 %v2698
        %3702 = vmatprep.subr.bf16.mxu0 %v2703
        %3703 = vmatpush1.bf16.msra.mxu0 %v2702
        %3704 = vmatprep.subr.bf16.mxu0 %v2707
        %3705 = vmatpush1.bf16.msra.mxu0 %v2706
        %3706 = vmatprep.subr.bf16.mxu0 %v2711
        %3707 = vmatpush1.bf16.msra.mxu0 %v2710
        %3708 = vmatprep.subr.bf16.mxu0 %v2715
        %3709 = vmatpush1.bf16.msra.mxu0 %v2714
        %3710 = vmatprep.mubr.bf16.mxu0 %v1055
        %3711 = vmatmul.mubr.bf16.gmra.mrb[0].mxu0 %v1054
        %v3712 = vpop.f32.mrb[0].mxu0
        %v3713 = vadd.f32 0.0, %v3712
        %v3714 = vpop.f32.mrb[0].mxu0
        %v3715 = vadd.f32 0.0, %v3714
        %v3716 = vpop.f32.mrb[0].mxu0
        %v3717 = vadd.f32 0.0, %v3716
        %v3718 = vpop.f32.mrb[0].mxu0
        %v3719 = vadd.f32 0.0, %v3718
        %3720 = vmatprep.mubr.bf16.mxu0 %v1071
        %3721 = vmatmul.mubr.bf16.gmra.mrb[0].mxu0 %v1070
        %v3722 = vpop.f32.mrb[0].mxu0
        %v3723 = vadd.f32 0.0, %v3722
        %v3724 = vpop.f32.mrb[0].mxu0
        %v3725 = vadd.f32 0.0, %v3724
        %v3726 = vpop.f32.mrb[0].mxu0
        %v3727 = vadd.f32 0.0, %v3726
        %v3728 = vpop.f32.mrb[0].mxu0
        %v3729 = vadd.f32 0.0, %v3728
        %3730 = vdwg.mxu0
        %3731 = vmatprep.subr.bf16.mxu0 %v2719
        %3732 = vmatpush1.bf16.msra.mxu0 %v2718
        %3733 = vmatprep.subr.bf16.mxu0 %v2723
        %3734 = vmatpush1.bf16.msra.mxu0 %v2722
        %3735 = vmatprep.subr.bf16.mxu0 %v2727
        %3736 = vmatpush1.bf16.msra.mxu0 %v2726
        %3737 = vmatprep.subr.bf16.mxu0 %v2731
        %3738 = vmatpush1.bf16.msra.mxu0 %v2730
        %3739 = vmatprep.subr.bf16.mxu0 %v2735
        %3740 = vmatpush1.bf16.msra.mxu0 %v2734
        %3741 = vmatprep.subr.bf16.mxu0 %v2739
        %3742 = vmatpush1.bf16.msra.mxu0 %v2738
        %3743 = vmatprep.subr.bf16.mxu0 %v2743
        %3744 = vmatpush1.bf16.msra.mxu0 %v2742
        %3745 = vmatprep.subr.bf16.mxu0 %v2747
        %3746 = vmatpush1.bf16.msra.mxu0 %v2746
        %3747 = vmatprep.subr.bf16.mxu0 %v2751
        %3748 = vmatpush1.bf16.msra.mxu0 %v2750
        %3749 = vmatprep.subr.bf16.mxu0 %v2755
        %3750 = vmatpush1.bf16.msra.mxu0 %v2754
        %3751 = vmatprep.subr.bf16.mxu0 %v2759
        %3752 = vmatpush1.bf16.msra.mxu0 %v2758
        %3753 = vmatprep.subr.bf16.mxu0 %v2763
        %3754 = vmatpush1.bf16.msra.mxu0 %v2762
        %3755 = vmatprep.subr.bf16.mxu0 %v2767
        %3756 = vmatpush1.bf16.msra.mxu0 %v2766
        %3757 = vmatprep.subr.bf16.mxu0 %v2771
        %3758 = vmatpush1.bf16.msra.mxu0 %v2770
        %3759 = vmatprep.subr.bf16.mxu0 %v2775
        %3760 = vmatpush1.bf16.msra.mxu0 %v2774
        %3761 = vmatprep.subr.bf16.mxu0 %v2779
        %3762 = vmatpush1.bf16.msra.mxu0 %v2778
        %3763 = vmatprep.mubr.bf16.mxu0 %v1057
        %3764 = vmatmul.mubr.bf16.gmra.mrb[0].mxu0 %v1056
        %v3765 = vpop.f32.mrb[0].mxu0
        %v3766 = vadd.f32 %v3713, %v3765
        %v3767 = vpop.f32.mrb[0].mxu0
        %v3768 = vadd.f32 %v3715, %v3767
        %v3769 = vpop.f32.mrb[0].mxu0
        %v3770 = vadd.f32 %v3717, %v3769
        %v3771 = vpop.f32.mrb[0].mxu0
        %v3772 = vadd.f32 %v3719, %v3771
        %3773 = vmatprep.mubr.bf16.mxu0 %v1073
        %3774 = vmatmul.mubr.bf16.gmra.mrb[0].mxu0 %v1072
        %v3775 = vpop.f32.mrb[0].mxu0
        %v3776 = vadd.f32 %v3723, %v3775
        %v3777 = vpop.f32.mrb[0].mxu0
        %v3778 = vadd.f32 %v3725, %v3777
        %v3779 = vpop.f32.mrb[0].mxu0
        %v3780 = vadd.f32 %v3727, %v3779
        %v3781 = vpop.f32.mrb[0].mxu0
        %v3782 = vadd.f32 %v3729, %v3781
        %3783 = vdwg.mxu0
        %3784 = vmatprep.subr.bf16.mxu0 %v2783
        %3785 = vmatpush1.bf16.msra.mxu0 %v2782
        %3786 = vmatprep.subr.bf16.mxu0 %v2787
        %3787 = vmatpush1.bf16.msra.mxu0 %v2786
        %3788 = vmatprep.subr.bf16.mxu0 %v2791
        %3789 = vmatpush1.bf16.msra.mxu0 %v2790
        %3790 = vmatprep.subr.bf16.mxu0 %v2795
        %3791 = vmatpush1.bf16.msra.mxu0 %v2794
        %3792 = vmatprep.subr.bf16.mxu0 %v2799
        %3793 = vmatpush1.bf16.msra.mxu0 %v2798
        %3794 = vmatprep.subr.bf16.mxu0 %v2803
        %3795 = vmatpush1.bf16.msra.mxu0 %v2802
        %3796 = vmatprep.subr.bf16.mxu0 %v2807
        %3797 = vmatpush1.bf16.msra.mxu0 %v2806
        %3798 = vmatprep.subr.bf16.mxu0 %v2811
        %3799 = vmatpush1.bf16.msra.mxu0 %v2810
        %3800 = vmatprep.subr.bf16.mxu0 %v2815
        %3801 = vmatpush1.bf16.msra.mxu0 %v2814
        %3802 = vmatprep.subr.bf16.mxu0 %v2819
        %3803 = vmatpush1.bf16.msra.mxu0 %v2818
        %3804 = vmatprep.subr.bf16.mxu0 %v2823
        %3805 = vmatpush1.bf16.msra.mxu0 %v2822
        %3806 = vmatprep.subr.bf16.mxu0 %v2827
        %3807 = vmatpush1.bf16.msra.mxu0 %v2826
        %3808 = vmatprep.subr.bf16.mxu0 %v2831
        %3809 = vmatpush1.bf16.msra.mxu0 %v2830
        %3810 = vmatprep.subr.bf16.mxu0 %v2835
        %3811 = vmatpush1.bf16.msra.mxu0 %v2834
        %3812 = vmatprep.subr.bf16.mxu0 %v2839
        %3813 = vmatpush1.bf16.msra.mxu0 %v2838
        %3814 = vmatprep.subr.bf16.mxu0 %v2843
        %3815 = vmatpush1.bf16.msra.mxu0 %v2842
        %3816 = vmatprep.mubr.bf16.mxu0 %v1059
        %3817 = vmatmul.mubr.bf16.gmra.mrb[0].mxu0 %v1058
        %v3818 = vpop.f32.mrb[0].mxu0
        %v3819 = vadd.f32 %v3766, %v3818
        %v3820 = vpop.f32.mrb[0].mxu0
        %v3821 = vadd.f32 %v3768, %v3820
        %v3822 = vpop.f32.mrb[0].mxu0
        %v3823 = vadd.f32 %v3770, %v3822
        %v3824 = vpop.f32.mrb[0].mxu0
        %v3825 = vadd.f32 %v3772, %v3824
        %3826 = vmatprep.mubr.bf16.mxu0 %v1075
        %3827 = vmatmul.mubr.bf16.gmra.mrb[0].mxu0 %v1074
        %v3828 = vpop.f32.mrb[0].mxu0
        %v3829 = vadd.f32 %v3776, %v3828
        %v3830 = vpop.f32.mrb[0].mxu0
        %v3831 = vadd.f32 %v3778, %v3830
        %v3832 = vpop.f32.mrb[0].mxu0
        %v3833 = vadd.f32 %v3780, %v3832
        %v3834 = vpop.f32.mrb[0].mxu0
        %v3835 = vadd.f32 %v3782, %v3834
        %3836 = vdwg.mxu0
        %3837 = vmatprep.subr.bf16.mxu0 %v2847
        %3838 = vmatpush1.bf16.msra.mxu0 %v2846
        %3839 = vmatprep.subr.bf16.mxu0 %v2851
        %3840 = vmatpush1.bf16.msra.mxu0 %v2850
        %3841 = vmatprep.subr.bf16.mxu0 %v2855
        %3842 = vmatpush1.bf16.msra.mxu0 %v2854
        %3843 = vmatprep.subr.bf16.mxu0 %v2859
        %3844 = vmatpush1.bf16.msra.mxu0 %v2858
        %3845 = vmatprep.subr.bf16.mxu0 %v2863
        %3846 = vmatpush1.bf16.msra.mxu0 %v2862
        %3847 = vmatprep.subr.bf16.mxu0 %v2867
        %3848 = vmatpush1.bf16.msra.mxu0 %v2866
        %3849 = vmatprep.subr.bf16.mxu0 %v2871
        %3850 = vmatpush1.bf16.msra.mxu0 %v2870
        %3851 = vmatprep.subr.bf16.mxu0 %v2875
        %3852 = vmatpush1.bf16.msra.mxu0 %v2874
        %3853 = vmatprep.subr.bf16.mxu0 %v2879
        %3854 = vmatpush1.bf16.msra.mxu0 %v2878
        %3855 = vmatprep.subr.bf16.mxu0 %v2883
        %3856 = vmatpush1.bf16.msra.mxu0 %v2882
        %3857 = vmatprep.subr.bf16.mxu0 %v2887
        %3858 = vmatpush1.bf16.msra.mxu0 %v2886
        %3859 = vmatprep.subr.bf16.mxu0 %v2891
        %3860 = vmatpush1.bf16.msra.mxu0 %v2890
        %3861 = vmatprep.subr.bf16.mxu0 %v2895
        %3862 = vmatpush1.bf16.msra.mxu0 %v2894
        %3863 = vmatprep.subr.bf16.mxu0 %v2899
        %3864 = vmatpush1.bf16.msra.mxu0 %v2898
        %3865 = vmatprep.subr.bf16.mxu0 %v2903
        %3866 = vmatpush1.bf16.msra.mxu0 %v2902
        %3867 = vmatprep.subr.bf16.mxu0 %v2907
        %3868 = vmatpush1.bf16.msra.mxu0 %v2906
        %3869 = vmatprep.mubr.bf16.mxu0 %v1061
        %3870 = vmatmul.mubr.bf16.gmra.mrb[0].mxu0 %v1060
        %v3871 = vpop.f32.mrb[0].mxu0
        %v3872 = vadd.f32 %v3819, %v3871
        %v3873 = vpop.f32.mrb[0].mxu0
        %v3874 = vadd.f32 %v3821, %v3873
        %v3875 = vpop.f32.mrb[0].mxu0
        %v3876 = vadd.f32 %v3823, %v3875
        %v3877 = vpop.f32.mrb[0].mxu0
        %v3878 = vadd.f32 %v3825, %v3877
        %3879 = vmatprep.mubr.bf16.mxu0 %v1077
        %3880 = vmatmul.mubr.bf16.gmra.mrb[0].mxu0 %v1076
        %v3881 = vpop.f32.mrb[0].mxu0
        %v3882 = vadd.f32 %v3829, %v3881
        %v3883 = vpop.f32.mrb[0].mxu0
        %v3884 = vadd.f32 %v3831, %v3883
        %v3885 = vpop.f32.mrb[0].mxu0
        %v3886 = vadd.f32 %v3833, %v3885
        %v3887 = vpop.f32.mrb[0].mxu0
        %v3888 = vadd.f32 %v3835, %v3887
        %3889 = vdwg.mxu0
        %3890 = vmatprep.subr.bf16.mxu0 %v2911
        %3891 = vmatpush1.bf16.msra.mxu0 %v2910
        %3892 = vmatprep.subr.bf16.mxu0 %v2915
        %3893 = vmatpush1.bf16.msra.mxu0 %v2914
        %3894 = vmatprep.subr.bf16.mxu0 %v2919
        %3895 = vmatpush1.bf16.msra.mxu0 %v2918
        %3896 = vmatprep.subr.bf16.mxu0 %v2923
        %3897 = vmatpush1.bf16.msra.mxu0 %v2922
        %3898 = vmatprep.subr.bf16.mxu0 %v2927
        %3899 = vmatpush1.bf16.msra.mxu0 %v2926
        %3900 = vmatprep.subr.bf16.mxu0 %v2931
        %3901 = vmatpush1.bf16.msra.mxu0 %v2930
        %3902 = vmatprep.subr.bf16.mxu0 %v2935
        %3903 = vmatpush1.bf16.msra.mxu0 %v2934
        %3904 = vmatprep.subr.bf16.mxu0 %v2939
        %3905 = vmatpush1.bf16.msra.mxu0 %v2938
        %3906 = vmatprep.subr.bf16.mxu0 %v2943
        %3907 = vmatpush1.bf16.msra.mxu0 %v2942
        %3908 = vmatprep.subr.bf16.mxu0 %v2947
        %3909 = vmatpush1.bf16.msra.mxu0 %v2946
        %3910 = vmatprep.subr.bf16.mxu0 %v2951
        %3911 = vmatpush1.bf16.msra.mxu0 %v2950
        %3912 = vmatprep.subr.bf16.mxu0 %v2955
        %3913 = vmatpush1.bf16.msra.mxu0 %v2954
        %3914 = vmatprep.subr.bf16.mxu0 %v2959
        %3915 = vmatpush1.bf16.msra.mxu0 %v2958
        %3916 = vmatprep.subr.bf16.mxu0 %v2963
        %3917 = vmatpush1.bf16.msra.mxu0 %v2962
        %3918 = vmatprep.subr.bf16.mxu0 %v2967
        %3919 = vmatpush1.bf16.msra.mxu0 %v2966
        %3920 = vmatprep.subr.bf16.mxu0 %v2971
        %3921 = vmatpush1.bf16.msra.mxu0 %v2970
        %3922 = vmatprep.mubr.bf16.mxu0 %v1063
        %3923 = vmatmul.mubr.bf16.gmra.mrb[0].mxu0 %v1062
        %v3924 = vpop.f32.mrb[0].mxu0
        %v3925 = vadd.f32 %v3872, %v3924
        %v3926 = vpop.f32.mrb[0].mxu0
        %v3927 = vadd.f32 %v3874, %v3926
        %v3928 = vpop.f32.mrb[0].mxu0
        %v3929 = vadd.f32 %v3876, %v3928
        %v3930 = vpop.f32.mrb[0].mxu0
        %v3931 = vadd.f32 %v3878, %v3930
        %3932 = vmatprep.mubr.bf16.mxu0 %v1079
        %3933 = vmatmul.mubr.bf16.gmra.mrb[0].mxu0 %v1078
        %v3934 = vpop.f32.mrb[0].mxu0
        %v3935 = vadd.f32 %v3882, %v3934
        %v3936 = vpop.f32.mrb[0].mxu0
        %v3937 = vadd.f32 %v3884, %v3936
        %v3938 = vpop.f32.mrb[0].mxu0
        %v3939 = vadd.f32 %v3886, %v3938
        %v3940 = vpop.f32.mrb[0].mxu0
        %v3941 = vadd.f32 %v3888, %v3940
        %3942 = vdwg.mxu0
        %3943 = vmatprep.subr.bf16.mxu0 %v2975
        %3944 = vmatpush1.bf16.msra.mxu0 %v2974
        %3945 = vmatprep.subr.bf16.mxu0 %v2979
        %3946 = vmatpush1.bf16.msra.mxu0 %v2978
        %3947 = vmatprep.subr.bf16.mxu0 %v2983
        %3948 = vmatpush1.bf16.msra.mxu0 %v2982
        %3949 = vmatprep.subr.bf16.mxu0 %v2987
        %3950 = vmatpush1.bf16.msra.mxu0 %v2986
        %3951 = vmatprep.subr.bf16.mxu0 %v2991
        %3952 = vmatpush1.bf16.msra.mxu0 %v2990
        %3953 = vmatprep.subr.bf16.mxu0 %v2995
        %3954 = vmatpush1.bf16.msra.mxu0 %v2994
        %3955 = vmatprep.subr.bf16.mxu0 %v2999
        %3956 = vmatpush1.bf16.msra.mxu0 %v2998
        %3957 = vmatprep.subr.bf16.mxu0 %v3003
        %3958 = vmatpush1.bf16.msra.mxu0 %v3002
        %3959 = vmatprep.subr.bf16.mxu0 %v3007
        %3960 = vmatpush1.bf16.msra.mxu0 %v3006
        %3961 = vmatprep.subr.bf16.mxu0 %v3011
        %3962 = vmatpush1.bf16.msra.mxu0 %v3010
        %3963 = vmatprep.subr.bf16.mxu0 %v3015
        %3964 = vmatpush1.bf16.msra.mxu0 %v3014
        %3965 = vmatprep.subr.bf16.mxu0 %v3019
        %3966 = vmatpush1.bf16.msra.mxu0 %v3018
        %3967 = vmatprep.subr.bf16.mxu0 %v3023
        %3968 = vmatpush1.bf16.msra.mxu0 %v3022
        %3969 = vmatprep.subr.bf16.mxu0 %v3027
        %3970 = vmatpush1.bf16.msra.mxu0 %v3026
        %3971 = vmatprep.subr.bf16.mxu0 %v3031
        %3972 = vmatpush1.bf16.msra.mxu0 %v3030
        %3973 = vmatprep.subr.bf16.mxu0 %v3035
        %3974 = vmatpush1.bf16.msra.mxu0 %v3034
        %3975 = vmatprep.mubr.bf16.mxu0 %v1065
        %3976 = vmatmul.mubr.bf16.gmra.mrb[0].mxu0 %v1064
        %v3977 = vpop.f32.mrb[0].mxu0
        %v3978 = vadd.f32 %v3925, %v3977
        %v3979 = vpop.f32.mrb[0].mxu0
        %v3980 = vadd.f32 %v3927, %v3979
        %v3981 = vpop.f32.mrb[0].mxu0
        %v3982 = vadd.f32 %v3929, %v3981
        %v3983 = vpop.f32.mrb[0].mxu0
        %v3984 = vadd.f32 %v3931, %v3983
        %3985 = vmatprep.mubr.bf16.mxu0 %v1081
        %3986 = vmatmul.mubr.bf16.gmra.mrb[0].mxu0 %v1080
        %v3987 = vpop.f32.mrb[0].mxu0
        %v3988 = vadd.f32 %v3935, %v3987
        %v3989 = vpop.f32.mrb[0].mxu0
        %v3990 = vadd.f32 %v3937, %v3989
        %v3991 = vpop.f32.mrb[0].mxu0
        %v3992 = vadd.f32 %v3939, %v3991
        %v3993 = vpop.f32.mrb[0].mxu0
        %v3994 = vadd.f32 %v3941, %v3993
        %3995 = vdwg.mxu0
        %3996 = vmatprep.subr.bf16.mxu0 %v3039
        %3997 = vmatpush1.bf16.msra.mxu0 %v3038
        %3998 = vmatprep.subr.bf16.mxu0 %v3043
        %3999 = vmatpush1.bf16.msra.mxu0 %v3042
        %4000 = vmatprep.subr.bf16.mxu0 %v3047
        %4001 = vmatpush1.bf16.msra.mxu0 %v3046
        %4002 = vmatprep.subr.bf16.mxu0 %v3051
        %4003 = vmatpush1.bf16.msra.mxu0 %v3050
        %4004 = vmatprep.subr.bf16.mxu0 %v3055
        %4005 = vmatpush1.bf16.msra.mxu0 %v3054
        %4006 = vmatprep.subr.bf16.mxu0 %v3059
        %4007 = vmatpush1.bf16.msra.mxu0 %v3058
        %4008 = vmatprep.subr.bf16.mxu0 %v3063
        %4009 = vmatpush1.bf16.msra.mxu0 %v3062
        %4010 = vmatprep.subr.bf16.mxu0 %v3067
        %4011 = vmatpush1.bf16.msra.mxu0 %v3066
        %4012 = vmatprep.subr.bf16.mxu0 %v3071
        %4013 = vmatpush1.bf16.msra.mxu0 %v3070
        %4014 = vmatprep.subr.bf16.mxu0 %v3075
        %4015 = vmatpush1.bf16.msra.mxu0 %v3074
        %4016 = vmatprep.subr.bf16.mxu0 %v3079
        %4017 = vmatpush1.bf16.msra.mxu0 %v3078
        %4018 = vmatprep.subr.bf16.mxu0 %v3083
        %4019 = vmatpush1.bf16.msra.mxu0 %v3082
        %4020 = vmatprep.subr.bf16.mxu0 %v3087
        %4021 = vmatpush1.bf16.msra.mxu0 %v3086
        %4022 = vmatprep.subr.bf16.mxu0 %v3091
        %4023 = vmatpush1.bf16.msra.mxu0 %v3090
        %4024 = vmatprep.subr.bf16.mxu0 %v3095
        %4025 = vmatpush1.bf16.msra.mxu0 %v3094
        %4026 = vmatprep.subr.bf16.mxu0 %v3099
        %4027 = vmatpush1.bf16.msra.mxu0 %v3098
        %4028 = vmatprep.mubr.bf16.mxu0 %v1067
        %4029 = vmatmul.mubr.bf16.gmra.mrb[0].mxu0 %v1066
        %v4030 = vpop.f32.mrb[0].mxu0
        %v4031 = vadd.f32 %v3978, %v4030
        %v4032 = vpop.f32.mrb[0].mxu0
        %v4033 = vadd.f32 %v3980, %v4032
        %v4034 = vpop.f32.mrb[0].mxu0
        %v4035 = vadd.f32 %v3982, %v4034
        %v4036 = vpop.f32.mrb[0].mxu0
        %v4037 = vadd.f32 %v3984, %v4036
        %4038 = vmatprep.mubr.bf16.mxu0 %v1083
        %4039 = vmatmul.mubr.bf16.gmra.mrb[0].mxu0 %v1082
        %v4040 = vpop.f32.mrb[0].mxu0
        %v4041 = vadd.f32 %v3988, %v4040
        %v4042 = vpop.f32.mrb[0].mxu0
        %v4043 = vadd.f32 %v3990, %v4042
        %v4044 = vpop.f32.mrb[0].mxu0
        %v4045 = vadd.f32 %v3992, %v4044
        %v4046 = vpop.f32.mrb[0].mxu0
        %v4047 = vadd.f32 %v3994, %v4046
        %4048 = vdwg.mxu0
        %4049 = vmatprep.subr.bf16.mxu0 %v3103
        %4050 = vmatpush1.bf16.msra.mxu0 %v3102
        %4051 = vmatprep.subr.bf16.mxu0 %v3107
        %4052 = vmatpush1.bf16.msra.mxu0 %v3106
        %4053 = vmatprep.subr.bf16.mxu0 %v3111
        %4054 = vmatpush1.bf16.msra.mxu0 %v3110
        %4055 = vmatprep.subr.bf16.mxu0 %v3115
        %4056 = vmatpush1.bf16.msra.mxu0 %v3114
        %4057 = vmatprep.subr.bf16.mxu0 %v3119
        %4058 = vmatpush1.bf16.msra.mxu0 %v3118
        %4059 = vmatprep.subr.bf16.mxu0 %v3123
        %4060 = vmatpush1.bf16.msra.mxu0 %v3122
        %4061 = vmatprep.subr.bf16.mxu0 %v3127
        %4062 = vmatpush1.bf16.msra.mxu0 %v3126
        %4063 = vmatprep.subr.bf16.mxu0 %v3131
        %4064 = vmatpush1.bf16.msra.mxu0 %v3130
        %4065 = vmatprep.subr.bf16.mxu0 %v3135
        %4066 = vmatpush1.bf16.msra.mxu0 %v3134
        %4067 = vmatprep.subr.bf16.mxu0 %v3139
        %4068 = vmatpush1.bf16.msra.mxu0 %v3138
        %4069 = vmatprep.subr.bf16.mxu0 %v3143
        %4070 = vmatpush1.bf16.msra.mxu0 %v3142
        %4071 = vmatprep.subr.bf16.mxu0 %v3147
        %4072 = vmatpush1.bf16.msra.mxu0 %v3146
        %4073 = vmatprep.subr.bf16.mxu0 %v3151
        %4074 = vmatpush1.bf16.msra.mxu0 %v3150
        %4075 = vmatprep.subr.bf16.mxu0 %v3155
        %4076 = vmatpush1.bf16.msra.mxu0 %v3154
        %4077 = vmatprep.subr.bf16.mxu0 %v3159
        %4078 = vmatpush1.bf16.msra.mxu0 %v3158
        %4079 = vmatprep.subr.bf16.mxu0 %v3163
        %4080 = vmatpush1.bf16.msra.mxu0 %v3162
        %4081 = vmatprep.mubr.bf16.mxu0 %v1069
        %4082 = vmatmul.mubr.bf16.gmra.mrb[0].mxu0 %v1068
        %v4083 = vpop.f32.mrb[0].mxu0
        %v4084 = vadd.f32 %v4031, %v4083
        %v4085 = vpop.f32.mrb[0].mxu0
        %v4086 = vadd.f32 %v4033, %v4085
        %v4087 = vpop.f32.mrb[0].mxu0
        %v4088 = vadd.f32 %v4035, %v4087
        %v4089 = vpop.f32.mrb[0].mxu0
        %v4090 = vadd.f32 %v4037, %v4089
        %4091 = vmatprep.mubr.bf16.mxu0 %v1085
        %4092 = vmatmul.mubr.bf16.gmra.mrb[0].mxu0 %v1084
        %v4093 = vpop.f32.mrb[0].mxu0
        %v4094 = vadd.f32 %v4041, %v4093
        %v4095 = vpop.f32.mrb[0].mxu0
        %v4096 = vadd.f32 %v4043, %v4095
        %v4097 = vpop.f32.mrb[0].mxu0
        %v4098 = vadd.f32 %v4045, %v4097
        %v4099 = vpop.f32.mrb[0].mxu0
        %v4100 = vadd.f32 %v4047, %v4099
        %4101 = vdwg.mxu0
        %4102 = vmatprep.subr.bf16.mxu0 %v2657
        %4103 = vmatpush1.bf16.msra.mxu0 %v2656
        %4104 = vmatprep.subr.bf16.mxu0 %v2661
        %4105 = vmatpush1.bf16.msra.mxu0 %v2660
        %4106 = vmatprep.subr.bf16.mxu0 %v2665
        %4107 = vmatpush1.bf16.msra.mxu0 %v2664
        %4108 = vmatprep.subr.bf16.mxu0 %v2669
        %4109 = vmatpush1.bf16.msra.mxu0 %v2668
        %4110 = vmatprep.subr.bf16.mxu0 %v2673
        %4111 = vmatpush1.bf16.msra.mxu0 %v2672
        %4112 = vmatprep.subr.bf16.mxu0 %v2677
        %4113 = vmatpush1.bf16.msra.mxu0 %v2676
        %4114 = vmatprep.subr.bf16.mxu0 %v2681
        %4115 = vmatpush1.bf16.msra.mxu0 %v2680
        %4116 = vmatprep.subr.bf16.mxu0 %v2685
        %4117 = vmatpush1.bf16.msra.mxu0 %v2684
        %4118 = vmatprep.subr.bf16.mxu0 %v2689
        %4119 = vmatpush1.bf16.msra.mxu0 %v2688
        %4120 = vmatprep.subr.bf16.mxu0 %v2693
        %4121 = vmatpush1.bf16.msra.mxu0 %v2692
        %4122 = vmatprep.subr.bf16.mxu0 %v2697
        %4123 = vmatpush1.bf16.msra.mxu0 %v2696
        %4124 = vmatprep.subr.bf16.mxu0 %v2701
        %4125 = vmatpush1.bf16.msra.mxu0 %v2700
        %4126 = vmatprep.subr.bf16.mxu0 %v2705
        %4127 = vmatpush1.bf16.msra.mxu0 %v2704
        %4128 = vmatprep.subr.bf16.mxu0 %v2709
        %4129 = vmatpush1.bf16.msra.mxu0 %v2708
        %4130 = vmatprep.subr.bf16.mxu0 %v2713
        %4131 = vmatpush1.bf16.msra.mxu0 %v2712
        %4132 = vmatprep.subr.bf16.mxu0 %v2717
        %4133 = vmatpush1.bf16.msra.mxu0 %v2716
        %4134 = vmatprep.mubr.bf16.mxu0 %v1055
        %4135 = vmatmul.mubr.bf16.gmra.mrb[0].mxu0 %v1054
        %v4136 = vpop.f32.mrb[0].mxu0
        %v4137 = vadd.f32 0.0, %v4136
        %v4138 = vpop.f32.mrb[0].mxu0
        %v4139 = vadd.f32 0.0, %v4138
        %v4140 = vpop.f32.mrb[0].mxu0
        %v4141 = vadd.f32 0.0, %v4140
        %v4142 = vpop.f32.mrb[0].mxu0
        %v4143 = vadd.f32 0.0, %v4142
        %4144 = vmatprep.mubr.bf16.mxu0 %v1071
        %4145 = vmatmul.mubr.bf16.gmra.mrb[0].mxu0 %v1070
        %v4146 = vpop.f32.mrb[0].mxu0
        %v4147 = vadd.f32 0.0, %v4146
        %v4148 = vpop.f32.mrb[0].mxu0
        %v4149 = vadd.f32 0.0, %v4148
        %v4150 = vpop.f32.mrb[0].mxu0
        %v4151 = vadd.f32 0.0, %v4150
        %v4152 = vpop.f32.mrb[0].mxu0
        %v4153 = vadd.f32 0.0, %v4152
        %4154 = vdwg.mxu0
        %4155 = vmatprep.subr.bf16.mxu0 %v2721
        %4156 = vmatpush1.bf16.msra.mxu0 %v2720
        %4157 = vmatprep.subr.bf16.mxu0 %v2725
        %4158 = vmatpush1.bf16.msra.mxu0 %v2724
        %4159 = vmatprep.subr.bf16.mxu0 %v2729
        %4160 = vmatpush1.bf16.msra.mxu0 %v2728
        %4161 = vmatprep.subr.bf16.mxu0 %v2733
        %4162 = vmatpush1.bf16.msra.mxu0 %v2732
        %4163 = vmatprep.subr.bf16.mxu0 %v2737
        %4164 = vmatpush1.bf16.msra.mxu0 %v2736
        %4165 = vmatprep.subr.bf16.mxu0 %v2741
        %4166 = vmatpush1.bf16.msra.mxu0 %v2740
        %4167 = vmatprep.subr.bf16.mxu0 %v2745
        %4168 = vmatpush1.bf16.msra.mxu0 %v2744
        %4169 = vmatprep.subr.bf16.mxu0 %v2749
        %4170 = vmatpush1.bf16.msra.mxu0 %v2748
        %4171 = vmatprep.subr.bf16.mxu0 %v2753
        %4172 = vmatpush1.bf16.msra.mxu0 %v2752
        %4173 = vmatprep.subr.bf16.mxu0 %v2757
        %4174 = vmatpush1.bf16.msra.mxu0 %v2756
        %4175 = vmatprep.subr.bf16.mxu0 %v2761
        %4176 = vmatpush1.bf16.msra.mxu0 %v2760
        %4177 = vmatprep.subr.bf16.mxu0 %v2765
        %4178 = vmatpush1.bf16.msra.mxu0 %v2764
        %4179 = vmatprep.subr.bf16.mxu0 %v2769
        %4180 = vmatpush1.bf16.msra.mxu0 %v2768
        %4181 = vmatprep.subr.bf16.mxu0 %v2773
        %4182 = vmatpush1.bf16.msra.mxu0 %v2772
        %4183 = vmatprep.subr.bf16.mxu0 %v2777
        %4184 = vmatpush1.bf16.msra.mxu0 %v2776
        %4185 = vmatprep.subr.bf16.mxu0 %v2781
        %4186 = vmatpush1.bf16.msra.mxu0 %v2780
        %4187 = vmatprep.mubr.bf16.mxu0 %v1057
        %4188 = vmatmul.mubr.bf16.gmra.mrb[0].mxu0 %v1056
        %v4189 = vpop.f32.mrb[0].mxu0
        %v4190 = vadd.f32 %v4137, %v4189
        %v4191 = vpop.f32.mrb[0].mxu0
        %v4192 = vadd.f32 %v4139, %v4191
        %v4193 = vpop.f32.mrb[0].mxu0
        %v4194 = vadd.f32 %v4141, %v4193
        %v4195 = vpop.f32.mrb[0].mxu0
        %v4196 = vadd.f32 %v4143, %v4195
        %4197 = vmatprep.mubr.bf16.mxu0 %v1073
        %4198 = vmatmul.mubr.bf16.gmra.mrb[0].mxu0 %v1072
        %v4199 = vpop.f32.mrb[0].mxu0
        %v4200 = vadd.f32 %v4147, %v4199
        %v4201 = vpop.f32.mrb[0].mxu0
        %v4202 = vadd.f32 %v4149, %v4201
        %v4203 = vpop.f32.mrb[0].mxu0
        %v4204 = vadd.f32 %v4151, %v4203
        %v4205 = vpop.f32.mrb[0].mxu0
        %v4206 = vadd.f32 %v4153, %v4205
        %4207 = vdwg.mxu0
        %4208 = vmatprep.subr.bf16.mxu0 %v2785
        %4209 = vmatpush1.bf16.msra.mxu0 %v2784
        %4210 = vmatprep.subr.bf16.mxu0 %v2789
        %4211 = vmatpush1.bf16.msra.mxu0 %v2788
        %4212 = vmatprep.subr.bf16.mxu0 %v2793
        %4213 = vmatpush1.bf16.msra.mxu0 %v2792
        %4214 = vmatprep.subr.bf16.mxu0 %v2797
        %4215 = vmatpush1.bf16.msra.mxu0 %v2796
        %4216 = vmatprep.subr.bf16.mxu0 %v2801
        %4217 = vmatpush1.bf16.msra.mxu0 %v2800
        %4218 = vmatprep.subr.bf16.mxu0 %v2805
        %4219 = vmatpush1.bf16.msra.mxu0 %v2804
        %4220 = vmatprep.subr.bf16.mxu0 %v2809
        %4221 = vmatpush1.bf16.msra.mxu0 %v2808
        %4222 = vmatprep.subr.bf16.mxu0 %v2813
        %4223 = vmatpush1.bf16.msra.mxu0 %v2812
        %4224 = vmatprep.subr.bf16.mxu0 %v2817
        %4225 = vmatpush1.bf16.msra.mxu0 %v2816
        %4226 = vmatprep.subr.bf16.mxu0 %v2821
        %4227 = vmatpush1.bf16.msra.mxu0 %v2820
        %4228 = vmatprep.subr.bf16.mxu0 %v2825
        %4229 = vmatpush1.bf16.msra.mxu0 %v2824
        %4230 = vmatprep.subr.bf16.mxu0 %v2829
        %4231 = vmatpush1.bf16.msra.mxu0 %v2828
        %4232 = vmatprep.subr.bf16.mxu0 %v2833
        %4233 = vmatpush1.bf16.msra.mxu0 %v2832
        %4234 = vmatprep.subr.bf16.mxu0 %v2837
        %4235 = vmatpush1.bf16.msra.mxu0 %v2836
        %4236 = vmatprep.subr.bf16.mxu0 %v2841
        %4237 = vmatpush1.bf16.msra.mxu0 %v2840
        %4238 = vmatprep.subr.bf16.mxu0 %v2845
        %4239 = vmatpush1.bf16.msra.mxu0 %v2844
        %4240 = vmatprep.mubr.bf16.mxu0 %v1059
        %4241 = vmatmul.mubr.bf16.gmra.mrb[0].mxu0 %v1058
        %v4242 = vpop.f32.mrb[0].mxu0
        %v4243 = vadd.f32 %v4190, %v4242
        %v4244 = vpop.f32.mrb[0].mxu0
        %v4245 = vadd.f32 %v4192, %v4244
        %v4246 = vpop.f32.mrb[0].mxu0
        %v4247 = vadd.f32 %v4194, %v4246
        %v4248 = vpop.f32.mrb[0].mxu0
        %v4249 = vadd.f32 %v4196, %v4248
        %4250 = vmatprep.mubr.bf16.mxu0 %v1075
        %4251 = vmatmul.mubr.bf16.gmra.mrb[0].mxu0 %v1074
        %v4252 = vpop.f32.mrb[0].mxu0
        %v4253 = vadd.f32 %v4200, %v4252
        %v4254 = vpop.f32.mrb[0].mxu0
        %v4255 = vadd.f32 %v4202, %v4254
        %v4256 = vpop.f32.mrb[0].mxu0
        %v4257 = vadd.f32 %v4204, %v4256
        %v4258 = vpop.f32.mrb[0].mxu0
        %v4259 = vadd.f32 %v4206, %v4258
        %4260 = vdwg.mxu0
        %4261 = vmatprep.subr.bf16.mxu0 %v2849
        %4262 = vmatpush1.bf16.msra.mxu0 %v2848
        %4263 = vmatprep.subr.bf16.mxu0 %v2853
        %4264 = vmatpush1.bf16.msra.mxu0 %v2852
        %4265 = vmatprep.subr.bf16.mxu0 %v2857
        %4266 = vmatpush1.bf16.msra.mxu0 %v2856
        %4267 = vmatprep.subr.bf16.mxu0 %v2861
        %4268 = vmatpush1.bf16.msra.mxu0 %v2860
        %4269 = vmatprep.subr.bf16.mxu0 %v2865
        %4270 = vmatpush1.bf16.msra.mxu0 %v2864
        %4271 = vmatprep.subr.bf16.mxu0 %v2869
        %4272 = vmatpush1.bf16.msra.mxu0 %v2868
        %4273 = vmatprep.subr.bf16.mxu0 %v2873
        %4274 = vmatpush1.bf16.msra.mxu0 %v2872
        %4275 = vmatprep.subr.bf16.mxu0 %v2877
        %4276 = vmatpush1.bf16.msra.mxu0 %v2876
        %4277 = vmatprep.subr.bf16.mxu0 %v2881
        %4278 = vmatpush1.bf16.msra.mxu0 %v2880
        %4279 = vmatprep.subr.bf16.mxu0 %v2885
        %4280 = vmatpush1.bf16.msra.mxu0 %v2884
        %4281 = vmatprep.subr.bf16.mxu0 %v2889
        %4282 = vmatpush1.bf16.msra.mxu0 %v2888
        %4283 = vmatprep.subr.bf16.mxu0 %v2893
        %4284 = vmatpush1.bf16.msra.mxu0 %v2892
        %4285 = vmatprep.subr.bf16.mxu0 %v2897
        %4286 = vmatpush1.bf16.msra.mxu0 %v2896
        %4287 = vmatprep.subr.bf16.mxu0 %v2901
        %4288 = vmatpush1.bf16.msra.mxu0 %v2900
        %4289 = vmatprep.subr.bf16.mxu0 %v2905
        %4290 = vmatpush1.bf16.msra.mxu0 %v2904
        %4291 = vmatprep.subr.bf16.mxu0 %v2909
        %4292 = vmatpush1.bf16.msra.mxu0 %v2908
        %4293 = vmatprep.mubr.bf16.mxu0 %v1061
        %4294 = vmatmul.mubr.bf16.gmra.mrb[0].mxu0 %v1060
        %v4295 = vpop.f32.mrb[0].mxu0
        %v4296 = vadd.f32 %v4243, %v4295
        %v4297 = vpop.f32.mrb[0].mxu0
        %v4298 = vadd.f32 %v4245, %v4297
        %v4299 = vpop.f32.mrb[0].mxu0
        %v4300 = vadd.f32 %v4247, %v4299
        %v4301 = vpop.f32.mrb[0].mxu0
        %v4302 = vadd.f32 %v4249, %v4301
        %4303 = vmatprep.mubr.bf16.mxu0 %v1077
        %4304 = vmatmul.mubr.bf16.gmra.mrb[0].mxu0 %v1076
        %v4305 = vpop.f32.mrb[0].mxu0
        %v4306 = vadd.f32 %v4253, %v4305
        %v4307 = vpop.f32.mrb[0].mxu0
        %v4308 = vadd.f32 %v4255, %v4307
        %v4309 = vpop.f32.mrb[0].mxu0
        %v4310 = vadd.f32 %v4257, %v4309
        %v4311 = vpop.f32.mrb[0].mxu0
        %v4312 = vadd.f32 %v4259, %v4311
        %4313 = vdwg.mxu0
        %4314 = vmatprep.subr.bf16.mxu0 %v2913
        %4315 = vmatpush1.bf16.msra.mxu0 %v2912
        %4316 = vmatprep.subr.bf16.mxu0 %v2917
        %4317 = vmatpush1.bf16.msra.mxu0 %v2916
        %4318 = vmatprep.subr.bf16.mxu0 %v2921
        %4319 = vmatpush1.bf16.msra.mxu0 %v2920
        %4320 = vmatprep.subr.bf16.mxu0 %v2925
        %4321 = vmatpush1.bf16.msra.mxu0 %v2924
        %4322 = vmatprep.subr.bf16.mxu0 %v2929
        %4323 = vmatpush1.bf16.msra.mxu0 %v2928
        %4324 = vmatprep.subr.bf16.mxu0 %v2933
        %4325 = vmatpush1.bf16.msra.mxu0 %v2932
        %4326 = vmatprep.subr.bf16.mxu0 %v2937
        %4327 = vmatpush1.bf16.msra.mxu0 %v2936
        %4328 = vmatprep.subr.bf16.mxu0 %v2941
        %4329 = vmatpush1.bf16.msra.mxu0 %v2940
        %4330 = vmatprep.subr.bf16.mxu0 %v2945
        %4331 = vmatpush1.bf16.msra.mxu0 %v2944
        %4332 = vmatprep.subr.bf16.mxu0 %v2949
        %4333 = vmatpush1.bf16.msra.mxu0 %v2948
        %4334 = vmatprep.subr.bf16.mxu0 %v2953
        %4335 = vmatpush1.bf16.msra.mxu0 %v2952
        %4336 = vmatprep.subr.bf16.mxu0 %v2957
        %4337 = vmatpush1.bf16.msra.mxu0 %v2956
        %4338 = vmatprep.subr.bf16.mxu0 %v2961
        %4339 = vmatpush1.bf16.msra.mxu0 %v2960
        %4340 = vmatprep.subr.bf16.mxu0 %v2965
        %4341 = vmatpush1.bf16.msra.mxu0 %v2964
        %4342 = vmatprep.subr.bf16.mxu0 %v2969
        %4343 = vmatpush1.bf16.msra.mxu0 %v2968
        %4344 = vmatprep.subr.bf16.mxu0 %v2973
        %4345 = vmatpush1.bf16.msra.mxu0 %v2972
        %4346 = vmatprep.mubr.bf16.mxu0 %v1063
        %4347 = vmatmul.mubr.bf16.gmra.mrb[0].mxu0 %v1062
        %v4348 = vpop.f32.mrb[0].mxu0
        %v4349 = vadd.f32 %v4296, %v4348
        %v4350 = vpop.f32.mrb[0].mxu0
        %v4351 = vadd.f32 %v4298, %v4350
        %v4352 = vpop.f32.mrb[0].mxu0
        %v4353 = vadd.f32 %v4300, %v4352
        %v4354 = vpop.f32.mrb[0].mxu0
        %v4355 = vadd.f32 %v4302, %v4354
        %4356 = vmatprep.mubr.bf16.mxu0 %v1079
        %4357 = vmatmul.mubr.bf16.gmra.mrb[0].mxu0 %v1078
        %v4358 = vpop.f32.mrb[0].mxu0
        %v4359 = vadd.f32 %v4306, %v4358
        %v4360 = vpop.f32.mrb[0].mxu0
        %v4361 = vadd.f32 %v4308, %v4360
        %v4362 = vpop.f32.mrb[0].mxu0
        %v4363 = vadd.f32 %v4310, %v4362
        %v4364 = vpop.f32.mrb[0].mxu0
        %v4365 = vadd.f32 %v4312, %v4364
        %4366 = vdwg.mxu0
        %4367 = vmatprep.subr.bf16.mxu0 %v2977
        %4368 = vmatpush1.bf16.msra.mxu0 %v2976
        %4369 = vmatprep.subr.bf16.mxu0 %v2981
        %4370 = vmatpush1.bf16.msra.mxu0 %v2980
        %4371 = vmatprep.subr.bf16.mxu0 %v2985
        %4372 = vmatpush1.bf16.msra.mxu0 %v2984
        %4373 = vmatprep.subr.bf16.mxu0 %v2989
        %4374 = vmatpush1.bf16.msra.mxu0 %v2988
        %4375 = vmatprep.subr.bf16.mxu0 %v2993
        %4376 = vmatpush1.bf16.msra.mxu0 %v2992
        %4377 = vmatprep.subr.bf16.mxu0 %v2997
        %4378 = vmatpush1.bf16.msra.mxu0 %v2996
        %4379 = vmatprep.subr.bf16.mxu0 %v3001
        %4380 = vmatpush1.bf16.msra.mxu0 %v3000
        %4381 = vmatprep.subr.bf16.mxu0 %v3005
        %4382 = vmatpush1.bf16.msra.mxu0 %v3004
        %4383 = vmatprep.subr.bf16.mxu0 %v3009
        %4384 = vmatpush1.bf16.msra.mxu0 %v3008
        %4385 = vmatprep.subr.bf16.mxu0 %v3013
        %4386 = vmatpush1.bf16.msra.mxu0 %v3012
        %4387 = vmatprep.subr.bf16.mxu0 %v3017
        %4388 = vmatpush1.bf16.msra.mxu0 %v3016
        %4389 = vmatprep.subr.bf16.mxu0 %v3021
        %4390 = vmatpush1.bf16.msra.mxu0 %v3020
        %4391 = vmatprep.subr.bf16.mxu0 %v3025
        %4392 = vmatpush1.bf16.msra.mxu0 %v3024
        %4393 = vmatprep.subr.bf16.mxu0 %v3029
        %4394 = vmatpush1.bf16.msra.mxu0 %v3028
        %4395 = vmatprep.subr.bf16.mxu0 %v3033
        %4396 = vmatpush1.bf16.msra.mxu0 %v3032
        %4397 = vmatprep.subr.bf16.mxu0 %v3037
        %4398 = vmatpush1.bf16.msra.mxu0 %v3036
        %4399 = vmatprep.mubr.bf16.mxu0 %v1065
        %4400 = vmatmul.mubr.bf16.gmra.mrb[0].mxu0 %v1064
        %v4401 = vpop.f32.mrb[0].mxu0
        %v4402 = vadd.f32 %v4349, %v4401
        %v4403 = vpop.f32.mrb[0].mxu0
        %v4404 = vadd.f32 %v4351, %v4403
        %v4405 = vpop.f32.mrb[0].mxu0
        %v4406 = vadd.f32 %v4353, %v4405
        %v4407 = vpop.f32.mrb[0].mxu0
        %v4408 = vadd.f32 %v4355, %v4407
        %4409 = vmatprep.mubr.bf16.mxu0 %v1081
        %4410 = vmatmul.mubr.bf16.gmra.mrb[0].mxu0 %v1080
        %v4411 = vpop.f32.mrb[0].mxu0
        %v4412 = vadd.f32 %v4359, %v4411
        %v4413 = vpop.f32.mrb[0].mxu0
        %v4414 = vadd.f32 %v4361, %v4413
        %v4415 = vpop.f32.mrb[0].mxu0
        %v4416 = vadd.f32 %v4363, %v4415
        %v4417 = vpop.f32.mrb[0].mxu0
        %v4418 = vadd.f32 %v4365, %v4417
        %4419 = vdwg.mxu0
        %4420 = vmatprep.subr.bf16.mxu0 %v3041
        %4421 = vmatpush1.bf16.msra.mxu0 %v3040
        %4422 = vmatprep.subr.bf16.mxu0 %v3045
        %4423 = vmatpush1.bf16.msra.mxu0 %v3044
        %4424 = vmatprep.subr.bf16.mxu0 %v3049
        %4425 = vmatpush1.bf16.msra.mxu0 %v3048
        %4426 = vmatprep.subr.bf16.mxu0 %v3053
        %4427 = vmatpush1.bf16.msra.mxu0 %v3052
        %4428 = vmatprep.subr.bf16.mxu0 %v3057
        %4429 = vmatpush1.bf16.msra.mxu0 %v3056
        %4430 = vmatprep.subr.bf16.mxu0 %v3061
        %4431 = vmatpush1.bf16.msra.mxu0 %v3060
        %4432 = vmatprep.subr.bf16.mxu0 %v3065
        %4433 = vmatpush1.bf16.msra.mxu0 %v3064
        %4434 = vmatprep.subr.bf16.mxu0 %v3069
        %4435 = vmatpush1.bf16.msra.mxu0 %v3068
        %4436 = vmatprep.subr.bf16.mxu0 %v3073
        %4437 = vmatpush1.bf16.msra.mxu0 %v3072
        %4438 = vmatprep.subr.bf16.mxu0 %v3077
        %4439 = vmatpush1.bf16.msra.mxu0 %v3076
        %4440 = vmatprep.subr.bf16.mxu0 %v3081
        %4441 = vmatpush1.bf16.msra.mxu0 %v3080
        %4442 = vmatprep.subr.bf16.mxu0 %v3085
        %4443 = vmatpush1.bf16.msra.mxu0 %v3084
        %4444 = vmatprep.subr.bf16.mxu0 %v3089
        %4445 = vmatpush1.bf16.msra.mxu0 %v3088
        %4446 = vmatprep.subr.bf16.mxu0 %v3093
        %4447 = vmatpush1.bf16.msra.mxu0 %v3092
        %4448 = vmatprep.subr.bf16.mxu0 %v3097
        %4449 = vmatpush1.bf16.msra.mxu0 %v3096
        %4450 = vmatprep.subr.bf16.mxu0 %v3101
        %4451 = vmatpush1.bf16.msra.mxu0 %v3100
        %4452 = vmatprep.mubr.bf16.mxu0 %v1067
        %4453 = vmatmul.mubr.bf16.gmra.mrb[0].mxu0 %v1066
        %v4454 = vpop.f32.mrb[0].mxu0
        %v4455 = vadd.f32 %v4402, %v4454
        %v4456 = vpop.f32.mrb[0].mxu0
        %v4457 = vadd.f32 %v4404, %v4456
        %v4458 = vpop.f32.mrb[0].mxu0
        %v4459 = vadd.f32 %v4406, %v4458
        %v4460 = vpop.f32.mrb[0].mxu0
        %v4461 = vadd.f32 %v4408, %v4460
        %4462 = vmatprep.mubr.bf16.mxu0 %v1083
        %4463 = vmatmul.mubr.bf16.gmra.mrb[0].mxu0 %v1082
        %v4464 = vpop.f32.mrb[0].mxu0
        %v4465 = vadd.f32 %v4412, %v4464
        %v4466 = vpop.f32.mrb[0].mxu0
        %v4467 = vadd.f32 %v4414, %v4466
        %v4468 = vpop.f32.mrb[0].mxu0
        %v4469 = vadd.f32 %v4416, %v4468
        %v4470 = vpop.f32.mrb[0].mxu0
        %v4471 = vadd.f32 %v4418, %v4470
        %4472 = vdwg.mxu0
        %4473 = vmatprep.subr.bf16.mxu0 %v3105
        %4474 = vmatpush1.bf16.msra.mxu0 %v3104
        %4475 = vmatprep.subr.bf16.mxu0 %v3109
        %4476 = vmatpush1.bf16.msra.mxu0 %v3108
        %4477 = vmatprep.subr.bf16.mxu0 %v3113
        %4478 = vmatpush1.bf16.msra.mxu0 %v3112
        %4479 = vmatprep.subr.bf16.mxu0 %v3117
        %4480 = vmatpush1.bf16.msra.mxu0 %v3116
        %4481 = vmatprep.subr.bf16.mxu0 %v3121
        %4482 = vmatpush1.bf16.msra.mxu0 %v3120
        %4483 = vmatprep.subr.bf16.mxu0 %v3125
        %4484 = vmatpush1.bf16.msra.mxu0 %v3124
        %4485 = vmatprep.subr.bf16.mxu0 %v3129
        %4486 = vmatpush1.bf16.msra.mxu0 %v3128
        %4487 = vmatprep.subr.bf16.mxu0 %v3133
        %4488 = vmatpush1.bf16.msra.mxu0 %v3132
        %4489 = vmatprep.subr.bf16.mxu0 %v3137
        %4490 = vmatpush1.bf16.msra.mxu0 %v3136
        %4491 = vmatprep.subr.bf16.mxu0 %v3141
        %4492 = vmatpush1.bf16.msra.mxu0 %v3140
        %4493 = vmatprep.subr.bf16.mxu0 %v3145
        %4494 = vmatpush1.bf16.msra.mxu0 %v3144
        %4495 = vmatprep.subr.bf16.mxu0 %v3149
        %4496 = vmatpush1.bf16.msra.mxu0 %v3148
        %4497 = vmatprep.subr.bf16.mxu0 %v3153
        %4498 = vmatpush1.bf16.msra.mxu0 %v3152
        %4499 = vmatprep.subr.bf16.mxu0 %v3157
        %4500 = vmatpush1.bf16.msra.mxu0 %v3156
        %4501 = vmatprep.subr.bf16.mxu0 %v3161
        %4502 = vmatpush1.bf16.msra.mxu0 %v3160
        %4503 = vmatprep.subr.bf16.mxu0 %v3165
        %4504 = vmatpush1.bf16.msra.mxu0 %v3164
        %4505 = vmatprep.mubr.bf16.mxu0 %v1069
        %4506 = vmatmul.mubr.bf16.gmra.mrb[0].mxu0 %v1068
        %v4507 = vpop.f32.mrb[0].mxu0
        %v4508 = vadd.f32 %v4455, %v4507
        %v4509 = vpop.f32.mrb[0].mxu0
        %v4510 = vadd.f32 %v4457, %v4509
        %v4511 = vpop.f32.mrb[0].mxu0
        %v4512 = vadd.f32 %v4459, %v4511
        %v4513 = vpop.f32.mrb[0].mxu0
        %v4514 = vadd.f32 %v4461, %v4513
        %4515 = vmatprep.mubr.bf16.mxu0 %v1085
        %4516 = vmatmul.mubr.bf16.gmra.mrb[0].mxu0 %v1084
        %v4517 = vpop.f32.mrb[0].mxu0
        %v4518 = vadd.f32 %v4465, %v4517
        %v4519 = vpop.f32.mrb[0].mxu0
        %v4520 = vadd.f32 %v4467, %v4519
        %v4521 = vpop.f32.mrb[0].mxu0
        %v4522 = vadd.f32 %v4469, %v4521
        %v4523 = vpop.f32.mrb[0].mxu0
        %v4524 = vadd.f32 %v4471, %v4523
        %4525 = vdwg.mxu0
        %v4526 = vadd.f32 %v398, %v4084
        %v4527 = vadd.f32 %v399, %v4086
        %v4528 = vadd.f32 %v400, %v4508
        %v4529 = vadd.f32 %v401, %v4510
        %v4530 = vadd.f32 %v402, %v4088
        %v4531 = vadd.f32 %v403, %v4090
        %v4532 = vadd.f32 %v404, %v4512
        %v4533 = vadd.f32 %v405, %v4514
        %v4534 = vadd.f32 %v406, %v4094
        %v4535 = vadd.f32 %v407, %v4096
        %v4536 = vadd.f32 %v408, %v4518
        %v4537 = vadd.f32 %v409, %v4520
        %v4538 = vadd.f32 %v410, %v4098
        %v4539 = vadd.f32 %v411, %v4100
        %v4540 = vadd.f32 %v412, %v4522
        %v4541 = vadd.f32 %v413, %v4524
        %4542 = vst [vmem:[#allocation2] sm:$0xff] %v4526
        %4543 = vst [vmem:[#allocation2 + $0x8] sm:$0xff] %v4527
        %4544 = vst [vmem:[#allocation2 + $0x10] sm:$0xff] %v4528
        %4545 = vst [vmem:[#allocation2 + $0x18] sm:$0xff] %v4529
        %4546 = vst [vmem:[#allocation2 + $0x20] sm:$0xff] %v4530
        %4547 = vst [vmem:[#allocation2 + $0x28] sm:$0xff] %v4531
        %4548 = vst [vmem:[#allocation2 + $0x30] sm:$0xff] %v4532
        %4549 = vst [vmem:[#allocation2 + $0x38] sm:$0xff] %v4533
        %4550 = vst [vmem:[#allocation2 + $0x40] sm:$0xff] %v4534
        %4551 = vst [vmem:[#allocation2 + $0x48] sm:$0xff] %v4535
        %4552 = vst [vmem:[#allocation2 + $0x50] sm:$0xff] %v4536
        %4553 = vst [vmem:[#allocation2 + $0x58] sm:$0xff] %v4537
        %4554 = vst [vmem:[#allocation2 + $0x60] sm:$0xff] %v4538
        %4555 = vst [vmem:[#allocation2 + $0x68] sm:$0xff] %v4539
        %4556 = vst [vmem:[#allocation2 + $0x70] sm:$0xff] %v4540
        %4557 = vst [vmem:[#allocation2 + $0x78] sm:$0xff] %v4541
        %p4558 = scmp.eq.s32.totalorder %s31, 8
        // Predicated region
        $region73: #{tpu_custom_call.1} parent=43 // pred_check
          %p4559 = pneg %p4558
        $region74: #{tpu_custom_call.1} parent=43 // pred_check_branch
          %4561 = sbr.rel (%p4559) target = $region76
        $region75: #{tpu_custom_call.1} parent=43 // pred_region
          %v4562 = vld [vmem:[#allocation2] sm:$0xff]
          %v4563 = vld [vmem:[#allocation2 + $0x8] sm:$0xff]
          %v4564 = vld [vmem:[#allocation2 + $0x10] sm:$0xff]
          %v4565 = vld [vmem:[#allocation2 + $0x18] sm:$0xff]
          %v4566 = vld [vmem:[#allocation2 + $0x20] sm:$0xff]
          %v4567 = vld [vmem:[#allocation2 + $0x28] sm:$0xff]
          %v4568 = vld [vmem:[#allocation2 + $0x30] sm:$0xff]
          %v4569 = vld [vmem:[#allocation2 + $0x38] sm:$0xff]
          %v4570 = vld [vmem:[#allocation2 + $0x40] sm:$0xff]
          %v4571 = vld [vmem:[#allocation2 + $0x48] sm:$0xff]
          %v4572 = vld [vmem:[#allocation2 + $0x50] sm:$0xff]
          %v4573 = vld [vmem:[#allocation2 + $0x58] sm:$0xff]
          %v4574 = vld [vmem:[#allocation2 + $0x60] sm:$0xff]
          %v4575 = vld [vmem:[#allocation2 + $0x68] sm:$0xff]
          %v4576 = vld [vmem:[#allocation2 + $0x70] sm:$0xff]
          %v4577 = vld [vmem:[#allocation2 + $0x78] sm:$0xff]
          %v4578 = vld [vmem:[#allocation8] sm:$0xf]
          %v4580 = vlaneseq
          %v4581 = vshrl.u32 %v4580, 7
          %v4582 = vsub.s32 0, %v4581
          %v4583 = vrot.slane %v4578, %v4582
          %v4584 = vlaneseq
          %v4585 = vshrl.u32 %v4584, 7
          %v4586 = vsub.s32 1, %v4585
          %v4587 = vrot.slane %v4578, %v4586
          %v4588 = vlaneseq
          %v4589 = vshrl.u32 %v4588, 7
          %v4590 = vsub.s32 2, %v4589
          %v4591 = vrot.slane %v4578, %v4590
          %v4592 = vlaneseq
          %v4593 = vshrl.u32 %v4592, 7
          %v4594 = vsub.s32 3, %v4593
          %v4595 = vrot.slane %v4578, %v4594
          %v4600 = vmul.f32 %v4562, %v4583
          %v4601 = vmul.f32 %v4563, %v4587
          %v4602 = vmul.f32 %v4564, %v4591
          %v4603 = vmul.f32 %v4565, %v4595
          %v4604 = vmul.f32 %v4566, %v4583
          %v4605 = vmul.f32 %v4567, %v4587
          %v4606 = vmul.f32 %v4568, %v4591
          %v4607 = vmul.f32 %v4569, %v4595
          %v4608 = vmul.f32 %v4570, %v4583
          %v4609 = vmul.f32 %v4571, %v4587
          %v4610 = vmul.f32 %v4572, %v4591
          %v4611 = vmul.f32 %v4573, %v4595
          %v4612 = vmul.f32 %v4574, %v4583
          %v4613 = vmul.f32 %v4575, %v4587
          %v4614 = vmul.f32 %v4576, %v4591
          %v4615 = vmul.f32 %v4577, %v4595
          %v4616 = vld [vmem:[#allocation9] sm:$0xf]
          %v4618 = vlaneseq
          %v4619 = vshrl.u32 %v4618, 7
          %v4620 = vsub.s32 0, %v4619
          %v4621 = vrot.slane %v4616, %v4620
          %v4622 = vlaneseq
          %v4623 = vshrl.u32 %v4622, 7
          %v4624 = vsub.s32 1, %v4623
          %v4625 = vrot.slane %v4616, %v4624
          %v4626 = vlaneseq
          %v4627 = vshrl.u32 %v4626, 7
          %v4628 = vsub.s32 2, %v4627
          %v4629 = vrot.slane %v4616, %v4628
          %v4630 = vlaneseq
          %v4631 = vshrl.u32 %v4630, 7
          %v4632 = vsub.s32 3, %v4631
          %v4633 = vrot.slane %v4616, %v4632
          %v4638 = vadd.f32 %v4600, %v4621
          %v4639 = vadd.f32 %v4601, %v4625
          %v4640 = vadd.f32 %v4602, %v4629
          %v4641 = vadd.f32 %v4603, %v4633
          %v4642 = vadd.f32 %v4604, %v4621
          %v4643 = vadd.f32 %v4605, %v4625
          %v4644 = vadd.f32 %v4606, %v4629
          %v4645 = vadd.f32 %v4607, %v4633
          %v4646 = vadd.f32 %v4608, %v4621
          %v4647 = vadd.f32 %v4609, %v4625
          %v4648 = vadd.f32 %v4610, %v4629
          %v4649 = vadd.f32 %v4611, %v4633
          %v4650 = vadd.f32 %v4612, %v4621
          %v4651 = vadd.f32 %v4613, %v4625
          %v4652 = vadd.f32 %v4614, %v4629
          %v4653 = vadd.f32 %v4615, %v4633
          %v4654 = vmax.f32 %v4638, 0.0
          %v4655 = vmax.f32 %v4639, 0.0
          %v4656 = vmax.f32 %v4640, 0.0
          %v4657 = vmax.f32 %v4641, 0.0
          %v4658 = vmax.f32 %v4642, 0.0
          %v4659 = vmax.f32 %v4643, 0.0
          %v4660 = vmax.f32 %v4644, 0.0
          %v4661 = vmax.f32 %v4645, 0.0
          %v4662 = vmax.f32 %v4646, 0.0
          %v4663 = vmax.f32 %v4647, 0.0
          %v4664 = vmax.f32 %v4648, 0.0
          %v4665 = vmax.f32 %v4649, 0.0
          %v4666 = vmax.f32 %v4650, 0.0
          %v4667 = vmax.f32 %v4651, 0.0
          %v4668 = vmax.f32 %v4652, 0.0
          %v4669 = vmax.f32 %v4653, 0.0
          %v4670 = vpack.c.bf16 %v4658, %v4654
          %v4671 = vpack.c.bf16 %v4659, %v4655
          %v4672 = vpack.c.bf16 %v4660, %v4656
          %v4673 = vpack.c.bf16 %v4661, %v4657
          %v4674 = vpack.c.bf16 %v4666, %v4662
          %v4675 = vpack.c.bf16 %v4667, %v4663
          %v4676 = vpack.c.bf16 %v4668, %v4664
          %v4677 = vpack.c.bf16 %v4669, %v4665
          %v4678 = vld [vmem:[#allocation11] sm:$0xf]
          %v4679 = vld [vmem:[#allocation11 + $0x4] sm:$0xf]
          %v4680 = vld [vmem:[#allocation11 + $0x8] sm:$0xf]
          %v4681 = vld [vmem:[#allocation11 + $0xc] sm:$0xf]
          %v4682 = vld [vmem:[#allocation11 + $0x10] sm:$0xf]
          %v4683 = vld [vmem:[#allocation11 + $0x14] sm:$0xf]
          %v4684 = vld [vmem:[#allocation11 + $0x18] sm:$0xf]
          %v4685 = vld [vmem:[#allocation11 + $0x1c] sm:$0xf]
          %v4686 = vld [vmem:[#allocation11 + $0x20] sm:$0xf]
          %v4687 = vld [vmem:[#allocation11 + $0x24] sm:$0xf]
          %v4688 = vld [vmem:[#allocation11 + $0x28] sm:$0xf]
          %v4689 = vld [vmem:[#allocation11 + $0x2c] sm:$0xf]
          %v4690 = vld [vmem:[#allocation11 + $0x30] sm:$0xf]
          %v4691 = vld [vmem:[#allocation11 + $0x34] sm:$0xf]
          %v4692 = vld [vmem:[#allocation11 + $0x38] sm:$0xf]
          %v4693 = vld [vmem:[#allocation11 + $0x3c] sm:$0xf]
          %v4694 = vld [vmem:[#allocation11 + $0x40] sm:$0xf]
          %v4695 = vld [vmem:[#allocation11 + $0x44] sm:$0xf]
          %v4696 = vld [vmem:[#allocation11 + $0x48] sm:$0xf]
          %v4697 = vld [vmem:[#allocation11 + $0x4c] sm:$0xf]
          %v4698 = vld [vmem:[#allocation11 + $0x50] sm:$0xf]
          %v4699 = vld [vmem:[#allocation11 + $0x54] sm:$0xf]
          %v4700 = vld [vmem:[#allocation11 + $0x58] sm:$0xf]
          %v4701 = vld [vmem:[#allocation11 + $0x5c] sm:$0xf]
          %v4702 = vld [vmem:[#allocation11 + $0x60] sm:$0xf]
          %v4703 = vld [vmem:[#allocation11 + $0x64] sm:$0xf]
          %v4704 = vld [vmem:[#allocation11 + $0x68] sm:$0xf]
          %v4705 = vld [vmem:[#allocation11 + $0x6c] sm:$0xf]
          %v4706 = vld [vmem:[#allocation11 + $0x70] sm:$0xf]
          %v4707 = vld [vmem:[#allocation11 + $0x74] sm:$0xf]
          %v4708 = vld [vmem:[#allocation11 + $0x78] sm:$0xf]
          %v4709 = vld [vmem:[#allocation11 + $0x7c] sm:$0xf]
          %v4710 = vld [vmem:[#allocation11 + $0x80] sm:$0xf]
          %v4711 = vld [vmem:[#allocation11 + $0x84] sm:$0xf]
          %v4712 = vld [vmem:[#allocation11 + $0x88] sm:$0xf]
          %v4713 = vld [vmem:[#allocation11 + $0x8c] sm:$0xf]
          %v4714 = vld [vmem:[#allocation11 + $0x90] sm:$0xf]
          %v4715 = vld [vmem:[#allocation11 + $0x94] sm:$0xf]
          %v4716 = vld [vmem:[#allocation11 + $0x98] sm:$0xf]
          %v4717 = vld [vmem:[#allocation11 + $0x9c] sm:$0xf]
          %v4718 = vld [vmem:[#allocation11 + $0xa0] sm:$0xf]
          %v4719 = vld [vmem:[#allocation11 + $0xa4] sm:$0xf]
          %v4720 = vld [vmem:[#allocation11 + $0xa8] sm:$0xf]
          %v4721 = vld [vmem:[#allocation11 + $0xac] sm:$0xf]
          %v4722 = vld [vmem:[#allocation11 + $0xb0] sm:$0xf]
          %v4723 = vld [vmem:[#allocation11 + $0xb4] sm:$0xf]
          %v4724 = vld [vmem:[#allocation11 + $0xb8] sm:$0xf]
          %v4725 = vld [vmem:[#allocation11 + $0xbc] sm:$0xf]
          %v4726 = vld [vmem:[#allocation11 + $0xc0] sm:$0xf]
          %v4727 = vld [vmem:[#allocation11 + $0xc4] sm:$0xf]
          %v4728 = vld [vmem:[#allocation11 + $0xc8] sm:$0xf]
          %v4729 = vld [vmem:[#allocation11 + $0xcc] sm:$0xf]
          %v4730 = vld [vmem:[#allocation11 + $0xd0] sm:$0xf]
          %v4731 = vld [vmem:[#allocation11 + $0xd4] sm:$0xf]
          %v4732 = vld [vmem:[#allocation11 + $0xd8] sm:$0xf]
          %v4733 = vld [vmem:[#allocation11 + $0xdc] sm:$0xf]
          %v4734 = vld [vmem:[#allocation11 + $0xe0] sm:$0xf]
          %v4735 = vld [vmem:[#allocation11 + $0xe4] sm:$0xf]
          %v4736 = vld [vmem:[#allocation11 + $0xe8] sm:$0xf]
          %v4737 = vld [vmem:[#allocation11 + $0xec] sm:$0xf]
          %v4738 = vld [vmem:[#allocation11 + $0xf0] sm:$0xf]
          %v4739 = vld [vmem:[#allocation11 + $0xf4] sm:$0xf]
          %v4740 = vld [vmem:[#allocation11 + $0xf8] sm:$0xf]
          %v4741 = vld [vmem:[#allocation11 + $0xfc] sm:$0xf]
          %v4742 = vld [vmem:[#allocation12] sm:$0x1]
          %v4744 = vlaneseq
          %v4745 = vshrl.u32 %v4744, 7
          %v4746 = vsub.s32 0, %v4745
          %v4747 = vrot.slane %v4742, %v4746
          %v4813 = vunpack.c.l.b16 %v4678
          %v4814 = vunpack.c.l.b16 %v4679
          %v4815 = vunpack.c.l.b16 %v4680
          %v4816 = vunpack.c.l.b16 %v4681
          %v4817 = vunpack.c.l.b16 %v4682
          %v4818 = vunpack.c.l.b16 %v4683
          %v4819 = vunpack.c.l.b16 %v4684
          %v4820 = vunpack.c.l.b16 %v4685
          %v4821 = vunpack.c.l.b16 %v4686
          %v4822 = vunpack.c.l.b16 %v4687
          %v4823 = vunpack.c.l.b16 %v4688
          %v4824 = vunpack.c.l.b16 %v4689
          %v4825 = vunpack.c.l.b16 %v4690
          %v4826 = vunpack.c.l.b16 %v4691
          %v4827 = vunpack.c.l.b16 %v4692
          %v4828 = vunpack.c.l.b16 %v4693
          %v4829 = vunpack.c.l.b16 %v4694
          %v4830 = vunpack.c.l.b16 %v4695
          %v4831 = vunpack.c.l.b16 %v4696
          %v4832 = vunpack.c.l.b16 %v4697
          %v4833 = vunpack.c.l.b16 %v4698
          %v4834 = vunpack.c.l.b16 %v4699
          %v4835 = vunpack.c.l.b16 %v4700
          %v4836 = vunpack.c.l.b16 %v4701
          %v4837 = vunpack.c.l.b16 %v4702
          %v4838 = vunpack.c.l.b16 %v4703
          %v4839 = vunpack.c.l.b16 %v4704
          %v4840 = vunpack.c.l.b16 %v4705
          %v4841 = vunpack.c.l.b16 %v4706
          %v4842 = vunpack.c.l.b16 %v4707
          %v4843 = vunpack.c.l.b16 %v4708
          %v4844 = vunpack.c.l.b16 %v4709
          %v4845 = vunpack.c.l.b16 %v4710
          %v4846 = vunpack.c.l.b16 %v4711
          %v4847 = vunpack.c.l.b16 %v4712
          %v4848 = vunpack.c.l.b16 %v4713
          %v4849 = vunpack.c.l.b16 %v4714
          %v4850 = vunpack.c.l.b16 %v4715
          %v4851 = vunpack.c.l.b16 %v4716
          %v4852 = vunpack.c.l.b16 %v4717
          %v4853 = vunpack.c.l.b16 %v4718
          %v4854 = vunpack.c.l.b16 %v4719
          %v4855 = vunpack.c.l.b16 %v4720
          %v4856 = vunpack.c.l.b16 %v4721
          %v4857 = vunpack.c.l.b16 %v4722
          %v4858 = vunpack.c.l.b16 %v4723
          %v4859 = vunpack.c.l.b16 %v4724
          %v4860 = vunpack.c.l.b16 %v4725
          %v4861 = vunpack.c.l.b16 %v4726
          %v4862 = vunpack.c.l.b16 %v4727
          %v4863 = vunpack.c.l.b16 %v4728
          %v4864 = vunpack.c.l.b16 %v4729
          %v4865 = vunpack.c.l.b16 %v4730
          %v4866 = vunpack.c.l.b16 %v4731
          %v4867 = vunpack.c.l.b16 %v4732
          %v4868 = vunpack.c.l.b16 %v4733
          %v4869 = vunpack.c.l.b16 %v4734
          %v4870 = vunpack.c.l.b16 %v4735
          %v4871 = vunpack.c.l.b16 %v4736
          %v4872 = vunpack.c.l.b16 %v4737
          %v4873 = vunpack.c.l.b16 %v4738
          %v4874 = vunpack.c.l.b16 %v4739
          %v4875 = vunpack.c.l.b16 %v4740
          %v4876 = vunpack.c.l.b16 %v4741
          %v4877 = vpack.c.b16 %v4814, %v4813
          %v4878 = vpack.c.b16 %v4816, %v4815
          %v4879 = vpack.c.b16 %v4818, %v4817
          %v4880 = vpack.c.b16 %v4820, %v4819
          %v4881 = vpack.c.b16 %v4822, %v4821
          %v4882 = vpack.c.b16 %v4824, %v4823
          %v4883 = vpack.c.b16 %v4826, %v4825
          %v4884 = vpack.c.b16 %v4828, %v4827
          %v4885 = vpack.c.b16 %v4830, %v4829
          %v4886 = vpack.c.b16 %v4832, %v4831
          %v4887 = vpack.c.b16 %v4834, %v4833
          %v4888 = vpack.c.b16 %v4836, %v4835
          %v4889 = vpack.c.b16 %v4838, %v4837
          %v4890 = vpack.c.b16 %v4840, %v4839
          %v4891 = vpack.c.b16 %v4842, %v4841
          %v4892 = vpack.c.b16 %v4844, %v4843
          %v4893 = vpack.c.b16 %v4846, %v4845
          %v4894 = vpack.c.b16 %v4848, %v4847
          %v4895 = vpack.c.b16 %v4850, %v4849
          %v4896 = vpack.c.b16 %v4852, %v4851
          %v4897 = vpack.c.b16 %v4854, %v4853
          %v4898 = vpack.c.b16 %v4856, %v4855
          %v4899 = vpack.c.b16 %v4858, %v4857
          %v4900 = vpack.c.b16 %v4860, %v4859
          %v4901 = vpack.c.b16 %v4862, %v4861
          %v4902 = vpack.c.b16 %v4864, %v4863
          %v4903 = vpack.c.b16 %v4866, %v4865
          %v4904 = vpack.c.b16 %v4868, %v4867
          %v4905 = vpack.c.b16 %v4870, %v4869
          %v4906 = vpack.c.b16 %v4872, %v4871
          %v4907 = vpack.c.b16 %v4874, %v4873
          %v4908 = vpack.c.b16 %v4876, %v4875
          %4941 = vmatprep.subr.bf16.mxu0 0
          %4942 = vmatpush1.bf16.msra.mxu0 %v4877
          %4943 = vmatprep.subr.bf16.mxu0 0
          %4944 = vmatpush1.bf16.msra.mxu0 %v4878
          %4945 = vmatprep.subr.bf16.mxu0 0
          %4946 = vmatpush1.bf16.msra.mxu0 %v4879
          %4947 = vmatprep.subr.bf16.mxu0 0
          %4948 = vmatpush1.bf16.msra.mxu0 %v4880
          %4949 = vmatprep.subr.bf16.mxu0 0
          %4950 = vmatpush1.bf16.msra.mxu0 %v4881
          %4951 = vmatprep.subr.bf16.mxu0 0
          %4952 = vmatpush1.bf16.msra.mxu0 %v4882
          %4953 = vmatprep.subr.bf16.mxu0 0
          %4954 = vmatpush1.bf16.msra.mxu0 %v4883
          %4955 = vmatprep.subr.bf16.mxu0 0
          %4956 = vmatpush1.bf16.msra.mxu0 %v4884
          %4957 = vmatprep.subr.bf16.mxu0 0
          %4958 = vmatpush1.bf16.msra.mxu0 %v4885
          %4959 = vmatprep.subr.bf16.mxu0 0
          %4960 = vmatpush1.bf16.msra.mxu0 %v4886
          %4961 = vmatprep.subr.bf16.mxu0 0
          %4962 = vmatpush1.bf16.msra.mxu0 %v4887
          %4963 = vmatprep.subr.bf16.mxu0 0
          %4964 = vmatpush1.bf16.msra.mxu0 %v4888
          %4965 = vmatprep.subr.bf16.mxu0 0
          %4966 = vmatpush1.bf16.msra.mxu0 %v4889
          %4967 = vmatprep.subr.bf16.mxu0 0
          %4968 = vmatpush1.bf16.msra.mxu0 %v4890
          %4969 = vmatprep.subr.bf16.mxu0 0
          %4970 = vmatpush1.bf16.msra.mxu0 %v4891
          %4971 = vmatprep.subr.bf16.mxu0 0
          %4972 = vmatpush1.bf16.msra.mxu0 %v4892
          %4973 = vmatprep.mubr.bf16.mxu0 %v4671
          %4974 = vmatmul.mubr.bf16.gmra.mrb[0].mxu0 %v4670
          %v4975 = vpop.f32.mrb[0].mxu0
          %v4976 = vadd.f32 %v4747, %v4975
          %v4977 = vpop.f32.mrb[0].mxu0
          %v4978 = vpop.f32.mrb[0].mxu0
          %v4979 = vadd.f32 %v4747, %v4978
          %v4980 = vpop.f32.mrb[0].mxu0
          %4981 = vmatprep.mubr.bf16.mxu0 %v4675
          %4982 = vmatmul.mubr.bf16.gmra.mrb[0].mxu0 %v4674
          %v4983 = vpop.f32.mrb[0].mxu0
          %v4984 = vadd.f32 %v4747, %v4983
          %v4985 = vpop.f32.mrb[0].mxu0
          %v4986 = vpop.f32.mrb[0].mxu0
          %v4987 = vadd.f32 %v4747, %v4986
          %v4988 = vpop.f32.mrb[0].mxu0
          %4989 = vdwg.mxu0
          %4990 = vmatprep.subr.bf16.mxu0 0
          %4991 = vmatpush1.bf16.msra.mxu0 %v4893
          %4992 = vmatprep.subr.bf16.mxu0 0
          %4993 = vmatpush1.bf16.msra.mxu0 %v4894
          %4994 = vmatprep.subr.bf16.mxu0 0
          %4995 = vmatpush1.bf16.msra.mxu0 %v4895
          %4996 = vmatprep.subr.bf16.mxu0 0
          %4997 = vmatpush1.bf16.msra.mxu0 %v4896
          %4998 = vmatprep.subr.bf16.mxu0 0
          %4999 = vmatpush1.bf16.msra.mxu0 %v4897
          %5000 = vmatprep.subr.bf16.mxu0 0
          %5001 = vmatpush1.bf16.msra.mxu0 %v4898
          %5002 = vmatprep.subr.bf16.mxu0 0
          %5003 = vmatpush1.bf16.msra.mxu0 %v4899
          %5004 = vmatprep.subr.bf16.mxu0 0
          %5005 = vmatpush1.bf16.msra.mxu0 %v4900
          %5006 = vmatprep.subr.bf16.mxu0 0
          %5007 = vmatpush1.bf16.msra.mxu0 %v4901
          %5008 = vmatprep.subr.bf16.mxu0 0
          %5009 = vmatpush1.bf16.msra.mxu0 %v4902
          %5010 = vmatprep.subr.bf16.mxu0 0
          %5011 = vmatpush1.bf16.msra.mxu0 %v4903
          %5012 = vmatprep.subr.bf16.mxu0 0
          %5013 = vmatpush1.bf16.msra.mxu0 %v4904
          %5014 = vmatprep.subr.bf16.mxu0 0
          %5015 = vmatpush1.bf16.msra.mxu0 %v4905
          %5016 = vmatprep.subr.bf16.mxu0 0
          %5017 = vmatpush1.bf16.msra.mxu0 %v4906
          %5018 = vmatprep.subr.bf16.mxu0 0
          %5019 = vmatpush1.bf16.msra.mxu0 %v4907
          %5020 = vmatprep.subr.bf16.mxu0 0
          %5021 = vmatpush1.bf16.msra.mxu0 %v4908
          %5022 = vmatprep.mubr.bf16.mxu0 %v4673
          %5023 = vmatmul.mubr.bf16.gmra.mrb[0].mxu0 %v4672
          %v5024 = vpop.f32.mrb[0].mxu0
          %v5025 = vadd.f32 %v4976, %v5024
          %v5026 = vpop.f32.mrb[0].mxu0
          %v5027 = vpop.f32.mrb[0].mxu0
          %v5028 = vadd.f32 %v4979, %v5027
          %v5029 = vpop.f32.mrb[0].mxu0
          %5030 = vmatprep.mubr.bf16.mxu0 %v4677
          %5031 = vmatmul.mubr.bf16.gmra.mrb[0].mxu0 %v4676
          %v5032 = vpop.f32.mrb[0].mxu0
          %v5033 = vadd.f32 %v4984, %v5032
          %v5034 = vpop.f32.mrb[0].mxu0
          %v5035 = vpop.f32.mrb[0].mxu0
          %v5036 = vadd.f32 %v4987, %v5035
          %v5037 = vpop.f32.mrb[0].mxu0
          %5038 = vdwg.mxu0
          %5039 = vst [vmem:[#allocation14] sm:$0xff] %v5025
          %5040 = vst [vmem:[#allocation14 + $0x8] sm:$0xff] %v5028
          %5041 = vst [vmem:[#allocation14 + $0x10] sm:$0xff] %v5033
          %5042 = vst [vmem:[#allocation14 + $0x18] sm:$0xff] %v5036
        $region76: #{tpu_custom_call.1} parent=43 // pred_fallthru
          _
        // Predicated region
        $region77: #{tpu_custom_call.1} parent=43 // pred_check
          %p5043 = pneg %p194
        $region78: #{tpu_custom_call.1} parent=43 // pred_check_branch
          %5045 = sbr.rel (%p5043) target = $region80
        $region79: #{tpu_custom_call.1} parent=43 // pred_region
          %s5046 = smul.u32 4, %s30
          %s5048 = ssub.s32 512, 512
          %5049 = vsyncadd [#allocation5], %s5048
          %s5050 = smul.addr %s5046, 128
          %s5051 = scalar_lea.hbm %s6, %s5050
          %s5052 = sshll.u32 [#allocation14], 4
          %s5053 = int_to_ptr.vmem [resolvable:$true] %s5052
          %5058 = dma.vmem_to_hbm [thread:$0]  %s5053, 512, %s5051, [#allocation5], 128, 128, 8
        $region80: #{tpu_custom_call.1} parent=43 // pred_fallthru
          _
        // Predicated region
        $region81: #{tpu_custom_call.1} parent=43 // pred_check
          %p5059 = pneg %p194
        $region82: #{tpu_custom_call.1} parent=43 // pred_check_branch
          %5061 = sbr.rel (%p5059) target = $region84
        $region83: #{tpu_custom_call.1} parent=43 // pred_region
          %5062 = dma.done [#allocation5], 512
        $region84: #{tpu_custom_call.1} parent=43 // pred_fallthru
          _
      $region44: #{tpu_custom_call.1} parent=5 // pred_fallthru
        _
      %p5063 = scmp.le.s32.totalorder 2, %s21
      // Predicated region
      $region85: #{tpu_custom_call.1} parent=5 // pred_check
        %p5064 = pneg %p5063
      $region86: #{tpu_custom_call.1} parent=5 // pred_check_branch
        %5066 = sbr.rel (%p5064) target = $region88
      $region87: #{tpu_custom_call.1} parent=5 // pred_region
        %s5067 = ssub.s32 %s21, 2
      $region88: #{tpu_custom_call.1} parent=5 // pred_fallthru
        _
    $region6: #{tpu_custom_call.1} parent=1 // loop_footer
      %s25 = sadd.s32 1, %s21
    $region7: #{tpu_custom_call.1} parent=1 // loop_footer_branch
      %20 = sbr.rel target = $region3
    $region8: #{tpu_custom_call.1} parent=1 // loop_exit
      _
    %5068 = vsyncpa [#allocation4], 1
    %s5069 = scalar_lea.sflag [#allocation4], 1
    %5070 = vsyncpa %s5069, 1
    %5071 = vsyncpa [#allocation7], 1
    %s5072 = scalar_lea.sflag [#allocation7], 1
    %5073 = vsyncpa %s5072, 1
    %5074 = vsyncpa [#allocation10], 1
    %5075 = vsyncpa [#allocation13], 1
    %5076 = vsyncpa [#allocation5], 1
    %s5077 = scalar_lea.sflag [#allocation5], 1
    %5078 = vsyncpa %s5077, 1

</llo_original>
